<compile_context>
chip_gen: v7x
topology: tpu7x:2x2x1
jax: 0.10.0
libtpu: 0.0.40
codegen_flags: <defaults>
</compile_context>

<pallas_src>
import functools

import jax
import jax.numpy as jnp
from jax.experimental import pallas as pl
from jax.experimental.pallas import tpu as pltpu


# ----------------------------- Pallas kernels ------------------------------ #

def _bmm_bias_act_kernel(x_ref, w_ref, b_ref, o_ref, *, relu):
    # x:(1,tm,K) bf16, w:(1,K,N) bf16, b:(1,1,N) f32 -> o:(1,tm,N) f32
    acc = jnp.dot(x_ref[0], w_ref[0], preferred_element_type=jnp.float32)
    acc = acc + b_ref[0]
    if relu:
        acc = jnp.maximum(acc, 0.0)
    o_ref[0] = acc


def batched_matmul_bias_act(x, w, b, relu=True, max_tm=512):
    """relu(x @ w + b) per leading-group.  x:(G,M,K) w:(G,K,N) b:(G,N) -> (G,M,N) f32."""
    G, M, K = x.shape
    N = w.shape[2]
    tm = M if M <= max_tm else max_tm            # full-M block when small, else 512-row tiles
    grid = (G, pl.cdiv(M, tm))
    return pl.pallas_call(
        functools.partial(_bmm_bias_act_kernel, relu=relu),
        out_shape=jax.ShapeDtypeStruct((G, M, N), jnp.float32),
        grid=grid,
        in_specs=[
            pl.BlockSpec((1, tm, K), lambda g, m: (g, m, 0)),
            pl.BlockSpec((1, K, N), lambda g, m: (g, 0, 0)),
            pl.BlockSpec((1, 1, N), lambda g, m: (g, 0, 0)),
        ],
        out_specs=pl.BlockSpec((1, tm, N), lambda g, m: (g, m, 0)),
        compiler_params=pltpu.CompilerParams(
            dimension_semantics=("parallel", "parallel")),
    )(x, w, b.reshape(G, 1, N))


def _bmm_fused34_kernel(x_ref, w3_ref, b3_ref, w4_ref, b4_ref, o_ref):
    # conv3 (3x3, 64->32) + ReLU fused with conv4 (1x1, 32->16) + ReLU.
    h = jnp.dot(x_ref[0], w3_ref[0], preferred_element_type=jnp.float32)
    h = jnp.maximum(h + b3_ref[0], 0.0)
    y = jnp.dot(h.astype(w4_ref.dtype), w4_ref[0], preferred_element_type=jnp.float32)
    o_ref[0] = jnp.maximum(y + b4_ref[0], 0.0)


def batched_conv3_conv4(x, w3, b3, w4, b4, max_tm=512):
    """x:(G,M,K) bf16 -> relu(relu(x@w3+b3)@w4+b4) : (G,M,N4) f32."""
    G, M, K = x.shape
    N3 = w3.shape[2]
    N4 = w4.shape[2]
    tm = M if M <= max_tm else max_tm
    grid = (G, pl.cdiv(M, tm))
    return pl.pallas_call(
        _bmm_fused34_kernel,
        out_shape=jax.ShapeDtypeStruct((G, M, N4), jnp.float32),
        grid=grid,
        in_specs=[
            pl.BlockSpec((1, tm, K), lambda g, m: (g, m, 0)),
            pl.BlockSpec((1, K, N3), lambda g, m: (g, 0, 0)),
            pl.BlockSpec((1, 1, N3), lambda g, m: (g, 0, 0)),
            pl.BlockSpec((1, N3, N4), lambda g, m: (g, 0, 0)),
            pl.BlockSpec((1, 1, N4), lambda g, m: (g, 0, 0)),
        ],
        out_specs=pl.BlockSpec((1, tm, N4), lambda g, m: (g, m, 0)),
        compiler_params=pltpu.CompilerParams(
            dimension_semantics=("parallel", "parallel")),
    )(x, w3, b3.reshape(G, 1, N3), w4, b4.reshape(G, 1, N4))


def _lrn_kernel(x_ref, band_ref, o_ref, *, alpha, beta, k, size):
    x = x_ref[0]                                           # (tm, C) f32
    sumsq = jnp.dot(x * x, band_ref[...], preferred_element_type=jnp.float32)
    denom = k + (alpha / size) * sumsq
    # denom > 0 (k=1, alpha>0) -> pow(denom, -beta) via exp/log on the EUP
    o_ref[0] = x * jnp.exp(-beta * jnp.log(denom))


def batched_cross_map_lrn(x, *, size=5, alpha=1e-4, beta=0.75, k=1.0, max_tm=1024):
    """CrossMapLRN2d over the channel (last) axis. x:(G,M,C) f32 -> (G,M,C) f32."""
    G, M, C = x.shape
    idx = jnp.arange(C)
    half = (size - 1) // 2
    band = (jnp.abs(idx[:, None] - idx[None, :]) <= half).astype(jnp.float32)
    tm = M if M <= max_tm else max_tm
    grid = (G, pl.cdiv(M, tm))
    return pl.pallas_call(
        functools.partial(_lrn_kernel, alpha=alpha, beta=beta, k=k, size=size),
        out_shape=jax.ShapeDtypeStruct((G, M, C), jnp.float32),
        grid=grid,
        in_specs=[
            pl.BlockSpec((1, tm, C), lambda g, m: (g, m, 0)),
            pl.BlockSpec((C, C), lambda g, m: (0, 0)),
        ],
        out_specs=pl.BlockSpec((1, tm, C), lambda g, m: (g, m, 0)),
        compiler_params=pltpu.CompilerParams(
            dimension_semantics=("parallel", "parallel")),
    )(x, band)


# ------------------------------ JAX glue ----------------------------------- #

def _im2col(x_nhwc, kh, kw, stride, padding, out_dtype):
    """x:(N,H,W,C) -> patches:(N*oh*ow, kh*kw*C), oh, ow (row layout = (kh,kw,C))."""
    # TODO(synk): patch extraction is still materialized in HBM; fusing it into
    # the matmul kernel (manual DMA / Element index maps over the padded image)
    # would remove the kh*kw blow-up in HBM traffic at large resolutions.
    if padding > 0:
        x_nhwc = jnp.pad(
            x_nhwc, ((0, 0), (padding, padding), (padding, padding), (0, 0)))
    N, H, W, C = x_nhwc.shape
    oh = (H - kh) // stride + 1
    ow = (W - kw) // stride + 1
    patches = []
    for i in range(kh):
        for j in range(kw):
            patches.append(
                x_nhwc[:, i:i + stride * oh:stride, j:j + stride * ow:stride, :])
    p = jnp.stack(patches, axis=3)                     # (N, oh, ow, kh*kw, C)
    return p.reshape(N * oh * ow, kh * kw * C).astype(out_dtype), oh, ow


def _to_patches(x5, kh, kw, stride, padding, out_dtype=jnp.bfloat16):
    """x5:(G,B,H,W,C) -> (G, B*oh*ow, kh*kw*C), oh, ow."""
    G, B, H, W, C = x5.shape
    pat, oh, ow = _im2col(x5.reshape(G * B, H, W, C), kh, kw, stride, padding, out_dtype)
    return pat.reshape(G, B * oh * ow, kh * kw * C), oh, ow


def maxpool_3x3_s2(x):
    """MaxPool2d(kernel=3, stride=2), VALID, on (G,B,H,W,C). Plain XLA (per review)."""
    return jax.lax.reduce_window(
        x, -jnp.inf, jax.lax.max,
        window_dimensions=(1, 1, 3, 3, 1),
        window_strides=(1, 1, 2, 2, 1),
        padding="VALID")


# ------------------------- stacked ItrackerImageModel ---------------------- #

def eyes_branches_forward(x4_nchw, p):
    """x4:(4,B,1,H,W) NCHW stacked over the 4 eye branches -> (4, B, feat) NHWC-flat."""
    G, B = x4_nchw.shape[0], x4_nchw.shape[1]
    x = jnp.transpose(x4_nchw, (0, 1, 3, 4, 2)).astype(jnp.float32)   # (4,B,H,W,1)

    # Conv2d(1, 32, k=11, s=4, p=0) + ReLU
    pat, oh, ow = _to_patches(x, 11, 11, 4, 0)
    y = batched_matmul_bias_act(pat, p["w1"], p["b1"], relu=True)
    y = y.reshape(G, B, oh, ow, 32)

    # MaxPool2d(3, 2)
    y = maxpool_3x3_s2(y)
    oh, ow = y.shape[2], y.shape[3]

    # CrossMapLRN2d(size=5, alpha=1e-4, beta=0.75, k=1)
    y = batched_cross_map_lrn(y.reshape(G, B * oh * ow, 32)).reshape(G, B, oh, ow, 32)

    # Conv2d(32, 64, k=5, s=1, p=2, groups=2) + ReLU  (groups merged via
    # block-diagonal weight -> one lane-dense N=64 call)
    pat, oh, ow = _to_patches(y, 5, 5, 1, 2)
    y = batched_matmul_bias_act(pat, p["w2"], p["b2"], relu=True)
    y = y.reshape(G, B, oh, ow, 64)

    # MaxPool2d(3, 2)
    y = maxpool_3x3_s2(y)
    oh, ow = y.shape[2], y.shape[3]

    # CrossMapLRN2d(size=5)
    y = batched_cross_map_lrn(y.reshape(G, B * oh * ow, 64)).reshape(G, B, oh, ow, 64)

    # Conv2d(64, 32, k=3, s=1, p=1) + ReLU  fused with  Conv2d(32, 16, 1x1) + ReLU
    pat, oh, ow = _to_patches(y, 3, 3, 1, 1)
    y = batched_conv3_conv4(pat, p["w3"], p["b3"], p["w4"], p["b4"])
    y = y.reshape(G, B, oh, ow, 16)

    # NHWC flatten; the NCHW-flatten ordering PyTorch uses is folded into the
    # eyesFC weight row permutation at init time.
    return y.reshape(G, B, oh * ow * 16)


# ------------------------------ parameters ---------------------------------- #

def _conv_w_to_mat(w_oihw):
    """(Cout, Cin, KH, KW) -> (KH*KW*Cin, Cout) matching im2col row layout."""
    co, ci, kh, kw = w_oihw.shape
    return jnp.transpose(w_oihw, (2, 3, 1, 0)).reshape(kh * kw * ci, co)


def _grouped_conv_w_to_mat(w_oihw, groups, cin_total):
    """Grouped conv weight -> block-diagonal (KH*KW*Cin_total, Cout) matrix."""
    co, cig, kh, kw = w_oihw.shape
    cog = co // groups
    W = jnp.zeros((kh * kw, cin_total, co), jnp.float32)
    for g in range(groups):
        wg = w_oihw[g * cog:(g + 1) * cog]                      # (cog, cig, kh, kw)
        mg = jnp.transpose(wg, (2, 3, 1, 0)).reshape(kh * kw, cig, cog)
        W = W.at[:, g * cig:(g + 1) * cig, g * cog:(g + 1) * cog].set(mg)
    return W.reshape(kh * kw * cin_total, co)


def _final_hw(h, w):
    def conv(x, k, st, pd):
        return (x + 2 * pd - k) // st + 1
    h, w = conv(h, 11, 4, 0), conv(w, 11, 4, 0)     # conv1
    h, w = conv(h, 3, 2, 0), conv(w, 3, 2, 0)       # pool1   (conv2 is "same")
    h, w = conv(h, 3, 2, 0), conv(w, 3, 2, 0)       # pool2   (conv3/conv4 are "same")
    return h, w


def _nchw_to_nhwc_perm(c, h, w):
    """perm[j_nhwc] = j_nchw : reorder NCHW-flatten weight columns to NHWC-flatten."""
    j = jnp.arange(c * h * w)
    cc = j % c
    hw = j // c
    hh = hw // w
    ww = hw % w
    return cc * (h * w) + hh * w + ww


def init_itracker_params(key, img_h, img_w):
    k_branches, k_fc = jax.random.split(key)
    bkeys = jax.random.split(k_branches, 4)          # L1, L2, R1, R2
    s = 0.05
    w1l, b1l, w2l, b2l, w3l, b3l, w4l, b4l = ([] for _ in range(8))
    for bk in bkeys:
        ks = jax.random.split(bk, 8)
        w1 = jax.random.normal(ks[0], (32, 1, 11, 11), jnp.float32) * s
        b1 = jax.random.normal(ks[1], (32,), jnp.float32) * s
        w2 = jax.random.normal(ks[2], (64, 16, 5, 5), jnp.float32) * s   # groups=2
        b2 = jax.random.normal(ks[3], (64,), jnp.float32) * s
        w3 = jax.random.normal(ks[4], (32, 64, 3, 3), jnp.float32) * s
        b3 = jax.random.normal(ks[5], (32,), jnp.float32) * s
        w4 = jax.random.normal(ks[6], (16, 32, 1, 1), jnp.float32) * s
        b4 = jax.random.normal(ks[7], (16,), jnp.float32) * s
        w1l.append(_conv_w_to_mat(w1)); b1l.append(b1)
        w2l.append(_grouped_conv_w_to_mat(w2, 2, 32)); b2l.append(b2)
        w3l.append(_conv_w_to_mat(w3)); b3l.append(b3)
        w4l.append(_conv_w_to_mat(w4)); b4l.append(b4)

    params = {
        "w1": jnp.stack(w1l).astype(jnp.bfloat16), "b1": jnp.stack(b1l),
        "w2": jnp.stack(w2l).astype(jnp.bfloat16), "b2": jnp.stack(b2l),
        "w3": jnp.stack(w3l).astype(jnp.bfloat16), "b3": jnp.stack(b3l),
        "w4": jnp.stack(w4l).astype(jnp.bfloat16), "b4": jnp.stack(b4l),
    }

    # TODO(synk): original eyesFC in_features = 4*28*38*64 hardcodes a specific
    # (unspecified) input resolution; here it is sized to the actual conv-stack
    # output for the small test shapes.
    oh, ow = _final_hw(img_h, img_w)
    feat = 16 * oh * ow
    in_f = 4 * feat
    kw_, kb_ = jax.random.split(k_fc)
    W = jax.random.normal(kw_, (128, in_f), jnp.float32) * s   # PyTorch (out,in), NCHW order
    bfc = jax.random.normal(kb_, (128,), jnp.float32) * s
    # Fold the per-branch NCHW-flatten permutation into the weight columns so
    # the feature maps can stay NHWC-flat (no transpose in the forward pass).
    perm_b = _nchw_to_nhwc_perm(16, oh, ow)
    perm = jnp.concatenate([perm_b + g * feat for g in range(4)])
    W_nhwc = jnp.take(W, perm, axis=1)                          # (128, in_f)
    params["fc_w"] = jnp.transpose(W_nhwc).astype(jnp.bfloat16)[None]   # (1, in_f, 128)
    params["fc_b"] = bfc[None]                                  # (1, 128)
    return params


# ------------------------------ full model ---------------------------------- #

@jax.jit
def itracker_forward(params, eyesLeft1, eyesLeft2, eyesRight1, eyesRight2):
    x4 = jnp.stack([eyesLeft1, eyesLeft2, eyesRight1, eyesRight2], axis=0)  # (4,B,1,H,W)
    feats = eyes_branches_forward(x4, params)                # (4, B, feat)
    B = feats.shape[1]
    x = jnp.transpose(feats, (1, 0, 2)).reshape(B, -1)       # concat [L1,L2,R1,R2]
    out = batched_matmul_bias_act(
        x[None].astype(jnp.bfloat16), params["fc_w"], params["fc_b"], relu=True)
    return out[0]   # self.fc is never used in ITrackerModel.forward


# --------------------------------- main -------------------------------------- #

if __name__ == "__main__":
    B, H, W = 2, 63, 63   # small NCHW eye crops: (B, 1, H, W)
    key = jax.random.PRNGKey(0)
    kL1, kL2, kR1, kR2 = jax.random.split(key, 4)
    eyesLeft1 = jax.random.normal(kL1, (B, 1, H, W), jnp.float32)
    eyesLeft2 = jax.random.normal(kL2, (B, 1, H, W), jnp.float32)
    eyesRight1 = jax.random.normal(kR1, (B, 1, H, W), jnp.float32)
    eyesRight2 = jax.random.normal(kR2, (B, 1, H, W), jnp.float32)

    params = init_itracker_params(jax.random.PRNGKey(42), H, W)

    out = itracker_forward(params, eyesLeft1, eyesLeft2, eyesRight1, eyesRight2)
    out = jax.block_until_ready(out)
    assert out.shape == (B, 128), out.shape
    assert bool(jnp.all(jnp.isfinite(out)))
    print("KERNEL_OK")
</pallas_src>

<mosaic_0001>
module attributes {stable_mosaic.version = 11 : i64} {
  func.func @_bmm_bias_act_kernel(%arg0: i32, %arg1: i32, %arg2: memref<1x392x121xbf16, #tpu.memory_space<vmem>>, %arg3: memref<1x121x32xbf16, #tpu.memory_space<vmem>>, %arg4: memref<1x1x32xf32, #tpu.memory_space<vmem>>, %arg5: memref<1x392x32xf32, #tpu.memory_space<vmem>>) attributes {dimension_semantics = [#tpu.dimension_semantics<parallel>, #tpu.dimension_semantics<parallel>], iteration_bounds = array<i64: 4, 1>, scalar_prefetch = 0 : i64, scratch_operands = 0 : i64, tpu.core_type = #tpu.core_type<tc>, window_params = [{transform_indices = @transform_0, window_bounds = array<i64: 1, 392, 121>}, {transform_indices = @transform_1, window_bounds = array<i64: 1, 121, 32>}, {transform_indices = @transform_2, window_bounds = array<i64: 1, 1, 32>}, {transform_indices = @transform_3, window_bounds = array<i64: 1, 392, 32>}]} {
    %c0 = arith.constant 0 : index
    %c0_0 = arith.constant 0 : index
    %c0_1 = arith.constant 0 : index
    %0 = vector.load %arg2[%c0, %c0_0, %c0_1] : memref<1x392x121xbf16, #tpu.memory_space<vmem>>, vector<1x392x121xbf16>
    %1 = vector.shape_cast %0 : vector<1x392x121xbf16> to vector<392x121xbf16>
    %c0_2 = arith.constant 0 : index
    %c0_3 = arith.constant 0 : index
    %c0_4 = arith.constant 0 : index
    %2 = vector.load %arg3[%c0_2, %c0_3, %c0_4] : memref<1x121x32xbf16, #tpu.memory_space<vmem>>, vector<1x121x32xbf16>
    %3 = vector.shape_cast %2 : vector<1x121x32xbf16> to vector<121x32xbf16>
    %cst = arith.constant dense<0.000000e+00> : vector<392x32xf32>
    %4 = tpu.matmul %1, %3, %cst {dimension_numbers = #tpu.dot_dimension_numbers<[1], [0], [0], [1], [0, 0, 1, 1], [], []>} : vector<392x121xbf16>, vector<121x32xbf16>, vector<392x32xf32> -> vector<392x32xf32>
    %c0_5 = arith.constant 0 : index
    %c0_6 = arith.constant 0 : index
    %c0_7 = arith.constant 0 : index
    %5 = vector.load %arg4[%c0_5, %c0_6, %c0_7] : memref<1x1x32xf32, #tpu.memory_space<vmem>>, vector<1x1x32xf32>
    %6 = vector.shape_cast %5 : vector<1x1x32xf32> to vector<1x32xf32>
    %7 = vector.broadcast %6 : vector<1x32xf32> to vector<392x32xf32>
    %8 = arith.addf %4, %7 : vector<392x32xf32>
    %cst_8 = arith.constant 0.000000e+00 : f32
    %9 = vector.broadcast %cst_8 : f32 to vector<392x32xf32>
    %10 = arith.maximumf %8, %9 : vector<392x32xf32>
    %c0_9 = arith.constant 0 : index
    %c0_10 = arith.constant 0 : index
    %c0_11 = arith.constant 0 : index
    %11 = vector.load %arg5[%c0_9, %c0_10, %c0_11] : memref<1x392x32xf32, #tpu.memory_space<vmem>>, vector<1x392x32xf32>
    %12 = vector.shape_cast %11 : vector<1x392x32xf32> to vector<392x32xf32>
    %13 = vector.shape_cast %10 : vector<392x32xf32> to vector<1x392x32xf32>
    tpu.vector_store %arg5[%c0_9, %c0_10, %c0_11], %13 {strides = array<i32>} : memref<1x392x32xf32, #tpu.memory_space<vmem>>, vector<1x392x32xf32>,
    return
  }
  func.func @transform_0(%arg0: i32, %arg1: i32) -> (i32, i32, i32) {
    %c0_i32 = arith.constant 0 : i32
    %c0_i32_0 = arith.constant 0 : i32
    return %arg0, %arg1, %c0_i32 : i32, i32, i32
  }
  func.func @transform_1(%arg0: i32, %arg1: i32) -> (i32, i32, i32) {
    %c0_i32 = arith.constant 0 : i32
    %c0_i32_0 = arith.constant 0 : i32
    %c0_i32_1 = arith.constant 0 : i32
    return %arg0, %c0_i32, %c0_i32_0 : i32, i32, i32
  }
  func.func @transform_2(%arg0: i32, %arg1: i32) -> (i32, i32, i32) {
    %c0_i32 = arith.constant 0 : i32
    %c0_i32_0 = arith.constant 0 : i32
    %c0_i32_1 = arith.constant 0 : i32
    return %arg0, %c0_i32, %c0_i32_0 : i32, i32, i32
  }
  func.func @transform_3(%arg0: i32, %arg1: i32) -> (i32, i32, i32) {
    %c0_i32 = arith.constant 0 : i32
    %c0_i32_0 = arith.constant 0 : i32
    return %arg0, %arg1, %c0_i32 : i32, i32, i32
  }
}

module attributes {stable_mosaic.version = 11 : i64} {
  func.func @_lrn_kernel(%arg0: i32, %arg1: i32, %arg2: memref<1x72x32xf32, #tpu.memory_space<vmem>>, %arg3: memref<32x32xf32, #tpu.memory_space<vmem>>, %arg4: memref<1x72x32xf32, #tpu.memory_space<vmem>>) attributes {dimension_semantics = [#tpu.dimension_semantics<parallel>, #tpu.dimension_semantics<parallel>], iteration_bounds = array<i64: 4, 1>, scalar_prefetch = 0 : i64, scratch_operands = 0 : i64, tpu.core_type = #tpu.core_type<tc>, window_params = [{transform_indices = @transform_0, window_bounds = array<i64: 1, 72, 32>}, {pipeline_mode = #tpu.pipeline_mode<synchronous>, transform_indices = @transform_1, window_bounds = array<i64: 32, 32>}, {transform_indices = @transform_2, window_bounds = array<i64: 1, 72, 32>}]} {
    %c0 = arith.constant 0 : index
    %c0_0 = arith.constant 0 : index
    %c0_1 = arith.constant 0 : index
    %0 = vector.load %arg2[%c0, %c0_0, %c0_1] : memref<1x72x32xf32, #tpu.memory_space<vmem>>, vector<1x72x32xf32>
    %1 = vector.shape_cast %0 : vector<1x72x32xf32> to vector<72x32xf32>
    %2 = arith.mulf %1, %1 : vector<72x32xf32>
    %c0_2 = arith.constant 0 : index
    %c0_3 = arith.constant 0 : index
    %3 = vector.load %arg3[%c0_2, %c0_3] : memref<32x32xf32, #tpu.memory_space<vmem>>, vector<32x32xf32>
    %cst = arith.constant dense<0.000000e+00> : vector<72x32xf32>
    %4 = tpu.matmul %2, %3, %cst {dimension_numbers = #tpu.dot_dimension_numbers<[1], [0], [0], [1], [0, 0, 1, 1], [], []>} : vector<72x32xf32>, vector<32x32xf32>, vector<72x32xf32> -> vector<72x32xf32>
    %cst_4 = arith.constant 2.000000e-05 : f32
    %5 = vector.broadcast %cst_4 : f32 to vector<72x32xf32>
    %6 = arith.mulf %5, %4 : vector<72x32xf32>
    %cst_5 = arith.constant 1.000000e+00 : f32
    %7 = vector.broadcast %cst_5 : f32 to vector<72x32xf32>
    %8 = arith.addf %7, %6 : vector<72x32xf32>
    %9 = math.log %8 : vector<72x32xf32>
    %cst_6 = arith.constant -7.500000e-01 : f32
    %10 = vector.broadcast %cst_6 : f32 to vector<72x32xf32>
    %11 = arith.mulf %10, %9 : vector<72x32xf32>
    %12 = math.exp %11 : vector<72x32xf32>
    %13 = arith.mulf %1, %12 : vector<72x32xf32>
    %c0_7 = arith.constant 0 : index
    %c0_8 = arith.constant 0 : index
    %c0_9 = arith.constant 0 : index
    %14 = vector.load %arg4[%c0_7, %c0_8, %c0_9] : memref<1x72x32xf32, #tpu.memory_space<vmem>>, vector<1x72x32xf32>
    %15 = vector.shape_cast %14 : vector<1x72x32xf32> to vector<72x32xf32>
    %16 = vector.shape_cast %13 : vector<72x32xf32> to vector<1x72x32xf32>
    tpu.vector_store %arg4[%c0_7, %c0_8, %c0_9], %16 {strides = array<i32>} : memref<1x72x32xf32, #tpu.memory_space<vmem>>, vector<1x72x32xf32>,
    return
  }
  func.func @transform_0(%arg0: i32, %arg1: i32) -> (i32, i32, i32) {
    %c0_i32 = arith.constant 0 : i32
    %c0_i32_0 = arith.constant 0 : i32
    return %arg0, %arg1, %c0_i32 : i32, i32, i32
  }
  func.func @transform_1(%arg0: i32, %arg1: i32) -> (i32, i32) {
    %c0_i32 = arith.constant 0 : i32
    %c0_i32_0 = arith.constant 0 : i32
    %c0_i32_1 = arith.constant 0 : i32
    return %c0_i32, %c0_i32_0 : i32, i32
  }
  func.func @transform_2(%arg0: i32, %arg1: i32) -> (i32, i32, i32) {
    %c0_i32 = arith.constant 0 : i32
    %c0_i32_0 = arith.constant 0 : i32
    return %arg0, %arg1, %c0_i32 : i32, i32, i32
  }
}

module attributes {stable_mosaic.version = 11 : i64} {
  func.func @_bmm_bias_act_kernel(%arg0: i32, %arg1: i32, %arg2: memref<1x72x800xbf16, #tpu.memory_space<vmem>>, %arg3: memref<1x800x64xbf16, #tpu.memory_space<vmem>>, %arg4: memref<1x1x64xf32, #tpu.memory_space<vmem>>, %arg5: memref<1x72x64xf32, #tpu.memory_space<vmem>>) attributes {dimension_semantics = [#tpu.dimension_semantics<parallel>, #tpu.dimension_semantics<parallel>], iteration_bounds = array<i64: 4, 1>, scalar_prefetch = 0 : i64, scratch_operands = 0 : i64, tpu.core_type = #tpu.core_type<tc>, window_params = [{transform_indices = @transform_0, window_bounds = array<i64: 1, 72, 800>}, {transform_indices = @transform_1, window_bounds = array<i64: 1, 800, 64>}, {transform_indices = @transform_2, window_bounds = array<i64: 1, 1, 64>}, {transform_indices = @transform_3, window_bounds = array<i64: 1, 72, 64>}]} {
    %c0 = arith.constant 0 : index
    %c0_0 = arith.constant 0 : index
    %c0_1 = arith.constant 0 : index
    %0 = vector.load %arg2[%c0, %c0_0, %c0_1] : memref<1x72x800xbf16, #tpu.memory_space<vmem>>, vector<1x72x800xbf16>
    %1 = vector.shape_cast %0 : vector<1x72x800xbf16> to vector<72x800xbf16>
    %c0_2 = arith.constant 0 : index
    %c0_3 = arith.constant 0 : index
    %c0_4 = arith.constant 0 : index
    %2 = vector.load %arg3[%c0_2, %c0_3, %c0_4] : memref<1x800x64xbf16, #tpu.memory_space<vmem>>, vector<1x800x64xbf16>
    %3 = vector.shape_cast %2 : vector<1x800x64xbf16> to vector<800x64xbf16>
    %cst = arith.constant dense<0.000000e+00> : vector<72x64xf32>
    %4 = tpu.matmul %1, %3, %cst {dimension_numbers = #tpu.dot_dimension_numbers<[1], [0], [0], [1], [0, 0, 1, 1], [], []>} : vector<72x800xbf16>, vector<800x64xbf16>, vector<72x64xf32> -> vector<72x64xf32>
    %c0_5 = arith.constant 0 : index
    %c0_6 = arith.constant 0 : index
    %c0_7 = arith.constant 0 : index
    %5 = vector.load %arg4[%c0_5, %c0_6, %c0_7] : memref<1x1x64xf32, #tpu.memory_space<vmem>>, vector<1x1x64xf32>
    %6 = vector.shape_cast %5 : vector<1x1x64xf32> to vector<1x64xf32>
    %7 = vector.broadcast %6 : vector<1x64xf32> to vector<72x64xf32>
    %8 = arith.addf %4, %7 : vector<72x64xf32>
    %cst_8 = arith.constant 0.000000e+00 : f32
    %9 = vector.broadcast %cst_8 : f32 to vector<72x64xf32>
    %10 = arith.maximumf %8, %9 : vector<72x64xf32>
    %c0_9 = arith.constant 0 : index
    %c0_10 = arith.constant 0 : index
    %c0_11 = arith.constant 0 : index
    %11 = vector.load %arg5[%c0_9, %c0_10, %c0_11] : memref<1x72x64xf32, #tpu.memory_space<vmem>>, vector<1x72x64xf32>
    %12 = vector.shape_cast %11 : vector<1x72x64xf32> to vector<72x64xf32>
    %13 = vector.shape_cast %10 : vector<72x64xf32> to vector<1x72x64xf32>
    tpu.vector_store %arg5[%c0_9, %c0_10, %c0_11], %13 {strides = array<i32>} : memref<1x72x64xf32, #tpu.memory_space<vmem>>, vector<1x72x64xf32>,
    return
  }
  func.func @transform_0(%arg0: i32, %arg1: i32) -> (i32, i32, i32) {
    %c0_i32 = arith.constant 0 : i32
    %c0_i32_0 = arith.constant 0 : i32
    return %arg0, %arg1, %c0_i32 : i32, i32, i32
  }
  func.func @transform_1(%arg0: i32, %arg1: i32) -> (i32, i32, i32) {
    %c0_i32 = arith.constant 0 : i32
    %c0_i32_0 = arith.constant 0 : i32
    %c0_i32_1 = arith.constant 0 : i32
    return %arg0, %c0_i32, %c0_i32_0 : i32, i32, i32
  }
  func.func @transform_2(%arg0: i32, %arg1: i32) -> (i32, i32, i32) {
    %c0_i32 = arith.constant 0 : i32
    %c0_i32_0 = arith.constant 0 : i32
    %c0_i32_1 = arith.constant 0 : i32
    return %arg0, %c0_i32, %c0_i32_0 : i32, i32, i32
  }
  func.func @transform_3(%arg0: i32, %arg1: i32) -> (i32, i32, i32) {
    %c0_i32 = arith.constant 0 : i32
    %c0_i32_0 = arith.constant 0 : i32
    return %arg0, %arg1, %c0_i32 : i32, i32, i32
  }
}

module attributes {stable_mosaic.version = 11 : i64} {
  func.func @_lrn_kernel(%arg0: i32, %arg1: i32, %arg2: memref<1x8x64xf32, #tpu.memory_space<vmem>>, %arg3: memref<64x64xf32, #tpu.memory_space<vmem>>, %arg4: memref<1x8x64xf32, #tpu.memory_space<vmem>>) attributes {dimension_semantics = [#tpu.dimension_semantics<parallel>, #tpu.dimension_semantics<parallel>], iteration_bounds = array<i64: 4, 1>, scalar_prefetch = 0 : i64, scratch_operands = 0 : i64, tpu.core_type = #tpu.core_type<tc>, window_params = [{transform_indices = @transform_0, window_bounds = array<i64: 1, 8, 64>}, {pipeline_mode = #tpu.pipeline_mode<synchronous>, transform_indices = @transform_1, window_bounds = array<i64: 64, 64>}, {transform_indices = @transform_2, window_bounds = array<i64: 1, 8, 64>}]} {
    %c0 = arith.constant 0 : index
    %c0_0 = arith.constant 0 : index
    %c0_1 = arith.constant 0 : index
    %0 = vector.load %arg2[%c0, %c0_0, %c0_1] : memref<1x8x64xf32, #tpu.memory_space<vmem>>, vector<1x8x64xf32>
    %1 = vector.shape_cast %0 : vector<1x8x64xf32> to vector<8x64xf32>
    %2 = arith.mulf %1, %1 : vector<8x64xf32>
    %c0_2 = arith.constant 0 : index
    %c0_3 = arith.constant 0 : index
    %3 = vector.load %arg3[%c0_2, %c0_3] : memref<64x64xf32, #tpu.memory_space<vmem>>, vector<64x64xf32>
    %cst = arith.constant dense<0.000000e+00> : vector<8x64xf32>
    %4 = tpu.matmul %2, %3, %cst {dimension_numbers = #tpu.dot_dimension_numbers<[1], [0], [0], [1], [0, 0, 1, 1], [], []>} : vector<8x64xf32>, vector<64x64xf32>, vector<8x64xf32> -> vector<8x64xf32>
    %cst_4 = arith.constant 2.000000e-05 : f32
    %5 = vector.broadcast %cst_4 : f32 to vector<8x64xf32>
    %6 = arith.mulf %5, %4 : vector<8x64xf32>
    %cst_5 = arith.constant 1.000000e+00 : f32
    %7 = vector.broadcast %cst_5 : f32 to vector<8x64xf32>
    %8 = arith.addf %7, %6 : vector<8x64xf32>
    %9 = math.log %8 : vector<8x64xf32>
    %cst_6 = arith.constant -7.500000e-01 : f32
    %10 = vector.broadcast %cst_6 : f32 to vector<8x64xf32>
    %11 = arith.mulf %10, %9 : vector<8x64xf32>
    %12 = math.exp %11 : vector<8x64xf32>
    %13 = arith.mulf %1, %12 : vector<8x64xf32>
    %c0_7 = arith.constant 0 : index
    %c0_8 = arith.constant 0 : index
    %c0_9 = arith.constant 0 : index
    %14 = vector.load %arg4[%c0_7, %c0_8, %c0_9] : memref<1x8x64xf32, #tpu.memory_space<vmem>>, vector<1x8x64xf32>
    %15 = vector.shape_cast %14 : vector<1x8x64xf32> to vector<8x64xf32>
    %16 = vector.shape_cast %13 : vector<8x64xf32> to vector<1x8x64xf32>
    tpu.vector_store %arg4[%c0_7, %c0_8, %c0_9], %16 {strides = array<i32>} : memref<1x8x64xf32, #tpu.memory_space<vmem>>, vector<1x8x64xf32>,
    return
  }
  func.func @transform_0(%arg0: i32, %arg1: i32) -> (i32, i32, i32) {
    %c0_i32 = arith.constant 0 : i32
    %c0_i32_0 = arith.constant 0 : i32
    return %arg0, %arg1, %c0_i32 : i32, i32, i32
  }
  func.func @transform_1(%arg0: i32, %arg1: i32) -> (i32, i32) {
    %c0_i32 = arith.constant 0 : i32
    %c0_i32_0 = arith.constant 0 : i32
    %c0_i32_1 = arith.constant 0 : i32
    return %c0_i32, %c0_i32_0 : i32, i32
  }
  func.func @transform_2(%arg0: i32, %arg1: i32) -> (i32, i32, i32) {
    %c0_i32 = arith.constant 0 : i32
    %c0_i32_0 = arith.constant 0 : i32
    return %arg0, %arg1, %c0_i32 : i32, i32, i32
  }
}

module attributes {stable_mosaic.version = 11 : i64} {
  func.func @_bmm_fused34_kernel(%arg0: i32, %arg1: i32, %arg2: memref<1x8x576xbf16, #tpu.memory_space<vmem>>, %arg3: memref<1x576x32xbf16, #tpu.memory_space<vmem>>, %arg4: memref<1x1x32xf32, #tpu.memory_space<vmem>>, %arg5: memref<1x32x16xbf16, #tpu.memory_space<vmem>>, %arg6: memref<1x1x16xf32, #tpu.memory_space<vmem>>, %arg7: memref<1x8x16xf32, #tpu.memory_space<vmem>>) attributes {dimension_semantics = [#tpu.dimension_semantics<parallel>, #tpu.dimension_semantics<parallel>], iteration_bounds = array<i64: 4, 1>, scalar_prefetch = 0 : i64, scratch_operands = 0 : i64, tpu.core_type = #tpu.core_type<tc>, window_params = [{transform_indices = @transform_0, window_bounds = array<i64: 1, 8, 576>}, {transform_indices = @transform_1, window_bounds = array<i64: 1, 576, 32>}, {transform_indices = @transform_2, window_bounds = array<i64: 1, 1, 32>}, {transform_indices = @transform_3, window_bounds = array<i64: 1, 32, 16>}, {transform_indices = @transform_4, window_bounds = array<i64: 1, 1, 16>}, {transform_indices = @transform_5, window_bounds = array<i64: 1, 8, 16>}]} {
    %c0 = arith.constant 0 : index
    %c0_0 = arith.constant 0 : index
    %c0_1 = arith.constant 0 : index
    %0 = vector.load %arg2[%c0, %c0_0, %c0_1] : memref<1x8x576xbf16, #tpu.memory_space<vmem>>, vector<1x8x576xbf16>
    %1 = vector.shape_cast %0 : vector<1x8x576xbf16> to vector<8x576xbf16>
    %c0_2 = arith.constant 0 : index
    %c0_3 = arith.constant 0 : index
    %c0_4 = arith.constant 0 : index
    %2 = vector.load %arg3[%c0_2, %c0_3, %c0_4] : memref<1x576x32xbf16, #tpu.memory_space<vmem>>, vector<1x576x32xbf16>
    %3 = vector.shape_cast %2 : vector<1x576x32xbf16> to vector<576x32xbf16>
    %cst = arith.constant dense<0.000000e+00> : vector<8x32xf32>
    %4 = tpu.matmul %1, %3, %cst {dimension_numbers = #tpu.dot_dimension_numbers<[1], [0], [0], [1], [0, 0, 1, 1], [], []>} : vector<8x576xbf16>, vector<576x32xbf16>, vector<8x32xf32> -> vector<8x32xf32>
    %c0_5 = arith.constant 0 : index
    %c0_6 = arith.constant 0 : index
    %c0_7 = arith.constant 0 : index
    %5 = vector.load %arg4[%c0_5, %c0_6, %c0_7] : memref<1x1x32xf32, #tpu.memory_space<vmem>>, vector<1x1x32xf32>
    %6 = vector.shape_cast %5 : vector<1x1x32xf32> to vector<1x32xf32>
    %7 = vector.broadcast %6 : vector<1x32xf32> to vector<8x32xf32>
    %8 = arith.addf %4, %7 : vector<8x32xf32>
    %cst_8 = arith.constant 0.000000e+00 : f32
    %9 = vector.broadcast %cst_8 : f32 to vector<8x32xf32>
    %10 = arith.maximumf %8, %9 : vector<8x32xf32>
    %11 = arith.truncf %10 : vector<8x32xf32> to vector<8x32xbf16>
    %c0_9 = arith.constant 0 : index
    %c0_10 = arith.constant 0 : index
    %c0_11 = arith.constant 0 : index
    %12 = vector.load %arg5[%c0_9, %c0_10, %c0_11] : memref<1x32x16xbf16, #tpu.memory_space<vmem>>, vector<1x32x16xbf16>
    %13 = vector.shape_cast %12 : vector<1x32x16xbf16> to vector<32x16xbf16>
    %cst_12 = arith.constant dense<0.000000e+00> : vector<8x16xf32>
    %14 = tpu.matmul %11, %13, %cst_12 {dimension_numbers = #tpu.dot_dimension_numbers<[1], [0], [0], [1], [0, 0, 1, 1], [], []>} : vector<8x32xbf16>, vector<32x16xbf16>, vector<8x16xf32> -> vector<8x16xf32>
    %c0_13 = arith.constant 0 : index
    %c0_14 = arith.constant 0 : index
    %c0_15 = arith.constant 0 : index
    %15 = vector.load %arg6[%c0_13, %c0_14, %c0_15] : memref<1x1x16xf32, #tpu.memory_space<vmem>>, vector<1x1x16xf32>
    %16 = vector.shape_cast %15 : vector<1x1x16xf32> to vector<1x16xf32>
    %17 = vector.broadcast %16 : vector<1x16xf32> to vector<8x16xf32>
    %18 = arith.addf %14, %17 : vector<8x16xf32>
    %cst_16 = arith.constant 0.000000e+00 : f32
    %19 = vector.broadcast %cst_16 : f32 to vector<8x16xf32>
    %20 = arith.maximumf %18, %19 : vector<8x16xf32>
    %c0_17 = arith.constant 0 : index
    %c0_18 = arith.constant 0 : index
    %c0_19 = arith.constant 0 : index
    %21 = vector.load %arg7[%c0_17, %c0_18, %c0_19] : memref<1x8x16xf32, #tpu.memory_space<vmem>>, vector<1x8x16xf32>
    %22 = vector.shape_cast %21 : vector<1x8x16xf32> to vector<8x16xf32>
    %23 = vector.shape_cast %20 : vector<8x16xf32> to vector<1x8x16xf32>
    tpu.vector_store %arg7[%c0_17, %c0_18, %c0_19], %23 {strides = array<i32>} : memref<1x8x16xf32, #tpu.memory_space<vmem>>, vector<1x8x16xf32>,
    return
  }
  func.func @transform_0(%arg0: i32, %arg1: i32) -> (i32, i32, i32) {
    %c0_i32 = arith.constant 0 : i32
    %c0_i32_0 = arith.constant 0 : i32
    return %arg0, %arg1, %c0_i32 : i32, i32, i32
  }
  func.func @transform_1(%arg0: i32, %arg1: i32) -> (i32, i32, i32) {
    %c0_i32 = arith.constant 0 : i32
    %c0_i32_0 = arith.constant 0 : i32
    %c0_i32_1 = arith.constant 0 : i32
    return %arg0, %c0_i32, %c0_i32_0 : i32, i32, i32
  }
  func.func @transform_2(%arg0: i32, %arg1: i32) -> (i32, i32, i32) {
    %c0_i32 = arith.constant 0 : i32
    %c0_i32_0 = arith.constant 0 : i32
    %c0_i32_1 = arith.constant 0 : i32
    return %arg0, %c0_i32, %c0_i32_0 : i32, i32, i32
  }
  func.func @transform_3(%arg0: i32, %arg1: i32) -> (i32, i32, i32) {
    %c0_i32 = arith.constant 0 : i32
    %c0_i32_0 = arith.constant 0 : i32
    %c0_i32_1 = arith.constant 0 : i32
    return %arg0, %c0_i32, %c0_i32_0 : i32, i32, i32
  }
  func.func @transform_4(%arg0: i32, %arg1: i32) -> (i32, i32, i32) {
    %c0_i32 = arith.constant 0 : i32
    %c0_i32_0 = arith.constant 0 : i32
    %c0_i32_1 = arith.constant 0 : i32
    return %arg0, %c0_i32, %c0_i32_0 : i32, i32, i32
  }
  func.func @transform_5(%arg0: i32, %arg1: i32) -> (i32, i32, i32) {
    %c0_i32 = arith.constant 0 : i32
    %c0_i32_0 = arith.constant 0 : i32
    return %arg0, %arg1, %c0_i32 : i32, i32, i32
  }
}

module attributes {stable_mosaic.version = 11 : i64} {
  func.func @_bmm_bias_act_kernel(%arg0: i32, %arg1: i32, %arg2: memref<1x2x256xbf16, #tpu.memory_space<vmem>>, %arg3: memref<1x256x128xbf16, #tpu.memory_space<vmem>>, %arg4: memref<1x1x128xf32, #tpu.memory_space<vmem>>, %arg5: memref<1x2x128xf32, #tpu.memory_space<vmem>>) attributes {dimension_semantics = [#tpu.dimension_semantics<parallel>, #tpu.dimension_semantics<parallel>], iteration_bounds = array<i64: 1, 1>, scalar_prefetch = 0 : i64, scratch_operands = 0 : i64, tpu.core_type = #tpu.core_type<tc>, window_params = [{transform_indices = @transform_0, window_bounds = array<i64: 1, 2, 256>}, {transform_indices = @transform_1, window_bounds = array<i64: 1, 256, 128>}, {transform_indices = @transform_2, window_bounds = array<i64: 1, 1, 128>}, {transform_indices = @transform_3, window_bounds = array<i64: 1, 2, 128>}]} {
    %c0 = arith.constant 0 : index
    %c0_0 = arith.constant 0 : index
    %c0_1 = arith.constant 0 : index
    %0 = vector.load %arg2[%c0, %c0_0, %c0_1] : memref<1x2x256xbf16, #tpu.memory_space<vmem>>, vector<1x2x256xbf16>
    %1 = vector.shape_cast %0 : vector<1x2x256xbf16> to vector<2x256xbf16>
    %c0_2 = arith.constant 0 : index
    %c0_3 = arith.constant 0 : index
    %c0_4 = arith.constant 0 : index
    %2 = vector.load %arg3[%c0_2, %c0_3, %c0_4] : memref<1x256x128xbf16, #tpu.memory_space<vmem>>, vector<1x256x128xbf16>
    %3 = vector.shape_cast %2 : vector<1x256x128xbf16> to vector<256x128xbf16>
    %cst = arith.constant dense<0.000000e+00> : vector<2x128xf32>
    %4 = tpu.matmul %1, %3, %cst {dimension_numbers = #tpu.dot_dimension_numbers<[1], [0], [0], [1], [0, 0, 1, 1], [], []>} : vector<2x256xbf16>, vector<256x128xbf16>, vector<2x128xf32> -> vector<2x128xf32>
    %c0_5 = arith.constant 0 : index
    %c0_6 = arith.constant 0 : index
    %c0_7 = arith.constant 0 : index
    %5 = vector.load %arg4[%c0_5, %c0_6, %c0_7] : memref<1x1x128xf32, #tpu.memory_space<vmem>>, vector<1x1x128xf32>
    %6 = vector.shape_cast %5 : vector<1x1x128xf32> to vector<1x128xf32>
    %7 = vector.broadcast %6 : vector<1x128xf32> to vector<2x128xf32>
    %8 = arith.addf %4, %7 : vector<2x128xf32>
    %cst_8 = arith.constant 0.000000e+00 : f32
    %9 = vector.broadcast %cst_8 : f32 to vector<2x128xf32>
    %10 = arith.maximumf %8, %9 : vector<2x128xf32>
    %c0_9 = arith.constant 0 : index
    %c0_10 = arith.constant 0 : index
    %c0_11 = arith.constant 0 : index
    %11 = vector.load %arg5[%c0_9, %c0_10, %c0_11] : memref<1x2x128xf32, #tpu.memory_space<vmem>>, vector<1x2x128xf32>
    %12 = vector.shape_cast %11 : vector<1x2x128xf32> to vector<2x128xf32>
    %13 = vector.shape_cast %10 : vector<2x128xf32> to vector<1x2x128xf32>
    tpu.vector_store %arg5[%c0_9, %c0_10, %c0_11], %13 {strides = array<i32>} : memref<1x2x128xf32, #tpu.memory_space<vmem>>, vector<1x2x128xf32>,
    return
  }
  func.func @transform_0(%arg0: i32, %arg1: i32) -> (i32, i32, i32) {
    %c0_i32 = arith.constant 0 : i32
    %c0_i32_0 = arith.constant 0 : i32
    return %arg0, %arg1, %c0_i32 : i32, i32, i32
  }
  func.func @transform_1(%arg0: i32, %arg1: i32) -> (i32, i32, i32) {
    %c0_i32 = arith.constant 0 : i32
    %c0_i32_0 = arith.constant 0 : i32
    %c0_i32_1 = arith.constant 0 : i32
    return %arg0, %c0_i32, %c0_i32_0 : i32, i32, i32
  }
  func.func @transform_2(%arg0: i32, %arg1: i32) -> (i32, i32, i32) {
    %c0_i32 = arith.constant 0 : i32
    %c0_i32_0 = arith.constant 0 : i32
    %c0_i32_1 = arith.constant 0 : i32
    return %arg0, %c0_i32, %c0_i32_0 : i32, i32, i32
  }
  func.func @transform_3(%arg0: i32, %arg1: i32) -> (i32, i32, i32) {
    %c0_i32 = arith.constant 0 : i32
    %c0_i32_0 = arith.constant 0 : i32
    return %arg0, %arg1, %c0_i32 : i32, i32, i32
  }
}

</mosaic_0001>

<llo_original>
// kernel: itracker_forward.6
$region0: #{itracker_forward.6}
  #allocation0 [shape = 'u32[]', space=smem, size = 0x4, offset = 0x4, fixed_abs, tag = 'smem constant byte address 0x4 - core index']
  #allocation1 [shape = 'u32[144,128]{1,0:T(1,128)}', space=vmem, size = 0x12000, scoped, tag = 'internal scratch']
  %s0 = inlined_call_operand.hbm [shape: bf16[4,392,121], index: 0, kind: input, shape index: {}]
  %s1 = inlined_call_operand.vmem [shape: bf16[4,121,32], index: 1, kind: input, shape index: {}]
  %s2 = inlined_call_operand.vmem [shape: f32[4,1,32], index: 2, kind: input, shape index: {}]
  %s3 = inlined_call_operand.vmem [shape: f32[4,392,32], index: 3, kind: output, shape index: {}]
  %s4 = sld [smem:[#allocation0]]
  $region49: #{itracker_forward.6} parent=0
    _
  %s6 = ssub.s32 1, %s4
  %s7 = scalar_select 0, %s6, %s4
  $region1: #{itracker_forward.6} parent=0
    #allocation2 [shape = 'u8[200704]{0}', space=vmem, size = 0x31000, scoped, tag = 'input window, operand 0']
    #allocation3 [shape = 's32[2]{0}', space=sflag, size = 0x8, scoped, tag = 'scoped memory for itracker_forward.6']
    %8 = vsyncpa [#allocation3], 0
    %s9 = scalar_lea.sflag [#allocation3], 1
    %10 = vsyncpa %s9, 0
    loop: start=0, step=1, limit=6
    $region2: #{itracker_forward.6} parent=1 // loop_pre_header
      _
    $region3: #{itracker_forward.6} parent=1 // loop_header
      %s12 = sphi 0, %s16
      %p13 = scmp.ge.s32.totalorder %s12, 6
      %s19 = sphi 0, %s31
      %s20 = sphi 0, %s27
      %s21 = sphi 0, %s19
      %s22 = sphi 0, %s20
      %s23 = sphi 0, %s21
      %s24 = sphi 0, %s22
      %s36 = sphi 0, %s38
      %s39 = sphi 0, %s36
      %s40 = sphi 0, %s39
      %s56 = sphi 0, %s40
      %s62 = sphi 0, %s64
      %s65 = sphi 0, %s62
      %s66 = sphi 0, %s65
      %s82 = sphi 0, %s66
      %s88 = sphi 0, %s90
      %s91 = sphi 0, %s88
      %s92 = sphi 0, %s91
      %s108 = sphi 0, %s92
      %s116 = sphi 0, %s118
      %s119 = sphi 0, %s116
      %s120 = sphi 0, %s119
      %s136 = sphi 0, %s120
    $region4: #{itracker_forward.6} parent=1 // loop_header_branch
      %15 = sbr.rel (%p13) target = $region8
    $region5: #{itracker_forward.6} parent=1 // loop_body
      %s17 = ssub.s32 %s12, 1
      %s18 = ssub.s32 %s12, 2
      %s25 = sadd.s32 1, %s20
      %p26 = scmp.ge.s32.totalorder %s25, 1
      %s27 = scalar_select %p26, 0, %s25
      %s28 = sadd.s32 1, %s19
      %s29 = scalar_select %p26, %s28, %s19
      %p30 = scmp.ge.s32.totalorder %s29, 4
      %s31 = scalar_select %p30, 0, %s29
      %s32 = ssub.s32 %s19, %s31
      %s33 = ssub.s32 %s20, %s27
      %s34 = sor.u32 %s32, %s33
      %p35 = scmp.eq.s32.totalorder %s34, 0
      %s37 = sadd.s32 %s36, 1
      %s38 = scalar_select %p35, %s36, %s37
      %p41 = pneg %p35
      %p42 = scmp.eq.s32.totalorder %s12, 3
      %p43 = por %p41, %p42
      %p44 = scmp.ne.s32.totalorder %s36, %s39
      %p45 = scmp.eq.s32.totalorder %s12, 0
      %p46 = por %p44, %p45
      %p47 = scmp.ne.s32.totalorder %s36, %s39
      %p48 = scmp.eq.s32.totalorder %s17, 3
      %p49 = por %p47, %p48
      %p50 = scmp.ne.s32.totalorder %s39, %s40
      %p51 = scmp.eq.s32.totalorder %s17, 0
      %p52 = por %p50, %p51
      %p53 = scmp.ne.s32.totalorder %s39, %s40
      %p54 = scmp.eq.s32.totalorder %s18, 3
      %p55 = por %p53, %p54
      %p57 = scmp.ne.s32.totalorder %s40, %s56
      %p58 = scmp.eq.s32.totalorder %s18, 0
      %p59 = por %p57, %p58
      %s60 = ssub.s32 %s19, %s31
      %p61 = scmp.eq.s32.totalorder %s60, 0
      %s63 = sadd.s32 %s62, 1
      %s64 = scalar_select %p61, %s62, %s63
      %p67 = pneg %p61
      %p68 = scmp.eq.s32.totalorder %s12, 3
      %p69 = por %p67, %p68
      %p70 = scmp.ne.s32.totalorder %s62, %s65
      %p71 = scmp.eq.s32.totalorder %s12, 0
      %p72 = por %p70, %p71
      %p73 = scmp.ne.s32.totalorder %s62, %s65
      %p74 = scmp.eq.s32.totalorder %s17, 3
      %p75 = por %p73, %p74
      %p76 = scmp.ne.s32.totalorder %s65, %s66
      %p77 = scmp.eq.s32.totalorder %s17, 0
      %p78 = por %p76, %p77
      %p79 = scmp.ne.s32.totalorder %s65, %s66
      %p80 = scmp.eq.s32.totalorder %s18, 3
      %p81 = por %p79, %p80
      %p83 = scmp.ne.s32.totalorder %s66, %s82
      %p84 = scmp.eq.s32.totalorder %s18, 0
      %p85 = por %p83, %p84
      %s86 = ssub.s32 %s19, %s31
      %p87 = scmp.eq.s32.totalorder %s86, 0
      %s89 = sadd.s32 %s88, 1
      %s90 = scalar_select %p87, %s88, %s89
      %p93 = pneg %p87
      %p94 = scmp.eq.s32.totalorder %s12, 3
      %p95 = por %p93, %p94
      %p96 = scmp.ne.s32.totalorder %s88, %s91
      %p97 = scmp.eq.s32.totalorder %s12, 0
      %p98 = por %p96, %p97
      %p99 = scmp.ne.s32.totalorder %s88, %s91
      %p100 = scmp.eq.s32.totalorder %s17, 3
      %p101 = por %p99, %p100
      %p102 = scmp.ne.s32.totalorder %s91, %s92
      %p103 = scmp.eq.s32.totalorder %s17, 0
      %p104 = por %p102, %p103
      %p105 = scmp.ne.s32.totalorder %s91, %s92
      %p106 = scmp.eq.s32.totalorder %s18, 3
      %p107 = por %p105, %p106
      %p109 = scmp.ne.s32.totalorder %s92, %s108
      %p110 = scmp.eq.s32.totalorder %s18, 0
      %p111 = por %p109, %p110
      %s112 = ssub.s32 %s19, %s31
      %s113 = ssub.s32 %s20, %s27
      %s114 = sor.u32 %s112, %s113
      %p115 = scmp.eq.s32.totalorder %s114, 0
      %s117 = sadd.s32 %s116, 1
      %s118 = scalar_select %p115, %s116, %s117
      %p121 = pneg %p115
      %p122 = scmp.eq.s32.totalorder %s12, 3
      %p123 = por %p121, %p122
      %p124 = scmp.ne.s32.totalorder %s116, %s119
      %p125 = scmp.eq.s32.totalorder %s12, 0
      %p126 = por %p124, %p125
      %p127 = scmp.ne.s32.totalorder %s116, %s119
      %p128 = scmp.eq.s32.totalorder %s17, 3
      %p129 = por %p127, %p128
      %p130 = scmp.ne.s32.totalorder %s119, %s120
      %p131 = scmp.eq.s32.totalorder %s17, 0
      %p132 = por %p130, %p131
      %p133 = scmp.ne.s32.totalorder %s119, %s120
      %p134 = scmp.eq.s32.totalorder %s18, 3
      %p135 = por %p133, %p134
      %p137 = scmp.ne.s32.totalorder %s120, %s136
      %p138 = scmp.eq.s32.totalorder %s18, 0
      %p139 = por %p137, %p138
      %p140 = scmp.le.s32.totalorder 1, %s12
      %p141 = scmp.lt.s32.totalorder %s12, 5
      %p142 = pnand %p140, %p141
      %p143 = pneg %p142
      // Predicated region
      $region9: #{itracker_forward.6} parent=5 // pred_check
        _
      $region10: #{itracker_forward.6} parent=5 // pred_check_branch
        %145 = sbr.rel (%p142) target = $region12
      $region11: #{itracker_forward.6} parent=5 // pred_region
        %s146 = ssub.s32 %s12, 1
      $region12: #{itracker_forward.6} parent=5 // pred_fallthru
        _
      %p147 = scmp.lt.s32.totalorder %s12, 4
      // Predicated region
      $region13: #{itracker_forward.6} parent=5 // pred_check
        %p148 = pneg %p147
      $region14: #{itracker_forward.6} parent=5 // pred_check_branch
        %150 = sbr.rel (%p148) target = $region16
      $region15: #{itracker_forward.6} parent=5 // pred_region
        // Predicated region
        $region17: #{itracker_forward.6} parent=15 // pred_check
          %p151 = pneg %p46
        $region18: #{itracker_forward.6} parent=15 // pred_check_branch
          %153 = sbr.rel (%p151) target = $region20
        $region19: #{itracker_forward.6} parent=15 // pred_region
          %s154 = sand.u32 %s36, 1
          %s155 = scalar_lea.sflag [#allocation3], %s154
          %s156 = sand.u32 %s36, 1
          %s157 = smul.addr %s156, 196
          %s158 = scalar_lea.vmem [#allocation2], %s157
          %s159 = smul.u32 49, %s20
          %s161 = ssub.s32 3136, 3136
          %162 = vsyncadd %s155, %s161
          %s163 = smul.addr %s19, 49
          %s164 = sadd.s32 %s159, %s163
          %s165 = smul.addr %s164, 64
          %s166 = scalar_lea.hbm %s0, %s165
          %s167 = sshll.u32 %s158, 4
          %s168 = int_to_ptr.vmem [resolvable:$true] %s167
          %173 = dma.hbm_to_vmem [thread:$0]  %s166, 3136, %s168, %s155, 64, 64, 4
        $region20: #{itracker_forward.6} parent=15 // pred_fallthru
          _
        // Predicated region
        $region21: #{itracker_forward.6} parent=15 // pred_check
          %p174 = pneg %p72
        $region22: #{itracker_forward.6} parent=15 // pred_check_branch
          %176 = sbr.rel (%p174) target = $region24
        $region23: #{itracker_forward.6} parent=15 // pred_region
          %p177 = scmp.lt.s32.totalorder %s19, 3
          %s178 = scalar_select %p177, %s19, 3
          %s179 = smul.addr %s178, 16
          %s180 = smul.addr %s179, 4
          %s181 = scalar_lea.vmem %s1, %s180
        $region24: #{itracker_forward.6} parent=15 // pred_fallthru
          _
        // Predicated region
        $region25: #{itracker_forward.6} parent=15 // pred_check
          %p182 = pneg %p98
        $region26: #{itracker_forward.6} parent=15 // pred_check_branch
          %184 = sbr.rel (%p182) target = $region28
        $region27: #{itracker_forward.6} parent=15 // pred_region
          %p185 = scmp.lt.s32.totalorder %s19, 3
          %s186 = scalar_select %p185, %s19, 3
          %s187 = scalar_lea.vmem %s2, %s186
        $region28: #{itracker_forward.6} parent=15 // pred_fallthru
          _
      $region16: #{itracker_forward.6} parent=5 // pred_fallthru
        _
      %p188 = scmp.le.s32.totalorder 1, %s12
      %p189 = scmp.lt.s32.totalorder %s12, 5
      %p190 = pnand %p188, %p189
      %p191 = pneg %p190
      // Predicated region
      $region29: #{itracker_forward.6} parent=5 // pred_check
        _
      $region30: #{itracker_forward.6} parent=5 // pred_check_branch
        %193 = sbr.rel (%p190) target = $region32
      $region31: #{itracker_forward.6} parent=5 // pred_region
        %s194 = ssub.s32 %s12, 1
        %s195 = sand.u32 %s39, 1
        %s196 = scalar_lea.sflag [#allocation3], %s195
        %s197 = sand.u32 %s39, 1
        %s198 = smul.addr %s197, 196
        %s199 = scalar_lea.vmem [#allocation2], %s198
        // Predicated region
        $region33: #{itracker_forward.6} parent=31 // pred_check
          %p200 = pneg %p52
        $region34: #{itracker_forward.6} parent=31 // pred_check_branch
          %202 = sbr.rel (%p200) target = $region36
        $region35: #{itracker_forward.6} parent=31 // pred_region
          %203 = dma.done %s196, 3136
        $region36: #{itracker_forward.6} parent=31 // pred_fallthru
          _
        %s204 = sand.u32 %s39, 1
        %s205 = scalar_lea.sflag [#allocation3], %s204
        %s206 = sand.u32 %s39, 1
        %s207 = smul.addr %s206, 196
        %s208 = scalar_lea.vmem [#allocation2], %s207
        %p209 = pneg %p52
        %p210 = pneg %p49
        %p211 = scmp.lt.s32.totalorder %s21, 3
        %s212 = scalar_select %p211, %s21, 3
        %s213 = smul.addr %s212, 16
        %s214 = smul.addr %s213, 4
        %s215 = scalar_lea.vmem %s1, %s214
        %p216 = pneg %p78
        %p217 = pneg %p75
        %p218 = scmp.lt.s32.totalorder %s21, 3
        %s219 = scalar_select %p218, %s21, 3
        %s220 = scalar_lea.vmem %s2, %s219
        %p221 = pneg %p104
        %p222 = pneg %p101
        %p223 = pneg %p132
        %p224 = pneg %p129
        %s225 = smul.u32 49, %s22
        %p226 = scmp.lt.s32.totalorder %s21, 3
        %s227 = scalar_select %p226, %s21, 3
        %p228 = scmp.lt.s32.totalorder %s225, 48
        %s229 = scalar_select %p228, %s225, 48
        %s230 = smul.addr %s227, 49
        %s231 = sadd.s32 %s229, %s230
        %s232 = smul.addr %s231, 8
        %s233 = scalar_lea.vmem %s3, %s232
        %s234 = smul.u32 49, %s22
        %p235 = scmp.lt.s32.totalorder %s21, 3
        %s236 = scalar_select %p235, %s21, 3
        %s237 = smul.addr %s236, 16
        %s238 = smul.addr %s237, 4
        %s239 = scalar_lea.vmem %s1, %s238
        %p240 = scmp.lt.s32.totalorder %s21, 3
        %s241 = scalar_select %p240, %s21, 3
        %s242 = scalar_lea.vmem %s2, %s241
        %s243 = smul.u32 49, %s22
        %p244 = scmp.lt.s32.totalorder %s21, 3
        %s245 = scalar_select %p244, %s21, 3
        %p246 = scmp.lt.s32.totalorder %s243, 48
        %s247 = scalar_select %p246, %s243, 48
        %s248 = smul.addr %s245, 49
        %s249 = sadd.s32 %s247, %s248
        %s250 = smul.addr %s249, 8
        %s251 = scalar_lea.vmem %s3, %s250
        %s252 = smul.u32 49, %s22
        %v254 = vld [vmem:[%s199] sm:$0xf]
        %v255 = vld [vmem:[%s199 + $0x4] sm:$0xf]
        %v256 = vld [vmem:[%s199 + $0x8] sm:$0xf]
        %v257 = vld [vmem:[%s199 + $0xc] sm:$0xf]
        %v258 = vld [vmem:[%s199 + $0x10] sm:$0xf]
        %v259 = vld [vmem:[%s199 + $0x14] sm:$0xf]
        %v260 = vld [vmem:[%s199 + $0x18] sm:$0xf]
        %v261 = vld [vmem:[%s199 + $0x1c] sm:$0xf]
        %v262 = vld [vmem:[%s199 + $0x20] sm:$0xf]
        %v263 = vld [vmem:[%s199 + $0x24] sm:$0xf]
        %v264 = vld [vmem:[%s199 + $0x28] sm:$0xf]
        %v265 = vld [vmem:[%s199 + $0x2c] sm:$0xf]
        %v266 = vld [vmem:[%s199 + $0x30] sm:$0xf]
        %v267 = vld [vmem:[%s199 + $0x34] sm:$0xf]
        %v268 = vld [vmem:[%s199 + $0x38] sm:$0xf]
        %v269 = vld [vmem:[%s199 + $0x3c] sm:$0xf]
        %v270 = vld [vmem:[%s199 + $0x40] sm:$0xf]
        %v271 = vld [vmem:[%s199 + $0x44] sm:$0xf]
        %v272 = vld [vmem:[%s199 + $0x48] sm:$0xf]
        %v273 = vld [vmem:[%s199 + $0x4c] sm:$0xf]
        %v274 = vld [vmem:[%s199 + $0x50] sm:$0xf]
        %v275 = vld [vmem:[%s199 + $0x54] sm:$0xf]
        %v276 = vld [vmem:[%s199 + $0x58] sm:$0xf]
        %v277 = vld [vmem:[%s199 + $0x5c] sm:$0xf]
        %v278 = vld [vmem:[%s199 + $0x60] sm:$0xf]
        %v279 = vld [vmem:[%s199 + $0x64] sm:$0xf]
        %v280 = vld [vmem:[%s199 + $0x68] sm:$0xf]
        %v281 = vld [vmem:[%s199 + $0x6c] sm:$0xf]
        %v282 = vld [vmem:[%s199 + $0x70] sm:$0xf]
        %v283 = vld [vmem:[%s199 + $0x74] sm:$0xf]
        %v284 = vld [vmem:[%s199 + $0x78] sm:$0xf]
        %v285 = vld [vmem:[%s199 + $0x7c] sm:$0xf]
        %v286 = vld [vmem:[%s199 + $0x80] sm:$0xf]
        %v287 = vld [vmem:[%s199 + $0x84] sm:$0xf]
        %v288 = vld [vmem:[%s199 + $0x88] sm:$0xf]
        %v289 = vld [vmem:[%s199 + $0x8c] sm:$0xf]
        %v290 = vld [vmem:[%s199 + $0x90] sm:$0xf]
        %v291 = vld [vmem:[%s199 + $0x94] sm:$0xf]
        %v292 = vld [vmem:[%s199 + $0x98] sm:$0xf]
        %v293 = vld [vmem:[%s199 + $0x9c] sm:$0xf]
        %v294 = vld [vmem:[%s199 + $0xa0] sm:$0xf]
        %v295 = vld [vmem:[%s199 + $0xa4] sm:$0xf]
        %v296 = vld [vmem:[%s199 + $0xa8] sm:$0xf]
        %v297 = vld [vmem:[%s199 + $0xac] sm:$0xf]
        %v298 = vld [vmem:[%s199 + $0xb0] sm:$0xf]
        %v299 = vld [vmem:[%s199 + $0xb4] sm:$0xf]
        %v300 = vld [vmem:[%s199 + $0xb8] sm:$0xf]
        %v301 = vld [vmem:[%s199 + $0xbc] sm:$0xf]
        %v302 = vld [vmem:[%s199 + $0xc0] sm:$0xf]
        %v303 = vld [vmem:[%s239] sm:$0xf]
        %v304 = vld [vmem:[%s239 + $0x4] sm:$0xf]
        %v305 = vld [vmem:[%s239 + $0x8] sm:$0xf]
        %v306 = vld [vmem:[%s239 + $0xc] sm:$0xf]
        %v307 = vld [vmem:[%s239 + $0x10] sm:$0xf]
        %v308 = vld [vmem:[%s239 + $0x14] sm:$0xf]
        %v309 = vld [vmem:[%s239 + $0x18] sm:$0xf]
        %v310 = vld [vmem:[%s239 + $0x1c] sm:$0xf]
        %v311 = vld [vmem:[%s239 + $0x20] sm:$0xf]
        %v312 = vld [vmem:[%s239 + $0x24] sm:$0xf]
        %v313 = vld [vmem:[%s239 + $0x28] sm:$0xf]
        %v314 = vld [vmem:[%s239 + $0x2c] sm:$0xf]
        %v315 = vld [vmem:[%s239 + $0x30] sm:$0xf]
        %v316 = vld [vmem:[%s239 + $0x34] sm:$0xf]
        %v317 = vld [vmem:[%s239 + $0x38] sm:$0xf]
        %v318 = vld [vmem:[%s239 + $0x3c] sm:$0x1]
        %v319 = vld [vmem:[%s242] sm:$0x1]
        %v321 = vlaneseq
        %v322 = vshrl.u32 %v321, 7
        %v323 = vsub.s32 0, %v322
        %v324 = vrot.slane %v319, %v323
        %v375 = vunpack.c.l.b16 %v254
        %v376 = vunpack.c.l.b16 %v255
        %v377 = vunpack.c.l.b16 %v256
        %v378 = vunpack.c.l.b16 %v257
        %v379 = vunpack.c.l.b16 %v258
        %v380 = vunpack.c.l.b16 %v259
        %v381 = vunpack.c.l.b16 %v260
        %v382 = vunpack.c.l.b16 %v261
        %v383 = vunpack.c.l.b16 %v262
        %v384 = vunpack.c.l.b16 %v263
        %v385 = vunpack.c.l.b16 %v264
        %v386 = vunpack.c.l.b16 %v265
        %v387 = vunpack.c.l.b16 %v266
        %v388 = vunpack.c.l.b16 %v267
        %v389 = vunpack.c.l.b16 %v268
        %v390 = vunpack.c.l.b16 %v269
        %v391 = vunpack.c.l.b16 %v270
        %v392 = vunpack.c.l.b16 %v271
        %v393 = vunpack.c.l.b16 %v272
        %v394 = vunpack.c.l.b16 %v273
        %v395 = vunpack.c.l.b16 %v274
        %v396 = vunpack.c.l.b16 %v275
        %v397 = vunpack.c.l.b16 %v276
        %v398 = vunpack.c.l.b16 %v277
        %v399 = vunpack.c.l.b16 %v278
        %v400 = vunpack.c.l.b16 %v279
        %v401 = vunpack.c.l.b16 %v280
        %v402 = vunpack.c.l.b16 %v281
        %v403 = vunpack.c.l.b16 %v282
        %v404 = vunpack.c.l.b16 %v283
        %v405 = vunpack.c.l.b16 %v284
        %v406 = vunpack.c.l.b16 %v285
        %v407 = vunpack.c.l.b16 %v286
        %v408 = vunpack.c.l.b16 %v287
        %v409 = vunpack.c.l.b16 %v288
        %v410 = vunpack.c.l.b16 %v289
        %v411 = vunpack.c.l.b16 %v290
        %v412 = vunpack.c.l.b16 %v291
        %v413 = vunpack.c.l.b16 %v292
        %v414 = vunpack.c.l.b16 %v293
        %v415 = vunpack.c.l.b16 %v294
        %v416 = vunpack.c.l.b16 %v295
        %v417 = vunpack.c.l.b16 %v296
        %v418 = vunpack.c.l.b16 %v297
        %v419 = vunpack.c.l.b16 %v298
        %v420 = vunpack.c.l.b16 %v299
        %v421 = vunpack.c.l.b16 %v300
        %v422 = vunpack.c.l.b16 %v301
        %v423 = vunpack.c.l.b16 %v302
        %v424 = vpack.c.b16 %v376, %v375
        %v425 = vpack.c.b16 %v378, %v377
        %v426 = vpack.c.b16 %v380, %v379
        %v427 = vpack.c.b16 %v382, %v381
        %v428 = vpack.c.b16 %v384, %v383
        %v429 = vpack.c.b16 %v386, %v385
        %v430 = vpack.c.b16 %v388, %v387
        %v431 = vpack.c.b16 %v390, %v389
        %v432 = vpack.c.b16 %v392, %v391
        %v433 = vpack.c.b16 %v394, %v393
        %v434 = vpack.c.b16 %v396, %v395
        %v435 = vpack.c.b16 %v398, %v397
        %v436 = vpack.c.b16 %v400, %v399
        %v437 = vpack.c.b16 %v402, %v401
        %v438 = vpack.c.b16 %v404, %v403
        %v439 = vpack.c.b16 %v406, %v405
        %v440 = vpack.c.b16 %v408, %v407
        %v441 = vpack.c.b16 %v410, %v409
        %v442 = vpack.c.b16 %v412, %v411
        %v443 = vpack.c.b16 %v414, %v413
        %v444 = vpack.c.b16 %v416, %v415
        %v445 = vpack.c.b16 %v418, %v417
        %v446 = vpack.c.b16 %v420, %v419
        %v447 = vpack.c.b16 %v422, %v421
        %v448 = vpack.c.b16 %v423, %v423
        %v465 = vunpack.c.l.b16 %v303
        %v466 = vunpack.c.l.b16 %v304
        %v467 = vunpack.c.l.b16 %v305
        %v468 = vunpack.c.l.b16 %v306
        %v469 = vunpack.c.l.b16 %v307
        %v470 = vunpack.c.l.b16 %v308
        %v471 = vunpack.c.l.b16 %v309
        %v472 = vunpack.c.l.b16 %v310
        %v473 = vunpack.c.l.b16 %v311
        %v474 = vunpack.c.l.b16 %v312
        %v475 = vunpack.c.l.b16 %v313
        %v476 = vunpack.c.l.b16 %v314
        %v477 = vunpack.c.l.b16 %v315
        %v478 = vunpack.c.l.b16 %v316
        %v479 = vunpack.c.l.b16 %v317
        %v480 = vunpack.c.l.b16 %v318
        %v481 = vpack.c.b16 %v466, %v465
        %v482 = vpack.c.b16 %v468, %v467
        %v483 = vpack.c.b16 %v470, %v469
        %v484 = vpack.c.b16 %v472, %v471
        %v485 = vpack.c.b16 %v474, %v473
        %v486 = vpack.c.b16 %v476, %v475
        %v487 = vpack.c.b16 %v478, %v477
        %v488 = vpack.c.b16 %v480, %v479
        %vm496 = vcmask 990208
        %v498 = vsel %vm496, %v424, 0
        %v501 = vsel %vm496, %v425, 0
        %v504 = vsel %vm496, %v426, 0
        %v507 = vsel %vm496, %v427, 0
        %v510 = vsel %vm496, %v428, 0
        %v513 = vsel %vm496, %v429, 0
        %v516 = vsel %vm496, %v430, 0
        %v519 = vsel %vm496, %v431, 0
        %v522 = vsel %vm496, %v432, 0
        %v525 = vsel %vm496, %v433, 0
        %v528 = vsel %vm496, %v434, 0
        %v531 = vsel %vm496, %v435, 0
        %v534 = vsel %vm496, %v436, 0
        %v537 = vsel %vm496, %v437, 0
        %v540 = vsel %vm496, %v438, 0
        %v543 = vsel %vm496, %v439, 0
        %v546 = vsel %vm496, %v440, 0
        %v549 = vsel %vm496, %v441, 0
        %v552 = vsel %vm496, %v442, 0
        %v555 = vsel %vm496, %v443, 0
        %v558 = vsel %vm496, %v444, 0
        %v561 = vsel %vm496, %v445, 0
        %v564 = vsel %vm496, %v446, 0
        %v567 = vsel %vm496, %v447, 0
        %v570 = vsel %vm496, %v448, 0
        %vm572 = vcmask 1043456
        %vm573 = vcmask 1044480
        %v574 = vsel %vm572, 4294967295, 65535
        %v575 = vsel %vm573, %v574, 0
        %v577 = vand.u32 %v488, %v575
        %579 = vmatprep.subr.bf16.mxu0 0
        %580 = vmatpush1.bf16.msra.mxu0 %v481
        %581 = vmatprep.subr.bf16.mxu0 0
        %582 = vmatpush1.bf16.msra.mxu0 %v482
        %583 = vmatprep.subr.bf16.mxu0 0
        %584 = vmatpush1.bf16.msra.mxu0 %v483
        %585 = vmatprep.subr.bf16.mxu0 0
        %586 = vmatpush1.bf16.msra.mxu0 %v484
        %587 = vmatprep.subr.bf16.mxu0 0
        %588 = vmatpush1.bf16.msra.mxu0 %v485
        %589 = vmatprep.subr.bf16.mxu0 0
        %590 = vmatpush1.bf16.msra.mxu0 %v486
        %591 = vmatprep.subr.bf16.mxu0 0
        %592 = vmatpush1.bf16.msra.mxu0 %v487
        %593 = vmatprep.subr.bf16.mxu0 0
        %594 = vmatpush1.bf16.msra.mxu0 %v577
        %595 = vmatprep.subr.bf16.mxu0 0
        %596 = vmatpush1.bf16.msra.mxu0 0
        %597 = vmatprep.subr.bf16.mxu0 0
        %598 = vmatpush1.bf16.msra.mxu0 0
        %599 = vmatprep.subr.bf16.mxu0 0
        %600 = vmatpush1.bf16.msra.mxu0 0
        %601 = vmatprep.subr.bf16.mxu0 0
        %602 = vmatpush1.bf16.msra.mxu0 0
        %603 = vmatprep.subr.bf16.mxu0 0
        %604 = vmatpush1.bf16.msra.mxu0 0
        %605 = vmatprep.subr.bf16.mxu0 0
        %606 = vmatpush1.bf16.msra.mxu0 0
        %607 = vmatprep.subr.bf16.mxu0 0
        %608 = vmatpush1.bf16.msra.mxu0 0
        %609 = vmatprep.subr.bf16.mxu0 0
        %610 = vmatpush1.bf16.msra.mxu0 0
        %611 = vmatprep.mubr.bf16.mxu0 0
        %612 = vmatmul.mubr.bf16.gmra.mrb[0].mxu0 %v498
        %v613 = vpop.f32.mrb[0].mxu0
        %v614 = vadd.f32 %v324, %v613
        %v615 = vpop.f32.mrb[0].mxu0
        %v616 = vpop.f32.mrb[0].mxu0
        %v617 = vadd.f32 %v324, %v616
        %v618 = vpop.f32.mrb[0].mxu0
        %619 = vmatprep.mubr.bf16.mxu0 0
        %620 = vmatmul.mubr.bf16.gmra.mrb[0].mxu0 %v501
        %v621 = vpop.f32.mrb[0].mxu0
        %v622 = vadd.f32 %v324, %v621
        %v623 = vpop.f32.mrb[0].mxu0
        %v624 = vpop.f32.mrb[0].mxu0
        %v625 = vadd.f32 %v324, %v624
        %v626 = vpop.f32.mrb[0].mxu0
        %627 = vmatprep.mubr.bf16.mxu0 0
        %628 = vmatmul.mubr.bf16.gmra.mrb[0].mxu0 %v504
        %v629 = vpop.f32.mrb[0].mxu0
        %v630 = vadd.f32 %v324, %v629
        %v631 = vpop.f32.mrb[0].mxu0
        %v632 = vpop.f32.mrb[0].mxu0
        %v633 = vadd.f32 %v324, %v632
        %v634 = vpop.f32.mrb[0].mxu0
        %635 = vmatprep.mubr.bf16.mxu0 0
        %636 = vmatmul.mubr.bf16.gmra.mrb[0].mxu0 %v507
        %v637 = vpop.f32.mrb[0].mxu0
        %v638 = vadd.f32 %v324, %v637
        %v639 = vpop.f32.mrb[0].mxu0
        %v640 = vpop.f32.mrb[0].mxu0
        %v641 = vadd.f32 %v324, %v640
        %v642 = vpop.f32.mrb[0].mxu0
        %643 = vmatprep.mubr.bf16.mxu0 0
        %644 = vmatmul.mubr.bf16.gmra.mrb[0].mxu0 %v510
        %v645 = vpop.f32.mrb[0].mxu0
        %v646 = vadd.f32 %v324, %v645
        %v647 = vpop.f32.mrb[0].mxu0
        %v648 = vpop.f32.mrb[0].mxu0
        %v649 = vadd.f32 %v324, %v648
        %v650 = vpop.f32.mrb[0].mxu0
        %651 = vmatprep.mubr.bf16.mxu0 0
        %652 = vmatmul.mubr.bf16.gmra.mrb[0].mxu0 %v513
        %v653 = vpop.f32.mrb[0].mxu0
        %v654 = vadd.f32 %v324, %v653
        %v655 = vpop.f32.mrb[0].mxu0
        %v656 = vpop.f32.mrb[0].mxu0
        %v657 = vadd.f32 %v324, %v656
        %v658 = vpop.f32.mrb[0].mxu0
        %659 = vmatprep.mubr.bf16.mxu0 0
        %660 = vmatmul.mubr.bf16.gmra.mrb[0].mxu0 %v516
        %v661 = vpop.f32.mrb[0].mxu0
        %v662 = vadd.f32 %v324, %v661
        %v663 = vpop.f32.mrb[0].mxu0
        %v664 = vpop.f32.mrb[0].mxu0
        %v665 = vadd.f32 %v324, %v664
        %v666 = vpop.f32.mrb[0].mxu0
        %667 = vmatprep.mubr.bf16.mxu0 0
        %668 = vmatmul.mubr.bf16.gmra.mrb[0].mxu0 %v519
        %v669 = vpop.f32.mrb[0].mxu0
        %v670 = vadd.f32 %v324, %v669
        %v671 = vpop.f32.mrb[0].mxu0
        %v672 = vpop.f32.mrb[0].mxu0
        %v673 = vadd.f32 %v324, %v672
        %v674 = vpop.f32.mrb[0].mxu0
        %675 = vmatprep.mubr.bf16.mxu0 0
        %676 = vmatmul.mubr.bf16.gmra.mrb[0].mxu0 %v522
        %v677 = vpop.f32.mrb[0].mxu0
        %v678 = vadd.f32 %v324, %v677
        %v679 = vpop.f32.mrb[0].mxu0
        %v680 = vpop.f32.mrb[0].mxu0
        %v681 = vadd.f32 %v324, %v680
        %v682 = vpop.f32.mrb[0].mxu0
        %683 = vmatprep.mubr.bf16.mxu0 0
        %684 = vmatmul.mubr.bf16.gmra.mrb[0].mxu0 %v525
        %v685 = vpop.f32.mrb[0].mxu0
        %v686 = vadd.f32 %v324, %v685
        %v687 = vpop.f32.mrb[0].mxu0
        %v688 = vpop.f32.mrb[0].mxu0
        %v689 = vadd.f32 %v324, %v688
        %v690 = vpop.f32.mrb[0].mxu0
        %691 = vmatprep.mubr.bf16.mxu0 0
        %692 = vmatmul.mubr.bf16.gmra.mrb[0].mxu0 %v528
        %v693 = vpop.f32.mrb[0].mxu0
        %v694 = vadd.f32 %v324, %v693
        %v695 = vpop.f32.mrb[0].mxu0
        %v696 = vpop.f32.mrb[0].mxu0
        %v697 = vadd.f32 %v324, %v696
        %v698 = vpop.f32.mrb[0].mxu0
        %699 = vmatprep.mubr.bf16.mxu0 0
        %700 = vmatmul.mubr.bf16.gmra.mrb[0].mxu0 %v531
        %v701 = vpop.f32.mrb[0].mxu0
        %v702 = vadd.f32 %v324, %v701
        %v703 = vpop.f32.mrb[0].mxu0
        %v704 = vpop.f32.mrb[0].mxu0
        %v705 = vadd.f32 %v324, %v704
        %v706 = vpop.f32.mrb[0].mxu0
        %707 = vmatprep.mubr.bf16.mxu0 0
        %708 = vmatmul.mubr.bf16.gmra.mrb[0].mxu0 %v534
        %v709 = vpop.f32.mrb[0].mxu0
        %v710 = vadd.f32 %v324, %v709
        %v711 = vpop.f32.mrb[0].mxu0
        %v712 = vpop.f32.mrb[0].mxu0
        %v713 = vadd.f32 %v324, %v712
        %v714 = vpop.f32.mrb[0].mxu0
        %715 = vmatprep.mubr.bf16.mxu0 0
        %716 = vmatmul.mubr.bf16.gmra.mrb[0].mxu0 %v537
        %v717 = vpop.f32.mrb[0].mxu0
        %v718 = vadd.f32 %v324, %v717
        %v719 = vpop.f32.mrb[0].mxu0
        %v720 = vpop.f32.mrb[0].mxu0
        %v721 = vadd.f32 %v324, %v720
        %v722 = vpop.f32.mrb[0].mxu0
        %723 = vmatprep.mubr.bf16.mxu0 0
        %724 = vmatmul.mubr.bf16.gmra.mrb[0].mxu0 %v540
        %v725 = vpop.f32.mrb[0].mxu0
        %v726 = vadd.f32 %v324, %v725
        %v727 = vpop.f32.mrb[0].mxu0
        %v728 = vpop.f32.mrb[0].mxu0
        %v729 = vadd.f32 %v324, %v728
        %v730 = vpop.f32.mrb[0].mxu0
        %731 = vmatprep.mubr.bf16.mxu0 0
        %732 = vmatmul.mubr.bf16.gmra.mrb[0].mxu0 %v543
        %v733 = vpop.f32.mrb[0].mxu0
        %v734 = vadd.f32 %v324, %v733
        %v735 = vpop.f32.mrb[0].mxu0
        %v736 = vpop.f32.mrb[0].mxu0
        %v737 = vadd.f32 %v324, %v736
        %v738 = vpop.f32.mrb[0].mxu0
        %739 = vmatprep.mubr.bf16.mxu0 0
        %740 = vmatmul.mubr.bf16.gmra.mrb[0].mxu0 %v546
        %v741 = vpop.f32.mrb[0].mxu0
        %v742 = vadd.f32 %v324, %v741
        %v743 = vpop.f32.mrb[0].mxu0
        %v744 = vpop.f32.mrb[0].mxu0
        %v745 = vadd.f32 %v324, %v744
        %v746 = vpop.f32.mrb[0].mxu0
        %747 = vmatprep.mubr.bf16.mxu0 0
        %748 = vmatmul.mubr.bf16.gmra.mrb[0].mxu0 %v549
        %v749 = vpop.f32.mrb[0].mxu0
        %v750 = vadd.f32 %v324, %v749
        %v751 = vpop.f32.mrb[0].mxu0
        %v752 = vpop.f32.mrb[0].mxu0
        %v753 = vadd.f32 %v324, %v752
        %v754 = vpop.f32.mrb[0].mxu0
        %755 = vmatprep.mubr.bf16.mxu0 0
        %756 = vmatmul.mubr.bf16.gmra.mrb[0].mxu0 %v552
        %v757 = vpop.f32.mrb[0].mxu0
        %v758 = vadd.f32 %v324, %v757
        %v759 = vpop.f32.mrb[0].mxu0
        %v760 = vpop.f32.mrb[0].mxu0
        %v761 = vadd.f32 %v324, %v760
        %v762 = vpop.f32.mrb[0].mxu0
        %763 = vmatprep.mubr.bf16.mxu0 0
        %764 = vmatmul.mubr.bf16.gmra.mrb[0].mxu0 %v555
        %v765 = vpop.f32.mrb[0].mxu0
        %v766 = vadd.f32 %v324, %v765
        %v767 = vpop.f32.mrb[0].mxu0
        %v768 = vpop.f32.mrb[0].mxu0
        %v769 = vadd.f32 %v324, %v768
        %v770 = vpop.f32.mrb[0].mxu0
        %771 = vmatprep.mubr.bf16.mxu0 0
        %772 = vmatmul.mubr.bf16.gmra.mrb[0].mxu0 %v558
        %v773 = vpop.f32.mrb[0].mxu0
        %v774 = vadd.f32 %v324, %v773
        %v775 = vpop.f32.mrb[0].mxu0
        %v776 = vpop.f32.mrb[0].mxu0
        %v777 = vadd.f32 %v324, %v776
        %v778 = vpop.f32.mrb[0].mxu0
        %779 = vmatprep.mubr.bf16.mxu0 0
        %780 = vmatmul.mubr.bf16.gmra.mrb[0].mxu0 %v561
        %v781 = vpop.f32.mrb[0].mxu0
        %v782 = vadd.f32 %v324, %v781
        %v783 = vpop.f32.mrb[0].mxu0
        %v784 = vpop.f32.mrb[0].mxu0
        %v785 = vadd.f32 %v324, %v784
        %v786 = vpop.f32.mrb[0].mxu0
        %787 = vmatprep.mubr.bf16.mxu0 0
        %788 = vmatmul.mubr.bf16.gmra.mrb[0].mxu0 %v564
        %v789 = vpop.f32.mrb[0].mxu0
        %v790 = vadd.f32 %v324, %v789
        %v791 = vpop.f32.mrb[0].mxu0
        %v792 = vpop.f32.mrb[0].mxu0
        %v793 = vadd.f32 %v324, %v792
        %v794 = vpop.f32.mrb[0].mxu0
        %795 = vmatprep.mubr.bf16.mxu0 0
        %796 = vmatmul.mubr.bf16.gmra.mrb[0].mxu0 %v567
        %v797 = vpop.f32.mrb[0].mxu0
        %v798 = vadd.f32 %v324, %v797
        %v799 = vpop.f32.mrb[0].mxu0
        %v800 = vpop.f32.mrb[0].mxu0
        %v801 = vadd.f32 %v324, %v800
        %v802 = vpop.f32.mrb[0].mxu0
        %803 = vmatprep.mubr.bf16.mxu0 0
        %804 = vmatmul.mubr.bf16.gmra.mrb[0].mxu0 %v570
        %v805 = vpop.f32.mrb[0].mxu0
        %v806 = vadd.f32 %v324, %v805
        %v807 = vpop.f32.mrb[0].mxu0
        %v808 = vpop.f32.mrb[0].mxu0
        %v809 = vpop.f32.mrb[0].mxu0
        %810 = vdwg.mxu0
        %v811 = vmax.f32 %v614, 0.0
        %v812 = vmax.f32 %v617, 0.0
        %v813 = vmax.f32 %v622, 0.0
        %v814 = vmax.f32 %v625, 0.0
        %v815 = vmax.f32 %v630, 0.0
        %v816 = vmax.f32 %v633, 0.0
        %v817 = vmax.f32 %v638, 0.0
        %v818 = vmax.f32 %v641, 0.0
        %v819 = vmax.f32 %v646, 0.0
        %v820 = vmax.f32 %v649, 0.0
        %v821 = vmax.f32 %v654, 0.0
        %v822 = vmax.f32 %v657, 0.0
        %v823 = vmax.f32 %v662, 0.0
        %v824 = vmax.f32 %v665, 0.0
        %v825 = vmax.f32 %v670, 0.0
        %v826 = vmax.f32 %v673, 0.0
        %v827 = vmax.f32 %v678, 0.0
        %v828 = vmax.f32 %v681, 0.0
        %v829 = vmax.f32 %v686, 0.0
        %v830 = vmax.f32 %v689, 0.0
        %v831 = vmax.f32 %v694, 0.0
        %v832 = vmax.f32 %v697, 0.0
        %v833 = vmax.f32 %v702, 0.0
        %v834 = vmax.f32 %v705, 0.0
        %v835 = vmax.f32 %v710, 0.0
        %v836 = vmax.f32 %v713, 0.0
        %v837 = vmax.f32 %v718, 0.0
        %v838 = vmax.f32 %v721, 0.0
        %v839 = vmax.f32 %v726, 0.0
        %v840 = vmax.f32 %v729, 0.0
        %v841 = vmax.f32 %v734, 0.0
        %v842 = vmax.f32 %v737, 0.0
        %v843 = vmax.f32 %v742, 0.0
        %v844 = vmax.f32 %v745, 0.0
        %v845 = vmax.f32 %v750, 0.0
        %v846 = vmax.f32 %v753, 0.0
        %v847 = vmax.f32 %v758, 0.0
        %v848 = vmax.f32 %v761, 0.0
        %v849 = vmax.f32 %v766, 0.0
        %v850 = vmax.f32 %v769, 0.0
        %v851 = vmax.f32 %v774, 0.0
        %v852 = vmax.f32 %v777, 0.0
        %v853 = vmax.f32 %v782, 0.0
        %v854 = vmax.f32 %v785, 0.0
        %v855 = vmax.f32 %v790, 0.0
        %v856 = vmax.f32 %v793, 0.0
        %v857 = vmax.f32 %v798, 0.0
        %v858 = vmax.f32 %v801, 0.0
        %v859 = vmax.f32 %v806, 0.0
        %vm860 = vcmask 261120
        %861 = vst.msk [vmem:[%s251] sm:$0xff] %vm860, %v811
        %862 = vst.msk [vmem:[%s251 + $0x8] sm:$0xff] %vm860, %v812
        %863 = vst.msk [vmem:[%s251 + $0x10] sm:$0xff] %vm860, %v813
        %864 = vst.msk [vmem:[%s251 + $0x18] sm:$0xff] %vm860, %v814
        %865 = vst.msk [vmem:[%s251 + $0x20] sm:$0xff] %vm860, %v815
        %866 = vst.msk [vmem:[%s251 + $0x28] sm:$0xff] %vm860, %v816
        %867 = vst.msk [vmem:[%s251 + $0x30] sm:$0xff] %vm860, %v817
        %868 = vst.msk [vmem:[%s251 + $0x38] sm:$0xff] %vm860, %v818
        %869 = vst.msk [vmem:[%s251 + $0x40] sm:$0xff] %vm860, %v819
        %870 = vst.msk [vmem:[%s251 + $0x48] sm:$0xff] %vm860, %v820
        %871 = vst.msk [vmem:[%s251 + $0x50] sm:$0xff] %vm860, %v821
        %872 = vst.msk [vmem:[%s251 + $0x58] sm:$0xff] %vm860, %v822
        %873 = vst.msk [vmem:[%s251 + $0x60] sm:$0xff] %vm860, %v823
        %874 = vst.msk [vmem:[%s251 + $0x68] sm:$0xff] %vm860, %v824
        %875 = vst.msk [vmem:[%s251 + $0x70] sm:$0xff] %vm860, %v825
        %876 = vst.msk [vmem:[%s251 + $0x78] sm:$0xff] %vm860, %v826
        %877 = vst.msk [vmem:[%s251 + $0x80] sm:$0xff] %vm860, %v827
        %878 = vst.msk [vmem:[%s251 + $0x88] sm:$0xff] %vm860, %v828
        %879 = vst.msk [vmem:[%s251 + $0x90] sm:$0xff] %vm860, %v829
        %880 = vst.msk [vmem:[%s251 + $0x98] sm:$0xff] %vm860, %v830
        %881 = vst.msk [vmem:[%s251 + $0xa0] sm:$0xff] %vm860, %v831
        %882 = vst.msk [vmem:[%s251 + $0xa8] sm:$0xff] %vm860, %v832
        %883 = vst.msk [vmem:[%s251 + $0xb0] sm:$0xff] %vm860, %v833
        %884 = vst.msk [vmem:[%s251 + $0xb8] sm:$0xff] %vm860, %v834
        %885 = vst.msk [vmem:[%s251 + $0xc0] sm:$0xff] %vm860, %v835
        %886 = vst.msk [vmem:[%s251 + $0xc8] sm:$0xff] %vm860, %v836
        %887 = vst.msk [vmem:[%s251 + $0xd0] sm:$0xff] %vm860, %v837
        %888 = vst.msk [vmem:[%s251 + $0xd8] sm:$0xff] %vm860, %v838
        %889 = vst.msk [vmem:[%s251 + $0xe0] sm:$0xff] %vm860, %v839
        %890 = vst.msk [vmem:[%s251 + $0xe8] sm:$0xff] %vm860, %v840
        %891 = vst.msk [vmem:[%s251 + $0xf0] sm:$0xff] %vm860, %v841
        %892 = vst.msk [vmem:[%s251 + $0xf8] sm:$0xff] %vm860, %v842
        %893 = vst.msk [vmem:[%s251 + $0x100] sm:$0xff] %vm860, %v843
        %894 = vst.msk [vmem:[%s251 + $0x108] sm:$0xff] %vm860, %v844
        %895 = vst.msk [vmem:[%s251 + $0x110] sm:$0xff] %vm860, %v845
        %896 = vst.msk [vmem:[%s251 + $0x118] sm:$0xff] %vm860, %v846
        %897 = vst.msk [vmem:[%s251 + $0x120] sm:$0xff] %vm860, %v847
        %898 = vst.msk [vmem:[%s251 + $0x128] sm:$0xff] %vm860, %v848
        %899 = vst.msk [vmem:[%s251 + $0x130] sm:$0xff] %vm860, %v849
        %900 = vst.msk [vmem:[%s251 + $0x138] sm:$0xff] %vm860, %v850
        %901 = vst.msk [vmem:[%s251 + $0x140] sm:$0xff] %vm860, %v851
        %902 = vst.msk [vmem:[%s251 + $0x148] sm:$0xff] %vm860, %v852
        %903 = vst.msk [vmem:[%s251 + $0x150] sm:$0xff] %vm860, %v853
        %904 = vst.msk [vmem:[%s251 + $0x158] sm:$0xff] %vm860, %v854
        %905 = vst.msk [vmem:[%s251 + $0x160] sm:$0xff] %vm860, %v855
        %906 = vst.msk [vmem:[%s251 + $0x168] sm:$0xff] %vm860, %v856
        %907 = vst.msk [vmem:[%s251 + $0x170] sm:$0xff] %vm860, %v857
        %908 = vst.msk [vmem:[%s251 + $0x178] sm:$0xff] %vm860, %v858
        %909 = vst.msk [vmem:[%s251 + $0x180] sm:$0xff] %vm860, %v859
        %s910 = smul.u32 49, %s22
        %p911 = scmp.lt.s32.totalorder %s21, 3
        %s912 = scalar_select %p911, %s21, 3
        %p913 = scmp.lt.s32.totalorder %s910, 48
        %s914 = scalar_select %p913, %s910, 48
        %s915 = smul.addr %s912, 49
        %s916 = sadd.s32 %s914, %s915
        %s917 = smul.addr %s916, 8
        %s918 = scalar_lea.vmem %s3, %s917
        // Predicated region
        $region37: #{itracker_forward.6} parent=31 // pred_check
          %p919 = pneg %p129
        $region38: #{itracker_forward.6} parent=31 // pred_check_branch
          %921 = sbr.rel (%p919) target = $region40
        $region39: #{itracker_forward.6} parent=31 // pred_region
          %s922 = smul.u32 49, %s22
        $region40: #{itracker_forward.6} parent=31 // pred_fallthru
          _
      $region32: #{itracker_forward.6} parent=5 // pred_fallthru
        _
      %p923 = scmp.le.s32.totalorder 2, %s12
      // Predicated region
      $region41: #{itracker_forward.6} parent=5 // pred_check
        %p924 = pneg %p923
      $region42: #{itracker_forward.6} parent=5 // pred_check_branch
        %926 = sbr.rel (%p924) target = $region44
      $region43: #{itracker_forward.6} parent=5 // pred_region
        %s927 = ssub.s32 %s12, 2
        // Predicated region
        $region45: #{itracker_forward.6} parent=43 // pred_check
          %p928 = pneg %p135
        $region46: #{itracker_forward.6} parent=43 // pred_check_branch
          %930 = sbr.rel (%p928) target = $region48
        $region47: #{itracker_forward.6} parent=43 // pred_region
          %s931 = smul.u32 49, %s24
          %p932 = scmp.lt.s32.totalorder %s23, 3
          %s933 = scalar_select %p932, %s23, 3
          %p934 = scmp.lt.s32.totalorder %s931, 48
          %s935 = scalar_select %p934, %s931, 48
          %s936 = smul.addr %s933, 49
          %s937 = sadd.s32 %s935, %s936
          %s938 = smul.addr %s937, 8
          %s939 = scalar_lea.vmem %s3, %s938
        $region48: #{itracker_forward.6} parent=43 // pred_fallthru
          _
      $region44: #{itracker_forward.6} parent=5 // pred_fallthru
        _
    $region6: #{itracker_forward.6} parent=1 // loop_footer
      %s16 = sadd.s32 1, %s12
    $region7: #{itracker_forward.6} parent=1 // loop_footer_branch
      %11 = sbr.rel target = $region3
    $region8: #{itracker_forward.6} parent=1 // loop_exit
      _
    %940 = vsyncpa [#allocation3], 1
    %s941 = scalar_lea.sflag [#allocation3], 1
    %942 = vsyncpa %s941, 1

// kernel: itracker_forward.7
$region0: #{itracker_forward.7}
  #allocation0 [shape = 'u32[]', space=smem, size = 0x4, offset = 0x4, fixed_abs, tag = 'smem constant byte address 0x4 - core index']
  #allocation1 [shape = 'u32[144,128]{1,0:T(1,128)}', space=vmem, size = 0x12000, scoped, tag = 'internal scratch']
  %s0 = inlined_call_operand.vmem [shape: f32[4,72,32], index: 0, kind: input, shape index: {}]
  %s1 = inlined_call_operand.vmem [shape: f32[32,32], index: 1, kind: input, shape index: {}]
  %s2 = inlined_call_operand.vmem [shape: f32[4,72,32], index: 2, kind: output, shape index: {}]
  %s3 = sld [smem:[#allocation0]]
  $region41: #{itracker_forward.7} parent=0
    _
  %s5 = ssub.s32 1, %s3
  %s6 = scalar_select 0, %s5, %s3
  loop: start=0, step=1, limit=6
  $region2: #{itracker_forward.7} parent=0 // loop_pre_header
    _
  $region3: #{itracker_forward.7} parent=0 // loop_header
    %s8 = sphi 0, %s12
    %p9 = scmp.ge.s32.totalorder %s8, 6
    %s15 = sphi 0, %s27
    %s16 = sphi 0, %s23
    %s17 = sphi 0, %s15
    %s18 = sphi 0, %s16
    %s19 = sphi 0, %s17
    %s20 = sphi 0, %s18
    %s32 = sphi 0, %s34
    %s35 = sphi 0, %s32
    %s36 = sphi 0, %s35
    %s52 = sphi 0, %s36
    %s56 = sphi 0, %s56
    %s58 = sphi 0, %s56
    %s59 = sphi 0, %s58
    %s73 = sphi 0, %s59
    %s81 = sphi 0, %s83
    %s84 = sphi 0, %s81
    %s85 = sphi 0, %s84
    %s101 = sphi 0, %s85
  $region4: #{itracker_forward.7} parent=0 // loop_header_branch
    %11 = sbr.rel (%p9) target = $region8
  $region5: #{itracker_forward.7} parent=0 // loop_body
    %s13 = ssub.s32 %s8, 1
    %s14 = ssub.s32 %s8, 2
    %s21 = sadd.s32 1, %s16
    %p22 = scmp.ge.s32.totalorder %s21, 1
    %s23 = scalar_select %p22, 0, %s21
    %s24 = sadd.s32 1, %s15
    %s25 = scalar_select %p22, %s24, %s15
    %p26 = scmp.ge.s32.totalorder %s25, 4
    %s27 = scalar_select %p26, 0, %s25
    %s28 = ssub.s32 %s15, %s27
    %s29 = ssub.s32 %s16, %s23
    %s30 = sor.u32 %s28, %s29
    %p31 = scmp.eq.s32.totalorder %s30, 0
    %s33 = sadd.s32 %s32, 1
    %s34 = scalar_select %p31, %s32, %s33
    %p37 = pneg %p31
    %p38 = scmp.eq.s32.totalorder %s8, 3
    %p39 = por %p37, %p38
    %p40 = scmp.ne.s32.totalorder %s32, %s35
    %p41 = scmp.eq.s32.totalorder %s8, 0
    %p42 = por %p40, %p41
    %p43 = scmp.ne.s32.totalorder %s32, %s35
    %p44 = scmp.eq.s32.totalorder %s13, 3
    %p45 = por %p43, %p44
    %p46 = scmp.ne.s32.totalorder %s35, %s36
    %p47 = scmp.eq.s32.totalorder %s13, 0
    %p48 = por %p46, %p47
    %p49 = scmp.ne.s32.totalorder %s35, %s36
    %p50 = scmp.eq.s32.totalorder %s14, 3
    %p51 = por %p49, %p50
    %p53 = scmp.ne.s32.totalorder %s36, %s52
    %p54 = scmp.eq.s32.totalorder %s14, 0
    %p55 = por %p53, %p54
    %s57 = sadd.s32 %s56, 1
    %p60 = scmp.eq.s32.totalorder %s8, 3
    %p61 = scmp.ne.s32.totalorder %s56, %s58
    %p62 = scmp.eq.s32.totalorder %s8, 0
    %p63 = por %p61, %p62
    %p64 = scmp.ne.s32.totalorder %s56, %s58
    %p65 = scmp.eq.s32.totalorder %s13, 3
    %p66 = por %p64, %p65
    %p67 = scmp.ne.s32.totalorder %s58, %s59
    %p68 = scmp.eq.s32.totalorder %s13, 0
    %p69 = por %p67, %p68
    %p70 = scmp.ne.s32.totalorder %s58, %s59
    %p71 = scmp.eq.s32.totalorder %s14, 3
    %p72 = por %p70, %p71
    %p74 = scmp.ne.s32.totalorder %s59, %s73
    %p75 = scmp.eq.s32.totalorder %s14, 0
    %p76 = por %p74, %p75
    %s77 = ssub.s32 %s15, %s27
    %s78 = ssub.s32 %s16, %s23
    %s79 = sor.u32 %s77, %s78
    %p80 = scmp.eq.s32.totalorder %s79, 0
    %s82 = sadd.s32 %s81, 1
    %s83 = scalar_select %p80, %s81, %s82
    %p86 = pneg %p80
    %p87 = scmp.eq.s32.totalorder %s8, 3
    %p88 = por %p86, %p87
    %p89 = scmp.ne.s32.totalorder %s81, %s84
    %p90 = scmp.eq.s32.totalorder %s8, 0
    %p91 = por %p89, %p90
    %p92 = scmp.ne.s32.totalorder %s81, %s84
    %p93 = scmp.eq.s32.totalorder %s13, 3
    %p94 = por %p92, %p93
    %p95 = scmp.ne.s32.totalorder %s84, %s85
    %p96 = scmp.eq.s32.totalorder %s13, 0
    %p97 = por %p95, %p96
    %p98 = scmp.ne.s32.totalorder %s84, %s85
    %p99 = scmp.eq.s32.totalorder %s14, 3
    %p100 = por %p98, %p99
    %p102 = scmp.ne.s32.totalorder %s85, %s101
    %p103 = scmp.eq.s32.totalorder %s14, 0
    %p104 = por %p102, %p103
    %p105 = scmp.le.s32.totalorder 1, %s8
    %p106 = scmp.lt.s32.totalorder %s8, 5
    %p107 = pnand %p105, %p106
    %p108 = pneg %p107
    // Predicated region
    $region9: #{itracker_forward.7} parent=5 // pred_check
      _
    $region10: #{itracker_forward.7} parent=5 // pred_check_branch
      %110 = sbr.rel (%p107) target = $region12
    $region11: #{itracker_forward.7} parent=5 // pred_region
      %s111 = ssub.s32 %s8, 1
      // Predicated region
      $region13: #{itracker_forward.7} parent=11 // pred_check
        %p112 = pneg %p69
      $region14: #{itracker_forward.7} parent=11 // pred_check_branch
        %114 = sbr.rel (%p112) target = $region16
      $region15: #{itracker_forward.7} parent=11 // pred_region
        _
      $region16: #{itracker_forward.7} parent=11 // pred_fallthru
        _
    $region12: #{itracker_forward.7} parent=5 // pred_fallthru
      _
    %p115 = scmp.lt.s32.totalorder %s8, 4
    // Predicated region
    $region17: #{itracker_forward.7} parent=5 // pred_check
      %p116 = pneg %p115
    $region18: #{itracker_forward.7} parent=5 // pred_check_branch
      %118 = sbr.rel (%p116) target = $region20
    $region19: #{itracker_forward.7} parent=5 // pred_region
      // Predicated region
      $region21: #{itracker_forward.7} parent=19 // pred_check
        %p119 = pneg %p42
      $region22: #{itracker_forward.7} parent=19 // pred_check_branch
        %121 = sbr.rel (%p119) target = $region24
      $region23: #{itracker_forward.7} parent=19 // pred_region
        %s122 = smul.u32 9, %s16
        %p123 = scmp.lt.s32.totalorder %s15, 3
        %s124 = scalar_select %p123, %s15, 3
        %p125 = scmp.lt.s32.totalorder %s122, 8
        %s126 = scalar_select %p125, %s122, 8
        %s127 = smul.addr %s124, 9
        %s128 = sadd.s32 %s126, %s127
        %s129 = smul.addr %s128, 8
        %s130 = scalar_lea.vmem %s0, %s129
        %s131 = smul.u32 9, %s16
      $region24: #{itracker_forward.7} parent=19 // pred_fallthru
        _
    $region20: #{itracker_forward.7} parent=5 // pred_fallthru
      _
    %p132 = scmp.le.s32.totalorder 1, %s8
    %p133 = scmp.lt.s32.totalorder %s8, 5
    %p134 = pnand %p132, %p133
    %p135 = pneg %p134
    // Predicated region
    $region25: #{itracker_forward.7} parent=5 // pred_check
      _
    $region26: #{itracker_forward.7} parent=5 // pred_check_branch
      %137 = sbr.rel (%p134) target = $region28
    $region27: #{itracker_forward.7} parent=5 // pred_region
      %s138 = ssub.s32 %s8, 1
      %s139 = smul.u32 9, %s18
      %p140 = scmp.lt.s32.totalorder %s17, 3
      %s141 = scalar_select %p140, %s17, 3
      %p142 = scmp.lt.s32.totalorder %s139, 8
      %s143 = scalar_select %p142, %s139, 8
      %s144 = smul.addr %s141, 9
      %s145 = sadd.s32 %s143, %s144
      %s146 = smul.addr %s145, 8
      %s147 = scalar_lea.vmem %s0, %s146
      %p148 = pneg %p48
      %p149 = pneg %p45
      %p150 = pneg %p69
      %p151 = pneg %p66
      %p152 = pneg %p97
      %p153 = pneg %p94
      %s154 = smul.u32 9, %s18
      %p155 = scmp.lt.s32.totalorder %s17, 3
      %s156 = scalar_select %p155, %s17, 3
      %p157 = scmp.lt.s32.totalorder %s154, 8
      %s158 = scalar_select %p157, %s154, 8
      %s159 = smul.addr %s156, 9
      %s160 = sadd.s32 %s158, %s159
      %s161 = smul.addr %s160, 8
      %s162 = scalar_lea.vmem %s2, %s161
      %s163 = smul.u32 9, %s18
      %p164 = scmp.lt.s32.totalorder %s17, 3
      %s165 = scalar_select %p164, %s17, 3
      %p166 = scmp.lt.s32.totalorder %s163, 8
      %s167 = scalar_select %p166, %s163, 8
      %s168 = smul.addr %s165, 9
      %s169 = sadd.s32 %s167, %s168
      %s170 = smul.addr %s169, 8
      %s171 = scalar_lea.vmem %s0, %s170
      %s172 = smul.u32 9, %s18
      %s173 = smul.u32 9, %s18
      %p174 = scmp.lt.s32.totalorder %s17, 3
      %s175 = scalar_select %p174, %s17, 3
      %p176 = scmp.lt.s32.totalorder %s173, 8
      %s177 = scalar_select %p176, %s173, 8
      %s178 = smul.addr %s175, 9
      %s179 = sadd.s32 %s177, %s178
      %s180 = smul.addr %s179, 8
      %s181 = scalar_lea.vmem %s2, %s180
      %s182 = smul.u32 9, %s18
      %v183 = vld [vmem:[%s171] sm:$0xff]
      %v184 = vld [vmem:[%s171 + $0x8] sm:$0xff]
      %v185 = vld [vmem:[%s171 + $0x10] sm:$0xff]
      %v186 = vld [vmem:[%s171 + $0x18] sm:$0xff]
      %v187 = vld [vmem:[%s171 + $0x20] sm:$0xff]
      %v188 = vld [vmem:[%s171 + $0x28] sm:$0xff]
      %v189 = vld [vmem:[%s171 + $0x30] sm:$0xff]
      %v190 = vld [vmem:[%s171 + $0x38] sm:$0xff]
      %v191 = vld [vmem:[%s171 + $0x40] sm:$0xff]
      %v192 = vmul.f32 %v183, %v183
      %v193 = vmul.f32 %v184, %v184
      %v194 = vmul.f32 %v185, %v185
      %v195 = vmul.f32 %v186, %v186
      %v196 = vmul.f32 %v187, %v187
      %v197 = vmul.f32 %v188, %v188
      %v198 = vmul.f32 %v189, %v189
      %v199 = vmul.f32 %v190, %v190
      %v200 = vmul.f32 %v191, %v191
      %v201 = vld [vmem:[%s1] sm:$0xff]
      %v202 = vld [vmem:[%s1 + $0x8] sm:$0xff]
      %v203 = vld [vmem:[%s1 + $0x10] sm:$0xff]
      %v204 = vld [vmem:[%s1 + $0x18] sm:$0xff]
      %vm205 = vcmask 261120
      %v207 = vsel %vm205, %v192, 0
      %v210 = vsel %vm205, %v193, 0
      %v213 = vsel %vm205, %v194, 0
      %v216 = vsel %vm205, %v195, 0
      %v219 = vsel %vm205, %v196, 0
      %v222 = vsel %vm205, %v197, 0
      %v225 = vsel %vm205, %v198, 0
      %v228 = vsel %vm205, %v199, 0
      %v231 = vsel %vm205, %v200, 0
      %233 = vmatprep.subr.mxu0 0.0
      %234 = vmatpush1.msra.mxu0 %v201
      %235 = vmatprep.subr.mxu0 0.0
      %236 = vmatpush1.msra.mxu0 %v202
      %237 = vmatprep.subr.mxu0 0.0
      %238 = vmatpush1.msra.mxu0 %v203
      %239 = vmatprep.subr.mxu0 0.0
      %240 = vmatpush1.msra.mxu0 %v204
      %241 = vmatprep.subr.mxu0 0.0
      %242 = vmatpush1.msra.mxu0 0.0
      %243 = vmatprep.subr.mxu0 0.0
      %244 = vmatpush1.msra.mxu0 0.0
      %245 = vmatprep.subr.mxu0 0.0
      %246 = vmatpush1.msra.mxu0 0.0
      %247 = vmatprep.subr.mxu0 0.0
      %248 = vmatpush1.msra.mxu0 0.0
      %249 = vmatprep.subr.mxu0 0.0
      %250 = vmatpush1.msra.mxu0 0.0
      %251 = vmatprep.subr.mxu0 0.0
      %252 = vmatpush1.msra.mxu0 0.0
      %253 = vmatprep.subr.mxu0 0.0
      %254 = vmatpush1.msra.mxu0 0.0
      %255 = vmatprep.subr.mxu0 0.0
      %256 = vmatpush1.msra.mxu0 0.0
      %257 = vmatprep.subr.mxu0 0.0
      %258 = vmatpush1.msra.mxu0 0.0
      %259 = vmatprep.subr.mxu0 0.0
      %260 = vmatpush1.msra.mxu0 0.0
      %261 = vmatprep.subr.mxu0 0.0
      %262 = vmatpush1.msra.mxu0 0.0
      %263 = vmatprep.subr.mxu0 0.0
      %264 = vmatpush1.msra.mxu0 0.0
      %265 = vmatprep.subr.mxu0 0.0
      %266 = vmatpush1.msra.mxu0 0.0
      %267 = vmatprep.subr.mxu0 0.0
      %268 = vmatpush1.msra.mxu0 0.0
      %269 = vmatprep.subr.mxu0 0.0
      %270 = vmatpush1.msra.mxu0 0.0
      %271 = vmatprep.subr.mxu0 0.0
      %272 = vmatpush1.msra.mxu0 0.0
      %273 = vmatprep.subr.mxu0 0.0
      %274 = vmatpush1.msra.mxu0 0.0
      %275 = vmatprep.subr.mxu0 0.0
      %276 = vmatpush1.msra.mxu0 0.0
      %277 = vmatprep.subr.mxu0 0.0
      %278 = vmatpush1.msra.mxu0 0.0
      %279 = vmatprep.subr.mxu0 0.0
      %280 = vmatpush1.msra.mxu0 0.0
      %281 = vmatprep.subr.mxu0 0.0
      %282 = vmatpush1.msra.mxu0 0.0
      %283 = vmatprep.subr.mxu0 0.0
      %284 = vmatpush1.msra.mxu0 0.0
      %285 = vmatprep.subr.mxu0 0.0
      %286 = vmatpush1.msra.mxu0 0.0
      %287 = vmatprep.subr.mxu0 0.0
      %288 = vmatpush1.msra.mxu0 0.0
      %289 = vmatprep.subr.mxu0 0.0
      %290 = vmatpush1.msra.mxu0 0.0
      %291 = vmatprep.subr.mxu0 0.0
      %292 = vmatpush1.msra.mxu0 0.0
      %293 = vmatprep.subr.mxu0 0.0
      %294 = vmatpush1.msra.mxu0 0.0
      %295 = vmatprep.subr.mxu0 0.0
      %296 = vmatpush1.msra.mxu0 0.0
      %297 = vmatprep.mubr.f32.mxu0 0.0
      %298 = vmatmul.mubr.f32.gmra.mrb[0].mxu0 %v207
      %v299 = vpop.f32.mrb[0].mxu0
      %v300 = vadd.f32 0.0, %v299
      %v301 = vpop.f32.mrb[0].mxu0
      %302 = vmatprep.mubr.f32.mxu0 0.0
      %303 = vmatmul.mubr.f32.gmra.mrb[0].mxu0 %v210
      %v304 = vpop.f32.mrb[0].mxu0
      %v305 = vadd.f32 0.0, %v304
      %v306 = vpop.f32.mrb[0].mxu0
      %307 = vmatprep.mubr.f32.mxu0 0.0
      %308 = vmatmul.mubr.f32.gmra.mrb[0].mxu0 %v213
      %v309 = vpop.f32.mrb[0].mxu0
      %v310 = vadd.f32 0.0, %v309
      %v311 = vpop.f32.mrb[0].mxu0
      %312 = vmatprep.mubr.f32.mxu0 0.0
      %313 = vmatmul.mubr.f32.gmra.mrb[0].mxu0 %v216
      %v314 = vpop.f32.mrb[0].mxu0
      %v315 = vadd.f32 0.0, %v314
      %v316 = vpop.f32.mrb[0].mxu0
      %317 = vmatprep.mubr.f32.mxu0 0.0
      %318 = vmatmul.mubr.f32.gmra.mrb[0].mxu0 %v219
      %v319 = vpop.f32.mrb[0].mxu0
      %v320 = vadd.f32 0.0, %v319
      %v321 = vpop.f32.mrb[0].mxu0
      %322 = vmatprep.mubr.f32.mxu0 0.0
      %323 = vmatmul.mubr.f32.gmra.mrb[0].mxu0 %v222
      %v324 = vpop.f32.mrb[0].mxu0
      %v325 = vadd.f32 0.0, %v324
      %v326 = vpop.f32.mrb[0].mxu0
      %327 = vmatprep.mubr.f32.mxu0 0.0
      %328 = vmatmul.mubr.f32.gmra.mrb[0].mxu0 %v225
      %v329 = vpop.f32.mrb[0].mxu0
      %v330 = vadd.f32 0.0, %v329
      %v331 = vpop.f32.mrb[0].mxu0
      %332 = vmatprep.mubr.f32.mxu0 0.0
      %333 = vmatmul.mubr.f32.gmra.mrb[0].mxu0 %v228
      %v334 = vpop.f32.mrb[0].mxu0
      %v335 = vadd.f32 0.0, %v334
      %v336 = vpop.f32.mrb[0].mxu0
      %337 = vmatprep.mubr.f32.mxu0 0.0
      %338 = vmatmul.mubr.f32.gmra.mrb[0].mxu0 %v231
      %v339 = vpop.f32.mrb[0].mxu0
      %v340 = vadd.f32 0.0, %v339
      %v341 = vpop.f32.mrb[0].mxu0
      %342 = vdwg.mxu0
      %v343 = vmul.f32 %v300, 2e-05
      %v344 = vmul.f32 %v305, 2e-05
      %v345 = vmul.f32 %v310, 2e-05
      %v346 = vmul.f32 %v315, 2e-05
      %v347 = vmul.f32 %v320, 2e-05
      %v348 = vmul.f32 %v325, 2e-05
      %v349 = vmul.f32 %v330, 2e-05
      %v350 = vmul.f32 %v335, 2e-05
      %v351 = vmul.f32 %v340, 2e-05
      %v352 = vadd.f32 %v343, 1.0
      %v353 = vadd.f32 %v344, 1.0
      %v354 = vadd.f32 %v345, 1.0
      %v355 = vadd.f32 %v346, 1.0
      %v356 = vadd.f32 %v347, 1.0
      %v357 = vadd.f32 %v348, 1.0
      %v358 = vadd.f32 %v349, 1.0
      %v359 = vadd.f32 %v350, 1.0
      %v360 = vadd.f32 %v351, 1.0
      %v361 = vlog2.pop %v352
      %v362 = vmul.f32 %v361, 0.6931472
      %v363 = vlog2.pop %v353
      %v364 = vmul.f32 %v363, 0.6931472
      %v365 = vlog2.pop %v354
      %v366 = vmul.f32 %v365, 0.6931472
      %v367 = vlog2.pop %v355
      %v368 = vmul.f32 %v367, 0.6931472
      %v369 = vlog2.pop %v356
      %v370 = vmul.f32 %v369, 0.6931472
      %v371 = vlog2.pop %v357
      %v372 = vmul.f32 %v371, 0.6931472
      %v373 = vlog2.pop %v358
      %v374 = vmul.f32 %v373, 0.6931472
      %v375 = vlog2.pop %v359
      %v376 = vmul.f32 %v375, 0.6931472
      %v377 = vlog2.pop %v360
      %v378 = vmul.f32 %v377, 0.6931472
      %v379 = vmul.f32 %v362, -0.75
      %v380 = vmul.f32 %v364, -0.75
      %v381 = vmul.f32 %v366, -0.75
      %v382 = vmul.f32 %v368, -0.75
      %v383 = vmul.f32 %v370, -0.75
      %v384 = vmul.f32 %v372, -0.75
      %v385 = vmul.f32 %v374, -0.75
      %v386 = vmul.f32 %v376, -0.75
      %v387 = vmul.f32 %v378, -0.75
      %v388 = vmul.f32 %v379, 1.442695
      %v389 = vpow.pop %v388
      %v390 = vmul.f32 %v380, 1.442695
      %v391 = vpow.pop %v390
      %v392 = vmul.f32 %v381, 1.442695
      %v393 = vpow.pop %v392
      %v394 = vmul.f32 %v382, 1.442695
      %v395 = vpow.pop %v394
      %v396 = vmul.f32 %v383, 1.442695
      %v397 = vpow.pop %v396
      %v398 = vmul.f32 %v384, 1.442695
      %v399 = vpow.pop %v398
      %v400 = vmul.f32 %v385, 1.442695
      %v401 = vpow.pop %v400
      %v402 = vmul.f32 %v386, 1.442695
      %v403 = vpow.pop %v402
      %v404 = vmul.f32 %v387, 1.442695
      %v405 = vpow.pop %v404
      %v406 = vmul.f32 %v183, %v389
      %v407 = vmul.f32 %v184, %v391
      %v408 = vmul.f32 %v185, %v393
      %v409 = vmul.f32 %v186, %v395
      %v410 = vmul.f32 %v187, %v397
      %v411 = vmul.f32 %v188, %v399
      %v412 = vmul.f32 %v189, %v401
      %v413 = vmul.f32 %v190, %v403
      %v414 = vmul.f32 %v191, %v405
      %415 = vst.msk [vmem:[%s181] sm:$0xff] %vm205, %v406
      %416 = vst.msk [vmem:[%s181 + $0x8] sm:$0xff] %vm205, %v407
      %417 = vst.msk [vmem:[%s181 + $0x10] sm:$0xff] %vm205, %v408
      %418 = vst.msk [vmem:[%s181 + $0x18] sm:$0xff] %vm205, %v409
      %419 = vst.msk [vmem:[%s181 + $0x20] sm:$0xff] %vm205, %v410
      %420 = vst.msk [vmem:[%s181 + $0x28] sm:$0xff] %vm205, %v411
      %421 = vst.msk [vmem:[%s181 + $0x30] sm:$0xff] %vm205, %v412
      %422 = vst.msk [vmem:[%s181 + $0x38] sm:$0xff] %vm205, %v413
      %423 = vst.msk [vmem:[%s181 + $0x40] sm:$0xff] %vm205, %v414
      %s424 = smul.u32 9, %s18
      %p425 = scmp.lt.s32.totalorder %s17, 3
      %s426 = scalar_select %p425, %s17, 3
      %p427 = scmp.lt.s32.totalorder %s424, 8
      %s428 = scalar_select %p427, %s424, 8
      %s429 = smul.addr %s426, 9
      %s430 = sadd.s32 %s428, %s429
      %s431 = smul.addr %s430, 8
      %s432 = scalar_lea.vmem %s2, %s431
      // Predicated region
      $region29: #{itracker_forward.7} parent=27 // pred_check
        %p433 = pneg %p94
      $region30: #{itracker_forward.7} parent=27 // pred_check_branch
        %435 = sbr.rel (%p433) target = $region32
      $region31: #{itracker_forward.7} parent=27 // pred_region
        %s436 = smul.u32 9, %s18
      $region32: #{itracker_forward.7} parent=27 // pred_fallthru
        _
    $region28: #{itracker_forward.7} parent=5 // pred_fallthru
      _
    %p437 = scmp.le.s32.totalorder 2, %s8
    // Predicated region
    $region33: #{itracker_forward.7} parent=5 // pred_check
      %p438 = pneg %p437
    $region34: #{itracker_forward.7} parent=5 // pred_check_branch
      %440 = sbr.rel (%p438) target = $region36
    $region35: #{itracker_forward.7} parent=5 // pred_region
      %s441 = ssub.s32 %s8, 2
      // Predicated region
      $region37: #{itracker_forward.7} parent=35 // pred_check
        %p442 = pneg %p100
      $region38: #{itracker_forward.7} parent=35 // pred_check_branch
        %444 = sbr.rel (%p442) target = $region40
      $region39: #{itracker_forward.7} parent=35 // pred_region
        %s445 = smul.u32 9, %s20
        %p446 = scmp.lt.s32.totalorder %s19, 3
        %s447 = scalar_select %p446, %s19, 3
        %p448 = scmp.lt.s32.totalorder %s445, 8
        %s449 = scalar_select %p448, %s445, 8
        %s450 = smul.addr %s447, 9
        %s451 = sadd.s32 %s449, %s450
        %s452 = smul.addr %s451, 8
        %s453 = scalar_lea.vmem %s2, %s452
      $region40: #{itracker_forward.7} parent=35 // pred_fallthru
        _
    $region36: #{itracker_forward.7} parent=5 // pred_fallthru
      _
  $region6: #{itracker_forward.7} parent=0 // loop_footer
    %s12 = sadd.s32 1, %s8
  $region7: #{itracker_forward.7} parent=0 // loop_footer_branch
    %7 = sbr.rel target = $region3
  $region8: #{itracker_forward.7} parent=0 // loop_exit
    _

// kernel: itracker_forward.8
$region0: #{itracker_forward.8}
  #allocation0 [shape = 'u32[]', space=smem, size = 0x4, offset = 0x4, fixed_abs, tag = 'smem constant byte address 0x4 - core index']
  #allocation1 [shape = 'u32[144,128]{1,0:T(1,128)}', space=vmem, size = 0x12000, scoped, tag = 'internal scratch']
  %s0 = inlined_call_operand.vmem [shape: bf16[4,72,800], index: 0, kind: input, shape index: {}]
  %s1 = inlined_call_operand.vmem [shape: bf16[4,800,64], index: 1, kind: input, shape index: {}]
  %s2 = inlined_call_operand.vmem [shape: f32[4,1,64], index: 2, kind: input, shape index: {}]
  %s3 = inlined_call_operand.vmem [shape: f32[4,72,64], index: 3, kind: output, shape index: {}]
  %s4 = sld [smem:[#allocation0]]
  $region45: #{itracker_forward.8} parent=0
    _
  %s6 = ssub.s32 1, %s4
  %s7 = scalar_select 0, %s6, %s4
  loop: start=0, step=1, limit=6
  $region2: #{itracker_forward.8} parent=0 // loop_pre_header
    _
  $region3: #{itracker_forward.8} parent=0 // loop_header
    %s9 = sphi 0, %s13
    %p10 = scmp.ge.s32.totalorder %s9, 6
    %s16 = sphi 0, %s28
    %s17 = sphi 0, %s24
    %s18 = sphi 0, %s16
    %s19 = sphi 0, %s17
    %s20 = sphi 0, %s18
    %s21 = sphi 0, %s19
    %s33 = sphi 0, %s35
    %s36 = sphi 0, %s33
    %s37 = sphi 0, %s36
    %s53 = sphi 0, %s37
    %s59 = sphi 0, %s61
    %s62 = sphi 0, %s59
    %s63 = sphi 0, %s62
    %s79 = sphi 0, %s63
    %s85 = sphi 0, %s87
    %s88 = sphi 0, %s85
    %s89 = sphi 0, %s88
    %s105 = sphi 0, %s89
    %s113 = sphi 0, %s115
    %s116 = sphi 0, %s113
    %s117 = sphi 0, %s116
    %s133 = sphi 0, %s117
  $region4: #{itracker_forward.8} parent=0 // loop_header_branch
    %12 = sbr.rel (%p10) target = $region8
  $region5: #{itracker_forward.8} parent=0 // loop_body
    %s14 = ssub.s32 %s9, 1
    %s15 = ssub.s32 %s9, 2
    %s22 = sadd.s32 1, %s17
    %p23 = scmp.ge.s32.totalorder %s22, 1
    %s24 = scalar_select %p23, 0, %s22
    %s25 = sadd.s32 1, %s16
    %s26 = scalar_select %p23, %s25, %s16
    %p27 = scmp.ge.s32.totalorder %s26, 4
    %s28 = scalar_select %p27, 0, %s26
    %s29 = ssub.s32 %s16, %s28
    %s30 = ssub.s32 %s17, %s24
    %s31 = sor.u32 %s29, %s30
    %p32 = scmp.eq.s32.totalorder %s31, 0
    %s34 = sadd.s32 %s33, 1
    %s35 = scalar_select %p32, %s33, %s34
    %p38 = pneg %p32
    %p39 = scmp.eq.s32.totalorder %s9, 3
    %p40 = por %p38, %p39
    %p41 = scmp.ne.s32.totalorder %s33, %s36
    %p42 = scmp.eq.s32.totalorder %s9, 0
    %p43 = por %p41, %p42
    %p44 = scmp.ne.s32.totalorder %s33, %s36
    %p45 = scmp.eq.s32.totalorder %s14, 3
    %p46 = por %p44, %p45
    %p47 = scmp.ne.s32.totalorder %s36, %s37
    %p48 = scmp.eq.s32.totalorder %s14, 0
    %p49 = por %p47, %p48
    %p50 = scmp.ne.s32.totalorder %s36, %s37
    %p51 = scmp.eq.s32.totalorder %s15, 3
    %p52 = por %p50, %p51
    %p54 = scmp.ne.s32.totalorder %s37, %s53
    %p55 = scmp.eq.s32.totalorder %s15, 0
    %p56 = por %p54, %p55
    %s57 = ssub.s32 %s16, %s28
    %p58 = scmp.eq.s32.totalorder %s57, 0
    %s60 = sadd.s32 %s59, 1
    %s61 = scalar_select %p58, %s59, %s60
    %p64 = pneg %p58
    %p65 = scmp.eq.s32.totalorder %s9, 3
    %p66 = por %p64, %p65
    %p67 = scmp.ne.s32.totalorder %s59, %s62
    %p68 = scmp.eq.s32.totalorder %s9, 0
    %p69 = por %p67, %p68
    %p70 = scmp.ne.s32.totalorder %s59, %s62
    %p71 = scmp.eq.s32.totalorder %s14, 3
    %p72 = por %p70, %p71
    %p73 = scmp.ne.s32.totalorder %s62, %s63
    %p74 = scmp.eq.s32.totalorder %s14, 0
    %p75 = por %p73, %p74
    %p76 = scmp.ne.s32.totalorder %s62, %s63
    %p77 = scmp.eq.s32.totalorder %s15, 3
    %p78 = por %p76, %p77
    %p80 = scmp.ne.s32.totalorder %s63, %s79
    %p81 = scmp.eq.s32.totalorder %s15, 0
    %p82 = por %p80, %p81
    %s83 = ssub.s32 %s16, %s28
    %p84 = scmp.eq.s32.totalorder %s83, 0
    %s86 = sadd.s32 %s85, 1
    %s87 = scalar_select %p84, %s85, %s86
    %p90 = pneg %p84
    %p91 = scmp.eq.s32.totalorder %s9, 3
    %p92 = por %p90, %p91
    %p93 = scmp.ne.s32.totalorder %s85, %s88
    %p94 = scmp.eq.s32.totalorder %s9, 0
    %p95 = por %p93, %p94
    %p96 = scmp.ne.s32.totalorder %s85, %s88
    %p97 = scmp.eq.s32.totalorder %s14, 3
    %p98 = por %p96, %p97
    %p99 = scmp.ne.s32.totalorder %s88, %s89
    %p100 = scmp.eq.s32.totalorder %s14, 0
    %p101 = por %p99, %p100
    %p102 = scmp.ne.s32.totalorder %s88, %s89
    %p103 = scmp.eq.s32.totalorder %s15, 3
    %p104 = por %p102, %p103
    %p106 = scmp.ne.s32.totalorder %s89, %s105
    %p107 = scmp.eq.s32.totalorder %s15, 0
    %p108 = por %p106, %p107
    %s109 = ssub.s32 %s16, %s28
    %s110 = ssub.s32 %s17, %s24
    %s111 = sor.u32 %s109, %s110
    %p112 = scmp.eq.s32.totalorder %s111, 0
    %s114 = sadd.s32 %s113, 1
    %s115 = scalar_select %p112, %s113, %s114
    %p118 = pneg %p112
    %p119 = scmp.eq.s32.totalorder %s9, 3
    %p120 = por %p118, %p119
    %p121 = scmp.ne.s32.totalorder %s113, %s116
    %p122 = scmp.eq.s32.totalorder %s9, 0
    %p123 = por %p121, %p122
    %p124 = scmp.ne.s32.totalorder %s113, %s116
    %p125 = scmp.eq.s32.totalorder %s14, 3
    %p126 = por %p124, %p125
    %p127 = scmp.ne.s32.totalorder %s116, %s117
    %p128 = scmp.eq.s32.totalorder %s14, 0
    %p129 = por %p127, %p128
    %p130 = scmp.ne.s32.totalorder %s116, %s117
    %p131 = scmp.eq.s32.totalorder %s15, 3
    %p132 = por %p130, %p131
    %p134 = scmp.ne.s32.totalorder %s117, %s133
    %p135 = scmp.eq.s32.totalorder %s15, 0
    %p136 = por %p134, %p135
    %p137 = scmp.le.s32.totalorder 1, %s9
    %p138 = scmp.lt.s32.totalorder %s9, 5
    %p139 = pnand %p137, %p138
    %p140 = pneg %p139
    // Predicated region
    $region9: #{itracker_forward.8} parent=5 // pred_check
      _
    $region10: #{itracker_forward.8} parent=5 // pred_check_branch
      %142 = sbr.rel (%p139) target = $region12
    $region11: #{itracker_forward.8} parent=5 // pred_region
      %s143 = ssub.s32 %s9, 1
    $region12: #{itracker_forward.8} parent=5 // pred_fallthru
      _
    %p144 = scmp.lt.s32.totalorder %s9, 4
    // Predicated region
    $region13: #{itracker_forward.8} parent=5 // pred_check
      %p145 = pneg %p144
    $region14: #{itracker_forward.8} parent=5 // pred_check_branch
      %147 = sbr.rel (%p145) target = $region16
    $region15: #{itracker_forward.8} parent=5 // pred_region
      // Predicated region
      $region17: #{itracker_forward.8} parent=15 // pred_check
        %p148 = pneg %p43
      $region18: #{itracker_forward.8} parent=15 // pred_check_branch
        %150 = sbr.rel (%p148) target = $region20
      $region19: #{itracker_forward.8} parent=15 // pred_region
        %s151 = smul.u32 9, %s17
        %p152 = scmp.lt.s32.totalorder %s16, 3
        %s153 = scalar_select %p152, %s16, 3
        %p154 = scmp.lt.s32.totalorder %s151, 8
        %s155 = scalar_select %p154, %s151, 8
        %s156 = smul.addr %s155, 7
        %s157 = smul.addr %s153, 63
        %s158 = sadd.s32 %s156, %s157
        %s159 = smul.addr %s158, 4
        %s160 = scalar_lea.vmem %s0, %s159
        %s161 = smul.u32 9, %s17
      $region20: #{itracker_forward.8} parent=15 // pred_fallthru
        _
      // Predicated region
      $region21: #{itracker_forward.8} parent=15 // pred_check
        %p162 = pneg %p69
      $region22: #{itracker_forward.8} parent=15 // pred_check_branch
        %164 = sbr.rel (%p162) target = $region24
      $region23: #{itracker_forward.8} parent=15 // pred_region
        %p165 = scmp.lt.s32.totalorder %s16, 3
        %s166 = scalar_select %p165, %s16, 3
        %s167 = smul.addr %s166, 100
        %s168 = smul.addr %s167, 4
        %s169 = scalar_lea.vmem %s1, %s168
      $region24: #{itracker_forward.8} parent=15 // pred_fallthru
        _
      // Predicated region
      $region25: #{itracker_forward.8} parent=15 // pred_check
        %p170 = pneg %p95
      $region26: #{itracker_forward.8} parent=15 // pred_check_branch
        %172 = sbr.rel (%p170) target = $region28
      $region27: #{itracker_forward.8} parent=15 // pred_region
        %p173 = scmp.lt.s32.totalorder %s16, 3
        %s174 = scalar_select %p173, %s16, 3
        %s175 = scalar_lea.vmem %s2, %s174
      $region28: #{itracker_forward.8} parent=15 // pred_fallthru
        _
    $region16: #{itracker_forward.8} parent=5 // pred_fallthru
      _
    %p176 = scmp.le.s32.totalorder 1, %s9
    %p177 = scmp.lt.s32.totalorder %s9, 5
    %p178 = pnand %p176, %p177
    %p179 = pneg %p178
    // Predicated region
    $region29: #{itracker_forward.8} parent=5 // pred_check
      _
    $region30: #{itracker_forward.8} parent=5 // pred_check_branch
      %181 = sbr.rel (%p178) target = $region32
    $region31: #{itracker_forward.8} parent=5 // pred_region
      %s182 = ssub.s32 %s9, 1
      %s183 = smul.u32 9, %s19
      %p184 = scmp.lt.s32.totalorder %s18, 3
      %s185 = scalar_select %p184, %s18, 3
      %p186 = scmp.lt.s32.totalorder %s183, 8
      %s187 = scalar_select %p186, %s183, 8
      %s188 = smul.addr %s187, 7
      %s189 = smul.addr %s185, 63
      %s190 = sadd.s32 %s188, %s189
      %s191 = smul.addr %s190, 4
      %s192 = scalar_lea.vmem %s0, %s191
      %p193 = pneg %p49
      %p194 = pneg %p46
      %p195 = scmp.lt.s32.totalorder %s18, 3
      %s196 = scalar_select %p195, %s18, 3
      %s197 = smul.addr %s196, 100
      %s198 = smul.addr %s197, 4
      %s199 = scalar_lea.vmem %s1, %s198
      %p200 = pneg %p75
      %p201 = pneg %p72
      %p202 = scmp.lt.s32.totalorder %s18, 3
      %s203 = scalar_select %p202, %s18, 3
      %s204 = scalar_lea.vmem %s2, %s203
      %p205 = pneg %p101
      %p206 = pneg %p98
      %p207 = pneg %p129
      %p208 = pneg %p126
      %s209 = smul.u32 9, %s19
      %p210 = scmp.lt.s32.totalorder %s18, 3
      %s211 = scalar_select %p210, %s18, 3
      %p212 = scmp.lt.s32.totalorder %s209, 8
      %s213 = scalar_select %p212, %s209, 8
      %s214 = smul.addr %s211, 9
      %s215 = sadd.s32 %s213, %s214
      %s216 = smul.addr %s215, 8
      %s217 = scalar_lea.vmem %s3, %s216
      %s218 = smul.u32 9, %s19
      %p219 = scmp.lt.s32.totalorder %s18, 3
      %s220 = scalar_select %p219, %s18, 3
      %p221 = scmp.lt.s32.totalorder %s218, 8
      %s222 = scalar_select %p221, %s218, 8
      %s223 = smul.addr %s222, 7
      %s224 = smul.addr %s220, 63
      %s225 = sadd.s32 %s223, %s224
      %s226 = smul.addr %s225, 4
      %s227 = scalar_lea.vmem %s0, %s226
      %s228 = smul.u32 9, %s19
      %p229 = scmp.lt.s32.totalorder %s18, 3
      %s230 = scalar_select %p229, %s18, 3
      %s231 = smul.addr %s230, 100
      %s232 = smul.addr %s231, 4
      %s233 = scalar_lea.vmem %s1, %s232
      %p234 = scmp.lt.s32.totalorder %s18, 3
      %s235 = scalar_select %p234, %s18, 3
      %s236 = scalar_lea.vmem %s2, %s235
      %s237 = smul.u32 9, %s19
      %p238 = scmp.lt.s32.totalorder %s18, 3
      %s239 = scalar_select %p238, %s18, 3
      %p240 = scmp.lt.s32.totalorder %s237, 8
      %s241 = scalar_select %p240, %s237, 8
      %s242 = smul.addr %s239, 9
      %s243 = sadd.s32 %s241, %s242
      %s244 = smul.addr %s243, 8
      %s245 = scalar_lea.vmem %s3, %s244
      %s246 = smul.u32 9, %s19
      %v248 = vld [vmem:[%s227] sm:$0xff]
      %v249 = vld [vmem:[%s227 + $0x8] sm:$0xff]
      %v250 = vld [vmem:[%s227 + $0x10] sm:$0xff]
      %v251 = vld [vmem:[%s227 + $0x18] sm:$0xf]
      %v252 = vld [vmem:[%s227 + $0x1c] sm:$0xff]
      %v253 = vld [vmem:[%s227 + $0x24] sm:$0xff]
      %v254 = vld [vmem:[%s227 + $0x2c] sm:$0xff]
      %v255 = vld [vmem:[%s227 + $0x34] sm:$0xf]
      %v256 = vld [vmem:[%s227 + $0x38] sm:$0xff]
      %v257 = vld [vmem:[%s227 + $0x40] sm:$0xff]
      %v258 = vld [vmem:[%s227 + $0x48] sm:$0xff]
      %v259 = vld [vmem:[%s227 + $0x50] sm:$0xf]
      %v260 = vld [vmem:[%s227 + $0x54] sm:$0xff]
      %v261 = vld [vmem:[%s227 + $0x5c] sm:$0xff]
      %v262 = vld [vmem:[%s227 + $0x64] sm:$0xff]
      %v263 = vld [vmem:[%s227 + $0x6c] sm:$0xf]
      %v264 = vld [vmem:[%s227 + $0x70] sm:$0xff]
      %v265 = vld [vmem:[%s227 + $0x78] sm:$0xff]
      %v266 = vld [vmem:[%s227 + $0x80] sm:$0xff]
      %v267 = vld [vmem:[%s227 + $0x88] sm:$0xf]
      %v268 = vld [vmem:[%s227 + $0x8c] sm:$0xff]
      %v269 = vld [vmem:[%s227 + $0x94] sm:$0xff]
      %v270 = vld [vmem:[%s227 + $0x9c] sm:$0xff]
      %v271 = vld [vmem:[%s227 + $0xa4] sm:$0xf]
      %v272 = vld [vmem:[%s227 + $0xa8] sm:$0xff]
      %v273 = vld [vmem:[%s227 + $0xb0] sm:$0xff]
      %v274 = vld [vmem:[%s227 + $0xb8] sm:$0xff]
      %v275 = vld [vmem:[%s227 + $0xc0] sm:$0xf]
      %v276 = vld [vmem:[%s227 + $0xc4] sm:$0xff]
      %v277 = vld [vmem:[%s227 + $0xcc] sm:$0xff]
      %v278 = vld [vmem:[%s227 + $0xd4] sm:$0xff]
      %v279 = vld [vmem:[%s227 + $0xdc] sm:$0xf]
      %v280 = vld [vmem:[%s227 + $0xe0] sm:$0xff]
      %v281 = vld [vmem:[%s227 + $0xe8] sm:$0xff]
      %v282 = vld [vmem:[%s227 + $0xf0] sm:$0xff]
      %v283 = vld [vmem:[%s227 + $0xf8] sm:$0xf]
      %v284 = vld [vmem:[%s233] sm:$0xf]
      %v285 = vld [vmem:[%s233 + $0x4] sm:$0xf]
      %v286 = vld [vmem:[%s233 + $0x8] sm:$0xf]
      %v287 = vld [vmem:[%s233 + $0xc] sm:$0xf]
      %v288 = vld [vmem:[%s233 + $0x10] sm:$0xf]
      %v289 = vld [vmem:[%s233 + $0x14] sm:$0xf]
      %v290 = vld [vmem:[%s233 + $0x18] sm:$0xf]
      %v291 = vld [vmem:[%s233 + $0x1c] sm:$0xf]
      %v292 = vld [vmem:[%s233 + $0x20] sm:$0xf]
      %v293 = vld [vmem:[%s233 + $0x24] sm:$0xf]
      %v294 = vld [vmem:[%s233 + $0x28] sm:$0xf]
      %v295 = vld [vmem:[%s233 + $0x2c] sm:$0xf]
      %v296 = vld [vmem:[%s233 + $0x30] sm:$0xf]
      %v297 = vld [vmem:[%s233 + $0x34] sm:$0xf]
      %v298 = vld [vmem:[%s233 + $0x38] sm:$0xf]
      %v299 = vld [vmem:[%s233 + $0x3c] sm:$0xf]
      %v300 = vld [vmem:[%s233 + $0x40] sm:$0xf]
      %v301 = vld [vmem:[%s233 + $0x44] sm:$0xf]
      %v302 = vld [vmem:[%s233 + $0x48] sm:$0xf]
      %v303 = vld [vmem:[%s233 + $0x4c] sm:$0xf]
      %v304 = vld [vmem:[%s233 + $0x50] sm:$0xf]
      %v305 = vld [vmem:[%s233 + $0x54] sm:$0xf]
      %v306 = vld [vmem:[%s233 + $0x58] sm:$0xf]
      %v307 = vld [vmem:[%s233 + $0x5c] sm:$0xf]
      %v308 = vld [vmem:[%s233 + $0x60] sm:$0xf]
      %v309 = vld [vmem:[%s233 + $0x64] sm:$0xf]
      %v310 = vld [vmem:[%s233 + $0x68] sm:$0xf]
      %v311 = vld [vmem:[%s233 + $0x6c] sm:$0xf]
      %v312 = vld [vmem:[%s233 + $0x70] sm:$0xf]
      %v313 = vld [vmem:[%s233 + $0x74] sm:$0xf]
      %v314 = vld [vmem:[%s233 + $0x78] sm:$0xf]
      %v315 = vld [vmem:[%s233 + $0x7c] sm:$0xf]
      %v316 = vld [vmem:[%s233 + $0x80] sm:$0xf]
      %v317 = vld [vmem:[%s233 + $0x84] sm:$0xf]
      %v318 = vld [vmem:[%s233 + $0x88] sm:$0xf]
      %v319 = vld [vmem:[%s233 + $0x8c] sm:$0xf]
      %v320 = vld [vmem:[%s233 + $0x90] sm:$0xf]
      %v321 = vld [vmem:[%s233 + $0x94] sm:$0xf]
      %v322 = vld [vmem:[%s233 + $0x98] sm:$0xf]
      %v323 = vld [vmem:[%s233 + $0x9c] sm:$0xf]
      %v324 = vld [vmem:[%s233 + $0xa0] sm:$0xf]
      %v325 = vld [vmem:[%s233 + $0xa4] sm:$0xf]
      %v326 = vld [vmem:[%s233 + $0xa8] sm:$0xf]
      %v327 = vld [vmem:[%s233 + $0xac] sm:$0xf]
      %v328 = vld [vmem:[%s233 + $0xb0] sm:$0xf]
      %v329 = vld [vmem:[%s233 + $0xb4] sm:$0xf]
      %v330 = vld [vmem:[%s233 + $0xb8] sm:$0xf]
      %v331 = vld [vmem:[%s233 + $0xbc] sm:$0xf]
      %v332 = vld [vmem:[%s233 + $0xc0] sm:$0xf]
      %v333 = vld [vmem:[%s233 + $0xc4] sm:$0xf]
      %v334 = vld [vmem:[%s233 + $0xc8] sm:$0xf]
      %v335 = vld [vmem:[%s233 + $0xcc] sm:$0xf]
      %v336 = vld [vmem:[%s233 + $0xd0] sm:$0xf]
      %v337 = vld [vmem:[%s233 + $0xd4] sm:$0xf]
      %v338 = vld [vmem:[%s233 + $0xd8] sm:$0xf]
      %v339 = vld [vmem:[%s233 + $0xdc] sm:$0xf]
      %v340 = vld [vmem:[%s233 + $0xe0] sm:$0xf]
      %v341 = vld [vmem:[%s233 + $0xe4] sm:$0xf]
      %v342 = vld [vmem:[%s233 + $0xe8] sm:$0xf]
      %v343 = vld [vmem:[%s233 + $0xec] sm:$0xf]
      %v344 = vld [vmem:[%s233 + $0xf0] sm:$0xf]
      %v345 = vld [vmem:[%s233 + $0xf4] sm:$0xf]
      %v346 = vld [vmem:[%s233 + $0xf8] sm:$0xf]
      %v347 = vld [vmem:[%s233 + $0xfc] sm:$0xf]
      %v348 = vld [vmem:[%s233 + $0x100] sm:$0xf]
      %v349 = vld [vmem:[%s233 + $0x104] sm:$0xf]
      %v350 = vld [vmem:[%s233 + $0x108] sm:$0xf]
      %v351 = vld [vmem:[%s233 + $0x10c] sm:$0xf]
      %v352 = vld [vmem:[%s233 + $0x110] sm:$0xf]
      %v353 = vld [vmem:[%s233 + $0x114] sm:$0xf]
      %v354 = vld [vmem:[%s233 + $0x118] sm:$0xf]
      %v355 = vld [vmem:[%s233 + $0x11c] sm:$0xf]
      %v356 = vld [vmem:[%s233 + $0x120] sm:$0xf]
      %v357 = vld [vmem:[%s233 + $0x124] sm:$0xf]
      %v358 = vld [vmem:[%s233 + $0x128] sm:$0xf]
      %v359 = vld [vmem:[%s233 + $0x12c] sm:$0xf]
      %v360 = vld [vmem:[%s233 + $0x130] sm:$0xf]
      %v361 = vld [vmem:[%s233 + $0x134] sm:$0xf]
      %v362 = vld [vmem:[%s233 + $0x138] sm:$0xf]
      %v363 = vld [vmem:[%s233 + $0x13c] sm:$0xf]
      %v364 = vld [vmem:[%s233 + $0x140] sm:$0xf]
      %v365 = vld [vmem:[%s233 + $0x144] sm:$0xf]
      %v366 = vld [vmem:[%s233 + $0x148] sm:$0xf]
      %v367 = vld [vmem:[%s233 + $0x14c] sm:$0xf]
      %v368 = vld [vmem:[%s233 + $0x150] sm:$0xf]
      %v369 = vld [vmem:[%s233 + $0x154] sm:$0xf]
      %v370 = vld [vmem:[%s233 + $0x158] sm:$0xf]
      %v371 = vld [vmem:[%s233 + $0x15c] sm:$0xf]
      %v372 = vld [vmem:[%s233 + $0x160] sm:$0xf]
      %v373 = vld [vmem:[%s233 + $0x164] sm:$0xf]
      %v374 = vld [vmem:[%s233 + $0x168] sm:$0xf]
      %v375 = vld [vmem:[%s233 + $0x16c] sm:$0xf]
      %v376 = vld [vmem:[%s233 + $0x170] sm:$0xf]
      %v377 = vld [vmem:[%s233 + $0x174] sm:$0xf]
      %v378 = vld [vmem:[%s233 + $0x178] sm:$0xf]
      %v379 = vld [vmem:[%s233 + $0x17c] sm:$0xf]
      %v380 = vld [vmem:[%s233 + $0x180] sm:$0xf]
      %v381 = vld [vmem:[%s233 + $0x184] sm:$0xf]
      %v382 = vld [vmem:[%s233 + $0x188] sm:$0xf]
      %v383 = vld [vmem:[%s233 + $0x18c] sm:$0xf]
      %v384 = vld [vmem:[%s236] sm:$0x1]
      %v386 = vlaneseq
      %v387 = vshrl.u32 %v386, 7
      %v388 = vsub.s32 0, %v387
      %v389 = vrot.slane %v384, %v388
      %v427 = vunpack.c.l.b16 %v248
      %v428 = vunpack.c.h.b16 %v248
      %v429 = vunpack.c.l.b16 %v249
      %v430 = vunpack.c.h.b16 %v249
      %v431 = vunpack.c.l.b16 %v250
      %v432 = vunpack.c.h.b16 %v250
      %v433 = vunpack.c.l.b16 %v251
      %v434 = vunpack.c.l.b16 %v252
      %v435 = vunpack.c.h.b16 %v252
      %v436 = vunpack.c.l.b16 %v253
      %v437 = vunpack.c.h.b16 %v253
      %v438 = vunpack.c.l.b16 %v254
      %v439 = vunpack.c.h.b16 %v254
      %v440 = vunpack.c.l.b16 %v255
      %v441 = vunpack.c.l.b16 %v256
      %v442 = vunpack.c.h.b16 %v256
      %v443 = vunpack.c.l.b16 %v257
      %v444 = vunpack.c.h.b16 %v257
      %v445 = vunpack.c.l.b16 %v258
      %v446 = vunpack.c.h.b16 %v258
      %v447 = vunpack.c.l.b16 %v259
      %v448 = vunpack.c.l.b16 %v260
      %v449 = vunpack.c.h.b16 %v260
      %v450 = vunpack.c.l.b16 %v261
      %v451 = vunpack.c.h.b16 %v261
      %v452 = vunpack.c.l.b16 %v262
      %v453 = vunpack.c.h.b16 %v262
      %v454 = vunpack.c.l.b16 %v263
      %v455 = vunpack.c.l.b16 %v264
      %v456 = vunpack.c.h.b16 %v264
      %v457 = vunpack.c.l.b16 %v265
      %v458 = vunpack.c.h.b16 %v265
      %v459 = vunpack.c.l.b16 %v266
      %v460 = vunpack.c.h.b16 %v266
      %v461 = vunpack.c.l.b16 %v267
      %v462 = vunpack.c.l.b16 %v268
      %v463 = vunpack.c.h.b16 %v268
      %v464 = vunpack.c.l.b16 %v269
      %v465 = vunpack.c.h.b16 %v269
      %v466 = vunpack.c.l.b16 %v270
      %v467 = vunpack.c.h.b16 %v270
      %v468 = vunpack.c.l.b16 %v271
      %v469 = vunpack.c.l.b16 %v272
      %v470 = vunpack.c.h.b16 %v272
      %v471 = vunpack.c.l.b16 %v273
      %v472 = vunpack.c.h.b16 %v273
      %v473 = vunpack.c.l.b16 %v274
      %v474 = vunpack.c.h.b16 %v274
      %v475 = vunpack.c.l.b16 %v275
      %v476 = vunpack.c.l.b16 %v276
      %v477 = vunpack.c.h.b16 %v276
      %v478 = vunpack.c.l.b16 %v277
      %v479 = vunpack.c.h.b16 %v277
      %v480 = vunpack.c.l.b16 %v278
      %v481 = vunpack.c.h.b16 %v278
      %v482 = vunpack.c.l.b16 %v279
      %v483 = vunpack.c.l.b16 %v280
      %v484 = vunpack.c.h.b16 %v280
      %v485 = vunpack.c.l.b16 %v281
      %v486 = vunpack.c.h.b16 %v281
      %v487 = vunpack.c.l.b16 %v282
      %v488 = vunpack.c.h.b16 %v282
      %v489 = vunpack.c.l.b16 %v283
      %v490 = vpack.c.b16 %v434, %v427
      %v491 = vpack.c.b16 %v435, %v428
      %v492 = vpack.c.b16 %v436, %v429
      %v493 = vpack.c.b16 %v437, %v430
      %v494 = vpack.c.b16 %v438, %v431
      %v495 = vpack.c.b16 %v439, %v432
      %v496 = vpack.c.b16 %v440, %v433
      %v497 = vpack.c.b16 %v448, %v441
      %v498 = vpack.c.b16 %v449, %v442
      %v499 = vpack.c.b16 %v450, %v443
      %v500 = vpack.c.b16 %v451, %v444
      %v501 = vpack.c.b16 %v452, %v445
      %v502 = vpack.c.b16 %v453, %v446
      %v503 = vpack.c.b16 %v454, %v447
      %v504 = vpack.c.b16 %v462, %v455
      %v505 = vpack.c.b16 %v463, %v456
      %v506 = vpack.c.b16 %v464, %v457
      %v507 = vpack.c.b16 %v465, %v458
      %v508 = vpack.c.b16 %v466, %v459
      %v509 = vpack.c.b16 %v467, %v460
      %v510 = vpack.c.b16 %v468, %v461
      %v511 = vpack.c.b16 %v476, %v469
      %v512 = vpack.c.b16 %v477, %v470
      %v513 = vpack.c.b16 %v478, %v471
      %v514 = vpack.c.b16 %v479, %v472
      %v515 = vpack.c.b16 %v480, %v473
      %v516 = vpack.c.b16 %v481, %v474
      %v517 = vpack.c.b16 %v482, %v475
      %v518 = vpack.c.b16 %v483, %v483
      %v519 = vpack.c.b16 %v484, %v484
      %v520 = vpack.c.b16 %v485, %v485
      %v521 = vpack.c.b16 %v486, %v486
      %v522 = vpack.c.b16 %v487, %v487
      %v523 = vpack.c.b16 %v488, %v488
      %v524 = vpack.c.b16 %v489, %v489
      %v655 = vunpack.c.l.b16 %v284
      %v656 = vunpack.c.l.b16 %v285
      %v657 = vunpack.c.l.b16 %v286
      %v658 = vunpack.c.l.b16 %v287
      %v659 = vunpack.c.l.b16 %v288
      %v660 = vunpack.c.l.b16 %v289
      %v661 = vunpack.c.l.b16 %v290
      %v662 = vunpack.c.l.b16 %v291
      %v663 = vunpack.c.l.b16 %v292
      %v664 = vunpack.c.l.b16 %v293
      %v665 = vunpack.c.l.b16 %v294
      %v666 = vunpack.c.l.b16 %v295
      %v667 = vunpack.c.l.b16 %v296
      %v668 = vunpack.c.l.b16 %v297
      %v669 = vunpack.c.l.b16 %v298
      %v670 = vunpack.c.l.b16 %v299
      %v671 = vunpack.c.l.b16 %v300
      %v672 = vunpack.c.l.b16 %v301
      %v673 = vunpack.c.l.b16 %v302
      %v674 = vunpack.c.l.b16 %v303
      %v675 = vunpack.c.l.b16 %v304
      %v676 = vunpack.c.l.b16 %v305
      %v677 = vunpack.c.l.b16 %v306
      %v678 = vunpack.c.l.b16 %v307
      %v679 = vunpack.c.l.b16 %v308
      %v680 = vunpack.c.l.b16 %v309
      %v681 = vunpack.c.l.b16 %v310
      %v682 = vunpack.c.l.b16 %v311
      %v683 = vunpack.c.l.b16 %v312
      %v684 = vunpack.c.l.b16 %v313
      %v685 = vunpack.c.l.b16 %v314
      %v686 = vunpack.c.l.b16 %v315
      %v687 = vunpack.c.l.b16 %v316
      %v688 = vunpack.c.l.b16 %v317
      %v689 = vunpack.c.l.b16 %v318
      %v690 = vunpack.c.l.b16 %v319
      %v691 = vunpack.c.l.b16 %v320
      %v692 = vunpack.c.l.b16 %v321
      %v693 = vunpack.c.l.b16 %v322
      %v694 = vunpack.c.l.b16 %v323
      %v695 = vunpack.c.l.b16 %v324
      %v696 = vunpack.c.l.b16 %v325
      %v697 = vunpack.c.l.b16 %v326
      %v698 = vunpack.c.l.b16 %v327
      %v699 = vunpack.c.l.b16 %v328
      %v700 = vunpack.c.l.b16 %v329
      %v701 = vunpack.c.l.b16 %v330
      %v702 = vunpack.c.l.b16 %v331
      %v703 = vunpack.c.l.b16 %v332
      %v704 = vunpack.c.l.b16 %v333
      %v705 = vunpack.c.l.b16 %v334
      %v706 = vunpack.c.l.b16 %v335
      %v707 = vunpack.c.l.b16 %v336
      %v708 = vunpack.c.l.b16 %v337
      %v709 = vunpack.c.l.b16 %v338
      %v710 = vunpack.c.l.b16 %v339
      %v711 = vunpack.c.l.b16 %v340
      %v712 = vunpack.c.l.b16 %v341
      %v713 = vunpack.c.l.b16 %v342
      %v714 = vunpack.c.l.b16 %v343
      %v715 = vunpack.c.l.b16 %v344
      %v716 = vunpack.c.l.b16 %v345
      %v717 = vunpack.c.l.b16 %v346
      %v718 = vunpack.c.l.b16 %v347
      %v719 = vunpack.c.l.b16 %v348
      %v720 = vunpack.c.l.b16 %v349
      %v721 = vunpack.c.l.b16 %v350
      %v722 = vunpack.c.l.b16 %v351
      %v723 = vunpack.c.l.b16 %v352
      %v724 = vunpack.c.l.b16 %v353
      %v725 = vunpack.c.l.b16 %v354
      %v726 = vunpack.c.l.b16 %v355
      %v727 = vunpack.c.l.b16 %v356
      %v728 = vunpack.c.l.b16 %v357
      %v729 = vunpack.c.l.b16 %v358
      %v730 = vunpack.c.l.b16 %v359
      %v731 = vunpack.c.l.b16 %v360
      %v732 = vunpack.c.l.b16 %v361
      %v733 = vunpack.c.l.b16 %v362
      %v734 = vunpack.c.l.b16 %v363
      %v735 = vunpack.c.l.b16 %v364
      %v736 = vunpack.c.l.b16 %v365
      %v737 = vunpack.c.l.b16 %v366
      %v738 = vunpack.c.l.b16 %v367
      %v739 = vunpack.c.l.b16 %v368
      %v740 = vunpack.c.l.b16 %v369
      %v741 = vunpack.c.l.b16 %v370
      %v742 = vunpack.c.l.b16 %v371
      %v743 = vunpack.c.l.b16 %v372
      %v744 = vunpack.c.l.b16 %v373
      %v745 = vunpack.c.l.b16 %v374
      %v746 = vunpack.c.l.b16 %v375
      %v747 = vunpack.c.l.b16 %v376
      %v748 = vunpack.c.l.b16 %v377
      %v749 = vunpack.c.l.b16 %v378
      %v750 = vunpack.c.l.b16 %v379
      %v751 = vunpack.c.l.b16 %v380
      %v752 = vunpack.c.l.b16 %v381
      %v753 = vunpack.c.l.b16 %v382
      %v754 = vunpack.c.l.b16 %v383
      %v755 = vpack.c.b16 %v656, %v655
      %v756 = vpack.c.b16 %v658, %v657
      %v757 = vpack.c.b16 %v660, %v659
      %v758 = vpack.c.b16 %v662, %v661
      %v759 = vpack.c.b16 %v664, %v663
      %v760 = vpack.c.b16 %v666, %v665
      %v761 = vpack.c.b16 %v668, %v667
      %v762 = vpack.c.b16 %v670, %v669
      %v763 = vpack.c.b16 %v672, %v671
      %v764 = vpack.c.b16 %v674, %v673
      %v765 = vpack.c.b16 %v676, %v675
      %v766 = vpack.c.b16 %v678, %v677
      %v767 = vpack.c.b16 %v680, %v679
      %v768 = vpack.c.b16 %v682, %v681
      %v769 = vpack.c.b16 %v684, %v683
      %v770 = vpack.c.b16 %v686, %v685
      %v771 = vpack.c.b16 %v688, %v687
      %v772 = vpack.c.b16 %v690, %v689
      %v773 = vpack.c.b16 %v692, %v691
      %v774 = vpack.c.b16 %v694, %v693
      %v775 = vpack.c.b16 %v696, %v695
      %v776 = vpack.c.b16 %v698, %v697
      %v777 = vpack.c.b16 %v700, %v699
      %v778 = vpack.c.b16 %v702, %v701
      %v779 = vpack.c.b16 %v704, %v703
      %v780 = vpack.c.b16 %v706, %v705
      %v781 = vpack.c.b16 %v708, %v707
      %v782 = vpack.c.b16 %v710, %v709
      %v783 = vpack.c.b16 %v712, %v711
      %v784 = vpack.c.b16 %v714, %v713
      %v785 = vpack.c.b16 %v716, %v715
      %v786 = vpack.c.b16 %v718, %v717
      %v787 = vpack.c.b16 %v720, %v719
      %v788 = vpack.c.b16 %v722, %v721
      %v789 = vpack.c.b16 %v724, %v723
      %v790 = vpack.c.b16 %v726, %v725
      %v791 = vpack.c.b16 %v728, %v727
      %v792 = vpack.c.b16 %v730, %v729
      %v793 = vpack.c.b16 %v732, %v731
      %v794 = vpack.c.b16 %v734, %v733
      %v795 = vpack.c.b16 %v736, %v735
      %v796 = vpack.c.b16 %v738, %v737
      %v797 = vpack.c.b16 %v740, %v739
      %v798 = vpack.c.b16 %v742, %v741
      %v799 = vpack.c.b16 %v744, %v743
      %v800 = vpack.c.b16 %v746, %v745
      %v801 = vpack.c.b16 %v748, %v747
      %v802 = vpack.c.b16 %v750, %v749
      %v803 = vpack.c.b16 %v752, %v751
      %v804 = vpack.c.b16 %v754, %v753
      %vm855 = vcmask 261120
      %v857 = vsel %vm855, %v496, 0
      %v860 = vsel %vm855, %v503, 0
      %v863 = vsel %vm855, %v510, 0
      %v866 = vsel %vm855, %v517, 0
      %v869 = vsel %vm855, %v524, 0
      %871 = vmatprep.subr.bf16.mxu0 0
      %872 = vmatpush1.bf16.msra.mxu0 %v755
      %873 = vmatprep.subr.bf16.mxu0 0
      %874 = vmatpush1.bf16.msra.mxu0 %v756
      %875 = vmatprep.subr.bf16.mxu0 0
      %876 = vmatpush1.bf16.msra.mxu0 %v757
      %877 = vmatprep.subr.bf16.mxu0 0
      %878 = vmatpush1.bf16.msra.mxu0 %v758
      %879 = vmatprep.subr.bf16.mxu0 0
      %880 = vmatpush1.bf16.msra.mxu0 %v759
      %881 = vmatprep.subr.bf16.mxu0 0
      %882 = vmatpush1.bf16.msra.mxu0 %v760
      %883 = vmatprep.subr.bf16.mxu0 0
      %884 = vmatpush1.bf16.msra.mxu0 %v761
      %885 = vmatprep.subr.bf16.mxu0 0
      %886 = vmatpush1.bf16.msra.mxu0 %v762
      %887 = vmatprep.subr.bf16.mxu0 0
      %888 = vmatpush1.bf16.msra.mxu0 %v763
      %889 = vmatprep.subr.bf16.mxu0 0
      %890 = vmatpush1.bf16.msra.mxu0 %v764
      %891 = vmatprep.subr.bf16.mxu0 0
      %892 = vmatpush1.bf16.msra.mxu0 %v765
      %893 = vmatprep.subr.bf16.mxu0 0
      %894 = vmatpush1.bf16.msra.mxu0 %v766
      %895 = vmatprep.subr.bf16.mxu0 0
      %896 = vmatpush1.bf16.msra.mxu0 %v767
      %897 = vmatprep.subr.bf16.mxu0 0
      %898 = vmatpush1.bf16.msra.mxu0 %v768
      %899 = vmatprep.subr.bf16.mxu0 0
      %900 = vmatpush1.bf16.msra.mxu0 %v769
      %901 = vmatprep.subr.bf16.mxu0 0
      %902 = vmatpush1.bf16.msra.mxu0 %v770
      %903 = vmatprep.mubr.bf16.mxu0 %v491
      %904 = vmatmul.mubr.bf16.gmra.mrb[0].mxu0 %v490
      %v905 = vpop.f32.mrb[0].mxu0
      %v906 = vadd.f32 %v389, %v905
      %v907 = vpop.f32.mrb[0].mxu0
      %v908 = vpop.f32.mrb[0].mxu0
      %v909 = vadd.f32 %v389, %v908
      %v910 = vpop.f32.mrb[0].mxu0
      %911 = vmatprep.mubr.bf16.mxu0 %v498
      %912 = vmatmul.mubr.bf16.gmra.mrb[0].mxu0 %v497
      %v913 = vpop.f32.mrb[0].mxu0
      %v914 = vadd.f32 %v389, %v913
      %v915 = vpop.f32.mrb[0].mxu0
      %v916 = vpop.f32.mrb[0].mxu0
      %v917 = vadd.f32 %v389, %v916
      %v918 = vpop.f32.mrb[0].mxu0
      %919 = vmatprep.mubr.bf16.mxu0 %v505
      %920 = vmatmul.mubr.bf16.gmra.mrb[0].mxu0 %v504
      %v921 = vpop.f32.mrb[0].mxu0
      %v922 = vadd.f32 %v389, %v921
      %v923 = vpop.f32.mrb[0].mxu0
      %v924 = vpop.f32.mrb[0].mxu0
      %v925 = vadd.f32 %v389, %v924
      %v926 = vpop.f32.mrb[0].mxu0
      %927 = vmatprep.mubr.bf16.mxu0 %v512
      %928 = vmatmul.mubr.bf16.gmra.mrb[0].mxu0 %v511
      %v929 = vpop.f32.mrb[0].mxu0
      %v930 = vadd.f32 %v389, %v929
      %v931 = vpop.f32.mrb[0].mxu0
      %v932 = vpop.f32.mrb[0].mxu0
      %v933 = vadd.f32 %v389, %v932
      %v934 = vpop.f32.mrb[0].mxu0
      %935 = vmatprep.mubr.bf16.mxu0 %v519
      %936 = vmatmul.mubr.bf16.gmra.mrb[0].mxu0 %v518
      %v937 = vpop.f32.mrb[0].mxu0
      %v938 = vadd.f32 %v389, %v937
      %v939 = vpop.f32.mrb[0].mxu0
      %v940 = vpop.f32.mrb[0].mxu0
      %v941 = vpop.f32.mrb[0].mxu0
      %942 = vdwg.mxu0
      %943 = vmatprep.subr.bf16.mxu0 0
      %944 = vmatpush1.bf16.msra.mxu0 %v771
      %945 = vmatprep.subr.bf16.mxu0 0
      %946 = vmatpush1.bf16.msra.mxu0 %v772
      %947 = vmatprep.subr.bf16.mxu0 0
      %948 = vmatpush1.bf16.msra.mxu0 %v773
      %949 = vmatprep.subr.bf16.mxu0 0
      %950 = vmatpush1.bf16.msra.mxu0 %v774
      %951 = vmatprep.subr.bf16.mxu0 0
      %952 = vmatpush1.bf16.msra.mxu0 %v775
      %953 = vmatprep.subr.bf16.mxu0 0
      %954 = vmatpush1.bf16.msra.mxu0 %v776
      %955 = vmatprep.subr.bf16.mxu0 0
      %956 = vmatpush1.bf16.msra.mxu0 %v777
      %957 = vmatprep.subr.bf16.mxu0 0
      %958 = vmatpush1.bf16.msra.mxu0 %v778
      %959 = vmatprep.subr.bf16.mxu0 0
      %960 = vmatpush1.bf16.msra.mxu0 %v779
      %961 = vmatprep.subr.bf16.mxu0 0
      %962 = vmatpush1.bf16.msra.mxu0 %v780
      %963 = vmatprep.subr.bf16.mxu0 0
      %964 = vmatpush1.bf16.msra.mxu0 %v781
      %965 = vmatprep.subr.bf16.mxu0 0
      %966 = vmatpush1.bf16.msra.mxu0 %v782
      %967 = vmatprep.subr.bf16.mxu0 0
      %968 = vmatpush1.bf16.msra.mxu0 %v783
      %969 = vmatprep.subr.bf16.mxu0 0
      %970 = vmatpush1.bf16.msra.mxu0 %v784
      %971 = vmatprep.subr.bf16.mxu0 0
      %972 = vmatpush1.bf16.msra.mxu0 %v785
      %973 = vmatprep.subr.bf16.mxu0 0
      %974 = vmatpush1.bf16.msra.mxu0 %v786
      %975 = vmatprep.mubr.bf16.mxu0 %v493
      %976 = vmatmul.mubr.bf16.gmra.mrb[0].mxu0 %v492
      %v977 = vpop.f32.mrb[0].mxu0
      %v978 = vadd.f32 %v906, %v977
      %v979 = vpop.f32.mrb[0].mxu0
      %v980 = vpop.f32.mrb[0].mxu0
      %v981 = vadd.f32 %v909, %v980
      %v982 = vpop.f32.mrb[0].mxu0
      %983 = vmatprep.mubr.bf16.mxu0 %v500
      %984 = vmatmul.mubr.bf16.gmra.mrb[0].mxu0 %v499
      %v985 = vpop.f32.mrb[0].mxu0
      %v986 = vadd.f32 %v914, %v985
      %v987 = vpop.f32.mrb[0].mxu0
      %v988 = vpop.f32.mrb[0].mxu0
      %v989 = vadd.f32 %v917, %v988
      %v990 = vpop.f32.mrb[0].mxu0
      %991 = vmatprep.mubr.bf16.mxu0 %v507
      %992 = vmatmul.mubr.bf16.gmra.mrb[0].mxu0 %v506
      %v993 = vpop.f32.mrb[0].mxu0
      %v994 = vadd.f32 %v922, %v993
      %v995 = vpop.f32.mrb[0].mxu0
      %v996 = vpop.f32.mrb[0].mxu0
      %v997 = vadd.f32 %v925, %v996
      %v998 = vpop.f32.mrb[0].mxu0
      %999 = vmatprep.mubr.bf16.mxu0 %v514
      %1000 = vmatmul.mubr.bf16.gmra.mrb[0].mxu0 %v513
      %v1001 = vpop.f32.mrb[0].mxu0
      %v1002 = vadd.f32 %v930, %v1001
      %v1003 = vpop.f32.mrb[0].mxu0
      %v1004 = vpop.f32.mrb[0].mxu0
      %v1005 = vadd.f32 %v933, %v1004
      %v1006 = vpop.f32.mrb[0].mxu0
      %1007 = vmatprep.mubr.bf16.mxu0 %v521
      %1008 = vmatmul.mubr.bf16.gmra.mrb[0].mxu0 %v520
      %v1009 = vpop.f32.mrb[0].mxu0
      %v1010 = vadd.f32 %v938, %v1009
      %v1011 = vpop.f32.mrb[0].mxu0
      %v1012 = vpop.f32.mrb[0].mxu0
      %v1013 = vpop.f32.mrb[0].mxu0
      %1014 = vdwg.mxu0
      %1015 = vmatprep.subr.bf16.mxu0 0
      %1016 = vmatpush1.bf16.msra.mxu0 %v787
      %1017 = vmatprep.subr.bf16.mxu0 0
      %1018 = vmatpush1.bf16.msra.mxu0 %v788
      %1019 = vmatprep.subr.bf16.mxu0 0
      %1020 = vmatpush1.bf16.msra.mxu0 %v789
      %1021 = vmatprep.subr.bf16.mxu0 0
      %1022 = vmatpush1.bf16.msra.mxu0 %v790
      %1023 = vmatprep.subr.bf16.mxu0 0
      %1024 = vmatpush1.bf16.msra.mxu0 %v791
      %1025 = vmatprep.subr.bf16.mxu0 0
      %1026 = vmatpush1.bf16.msra.mxu0 %v792
      %1027 = vmatprep.subr.bf16.mxu0 0
      %1028 = vmatpush1.bf16.msra.mxu0 %v793
      %1029 = vmatprep.subr.bf16.mxu0 0
      %1030 = vmatpush1.bf16.msra.mxu0 %v794
      %1031 = vmatprep.subr.bf16.mxu0 0
      %1032 = vmatpush1.bf16.msra.mxu0 %v795
      %1033 = vmatprep.subr.bf16.mxu0 0
      %1034 = vmatpush1.bf16.msra.mxu0 %v796
      %1035 = vmatprep.subr.bf16.mxu0 0
      %1036 = vmatpush1.bf16.msra.mxu0 %v797
      %1037 = vmatprep.subr.bf16.mxu0 0
      %1038 = vmatpush1.bf16.msra.mxu0 %v798
      %1039 = vmatprep.subr.bf16.mxu0 0
      %1040 = vmatpush1.bf16.msra.mxu0 %v799
      %1041 = vmatprep.subr.bf16.mxu0 0
      %1042 = vmatpush1.bf16.msra.mxu0 %v800
      %1043 = vmatprep.subr.bf16.mxu0 0
      %1044 = vmatpush1.bf16.msra.mxu0 %v801
      %1045 = vmatprep.subr.bf16.mxu0 0
      %1046 = vmatpush1.bf16.msra.mxu0 %v802
      %1047 = vmatprep.mubr.bf16.mxu0 %v495
      %1048 = vmatmul.mubr.bf16.gmra.mrb[0].mxu0 %v494
      %v1049 = vpop.f32.mrb[0].mxu0
      %v1050 = vadd.f32 %v978, %v1049
      %v1051 = vpop.f32.mrb[0].mxu0
      %v1052 = vpop.f32.mrb[0].mxu0
      %v1053 = vadd.f32 %v981, %v1052
      %v1054 = vpop.f32.mrb[0].mxu0
      %1055 = vmatprep.mubr.bf16.mxu0 %v502
      %1056 = vmatmul.mubr.bf16.gmra.mrb[0].mxu0 %v501
      %v1057 = vpop.f32.mrb[0].mxu0
      %v1058 = vadd.f32 %v986, %v1057
      %v1059 = vpop.f32.mrb[0].mxu0
      %v1060 = vpop.f32.mrb[0].mxu0
      %v1061 = vadd.f32 %v989, %v1060
      %v1062 = vpop.f32.mrb[0].mxu0
      %1063 = vmatprep.mubr.bf16.mxu0 %v509
      %1064 = vmatmul.mubr.bf16.gmra.mrb[0].mxu0 %v508
      %v1065 = vpop.f32.mrb[0].mxu0
      %v1066 = vadd.f32 %v994, %v1065
      %v1067 = vpop.f32.mrb[0].mxu0
      %v1068 = vpop.f32.mrb[0].mxu0
      %v1069 = vadd.f32 %v997, %v1068
      %v1070 = vpop.f32.mrb[0].mxu0
      %1071 = vmatprep.mubr.bf16.mxu0 %v516
      %1072 = vmatmul.mubr.bf16.gmra.mrb[0].mxu0 %v515
      %v1073 = vpop.f32.mrb[0].mxu0
      %v1074 = vadd.f32 %v1002, %v1073
      %v1075 = vpop.f32.mrb[0].mxu0
      %v1076 = vpop.f32.mrb[0].mxu0
      %v1077 = vadd.f32 %v1005, %v1076
      %v1078 = vpop.f32.mrb[0].mxu0
      %1079 = vmatprep.mubr.bf16.mxu0 %v523
      %1080 = vmatmul.mubr.bf16.gmra.mrb[0].mxu0 %v522
      %v1081 = vpop.f32.mrb[0].mxu0
      %v1082 = vadd.f32 %v1010, %v1081
      %v1083 = vpop.f32.mrb[0].mxu0
      %v1084 = vpop.f32.mrb[0].mxu0
      %v1085 = vpop.f32.mrb[0].mxu0
      %1086 = vdwg.mxu0
      %1087 = vmatprep.subr.bf16.mxu0 0
      %1088 = vmatpush1.bf16.msra.mxu0 %v803
      %1089 = vmatprep.subr.bf16.mxu0 0
      %1090 = vmatpush1.bf16.msra.mxu0 %v804
      %1091 = vmatprep.subr.bf16.mxu0 0
      %1092 = vmatpush1.bf16.msra.mxu0 0
      %1093 = vmatprep.subr.bf16.mxu0 0
      %1094 = vmatpush1.bf16.msra.mxu0 0
      %1095 = vmatprep.subr.bf16.mxu0 0
      %1096 = vmatpush1.bf16.msra.mxu0 0
      %1097 = vmatprep.subr.bf16.mxu0 0
      %1098 = vmatpush1.bf16.msra.mxu0 0
      %1099 = vmatprep.subr.bf16.mxu0 0
      %1100 = vmatpush1.bf16.msra.mxu0 0
      %1101 = vmatprep.subr.bf16.mxu0 0
      %1102 = vmatpush1.bf16.msra.mxu0 0
      %1103 = vmatprep.subr.bf16.mxu0 0
      %1104 = vmatpush1.bf16.msra.mxu0 0
      %1105 = vmatprep.subr.bf16.mxu0 0
      %1106 = vmatpush1.bf16.msra.mxu0 0
      %1107 = vmatprep.subr.bf16.mxu0 0
      %1108 = vmatpush1.bf16.msra.mxu0 0
      %1109 = vmatprep.subr.bf16.mxu0 0
      %1110 = vmatpush1.bf16.msra.mxu0 0
      %1111 = vmatprep.subr.bf16.mxu0 0
      %1112 = vmatpush1.bf16.msra.mxu0 0
      %1113 = vmatprep.subr.bf16.mxu0 0
      %1114 = vmatpush1.bf16.msra.mxu0 0
      %1115 = vmatprep.subr.bf16.mxu0 0
      %1116 = vmatpush1.bf16.msra.mxu0 0
      %1117 = vmatprep.subr.bf16.mxu0 0
      %1118 = vmatpush1.bf16.msra.mxu0 0
      %1119 = vmatprep.mubr.bf16.mxu0 0
      %1120 = vmatmul.mubr.bf16.gmra.mrb[0].mxu0 %v857
      %v1121 = vpop.f32.mrb[0].mxu0
      %v1122 = vadd.f32 %v1050, %v1121
      %v1123 = vpop.f32.mrb[0].mxu0
      %v1124 = vpop.f32.mrb[0].mxu0
      %v1125 = vadd.f32 %v1053, %v1124
      %v1126 = vpop.f32.mrb[0].mxu0
      %1127 = vmatprep.mubr.bf16.mxu0 0
      %1128 = vmatmul.mubr.bf16.gmra.mrb[0].mxu0 %v860
      %v1129 = vpop.f32.mrb[0].mxu0
      %v1130 = vadd.f32 %v1058, %v1129
      %v1131 = vpop.f32.mrb[0].mxu0
      %v1132 = vpop.f32.mrb[0].mxu0
      %v1133 = vadd.f32 %v1061, %v1132
      %v1134 = vpop.f32.mrb[0].mxu0
      %1135 = vmatprep.mubr.bf16.mxu0 0
      %1136 = vmatmul.mubr.bf16.gmra.mrb[0].mxu0 %v863
      %v1137 = vpop.f32.mrb[0].mxu0
      %v1138 = vadd.f32 %v1066, %v1137
      %v1139 = vpop.f32.mrb[0].mxu0
      %v1140 = vpop.f32.mrb[0].mxu0
      %v1141 = vadd.f32 %v1069, %v1140
      %v1142 = vpop.f32.mrb[0].mxu0
      %1143 = vmatprep.mubr.bf16.mxu0 0
      %1144 = vmatmul.mubr.bf16.gmra.mrb[0].mxu0 %v866
      %v1145 = vpop.f32.mrb[0].mxu0
      %v1146 = vadd.f32 %v1074, %v1145
      %v1147 = vpop.f32.mrb[0].mxu0
      %v1148 = vpop.f32.mrb[0].mxu0
      %v1149 = vadd.f32 %v1077, %v1148
      %v1150 = vpop.f32.mrb[0].mxu0
      %1151 = vmatprep.mubr.bf16.mxu0 0
      %1152 = vmatmul.mubr.bf16.gmra.mrb[0].mxu0 %v869
      %v1153 = vpop.f32.mrb[0].mxu0
      %v1154 = vadd.f32 %v1082, %v1153
      %v1155 = vpop.f32.mrb[0].mxu0
      %v1156 = vpop.f32.mrb[0].mxu0
      %v1157 = vpop.f32.mrb[0].mxu0
      %1158 = vdwg.mxu0
      %v1159 = vmax.f32 %v1122, 0.0
      %v1160 = vmax.f32 %v1125, 0.0
      %v1161 = vmax.f32 %v1130, 0.0
      %v1162 = vmax.f32 %v1133, 0.0
      %v1163 = vmax.f32 %v1138, 0.0
      %v1164 = vmax.f32 %v1141, 0.0
      %v1165 = vmax.f32 %v1146, 0.0
      %v1166 = vmax.f32 %v1149, 0.0
      %v1167 = vmax.f32 %v1154, 0.0
      %vm1168 = vcmask 523264
      %1169 = vst.msk [vmem:[%s245] sm:$0xff] %vm1168, %v1159
      %1170 = vst.msk [vmem:[%s245 + $0x8] sm:$0xff] %vm1168, %v1160
      %1171 = vst.msk [vmem:[%s245 + $0x10] sm:$0xff] %vm1168, %v1161
      %1172 = vst.msk [vmem:[%s245 + $0x18] sm:$0xff] %vm1168, %v1162
      %1173 = vst.msk [vmem:[%s245 + $0x20] sm:$0xff] %vm1168, %v1163
      %1174 = vst.msk [vmem:[%s245 + $0x28] sm:$0xff] %vm1168, %v1164
      %1175 = vst.msk [vmem:[%s245 + $0x30] sm:$0xff] %vm1168, %v1165
      %1176 = vst.msk [vmem:[%s245 + $0x38] sm:$0xff] %vm1168, %v1166
      %1177 = vst.msk [vmem:[%s245 + $0x40] sm:$0xff] %vm1168, %v1167
      %s1178 = smul.u32 9, %s19
      %p1179 = scmp.lt.s32.totalorder %s18, 3
      %s1180 = scalar_select %p1179, %s18, 3
      %p1181 = scmp.lt.s32.totalorder %s1178, 8
      %s1182 = scalar_select %p1181, %s1178, 8
      %s1183 = smul.addr %s1180, 9
      %s1184 = sadd.s32 %s1182, %s1183
      %s1185 = smul.addr %s1184, 8
      %s1186 = scalar_lea.vmem %s3, %s1185
      // Predicated region
      $region33: #{itracker_forward.8} parent=31 // pred_check
        %p1187 = pneg %p126
      $region34: #{itracker_forward.8} parent=31 // pred_check_branch
        %1189 = sbr.rel (%p1187) target = $region36
      $region35: #{itracker_forward.8} parent=31 // pred_region
        %s1190 = smul.u32 9, %s19
      $region36: #{itracker_forward.8} parent=31 // pred_fallthru
        _
    $region32: #{itracker_forward.8} parent=5 // pred_fallthru
      _
    %p1191 = scmp.le.s32.totalorder 2, %s9
    // Predicated region
    $region37: #{itracker_forward.8} parent=5 // pred_check
      %p1192 = pneg %p1191
    $region38: #{itracker_forward.8} parent=5 // pred_check_branch
      %1194 = sbr.rel (%p1192) target = $region40
    $region39: #{itracker_forward.8} parent=5 // pred_region
      %s1195 = ssub.s32 %s9, 2
      // Predicated region
      $region41: #{itracker_forward.8} parent=39 // pred_check
        %p1196 = pneg %p132
      $region42: #{itracker_forward.8} parent=39 // pred_check_branch
        %1198 = sbr.rel (%p1196) target = $region44
      $region43: #{itracker_forward.8} parent=39 // pred_region
        %s1199 = smul.u32 9, %s21
        %p1200 = scmp.lt.s32.totalorder %s20, 3
        %s1201 = scalar_select %p1200, %s20, 3
        %p1202 = scmp.lt.s32.totalorder %s1199, 8
        %s1203 = scalar_select %p1202, %s1199, 8
        %s1204 = smul.addr %s1201, 9
        %s1205 = sadd.s32 %s1203, %s1204
        %s1206 = smul.addr %s1205, 8
        %s1207 = scalar_lea.vmem %s3, %s1206
      $region44: #{itracker_forward.8} parent=39 // pred_fallthru
        _
    $region40: #{itracker_forward.8} parent=5 // pred_fallthru
      _
  $region6: #{itracker_forward.8} parent=0 // loop_footer
    %s13 = sadd.s32 1, %s9
  $region7: #{itracker_forward.8} parent=0 // loop_footer_branch
    %8 = sbr.rel target = $region3
  $region8: #{itracker_forward.8} parent=0 // loop_exit
    _

// kernel: itracker_forward.9
$region0: #{itracker_forward.9}
  #allocation0 [shape = 'u32[]', space=smem, size = 0x4, offset = 0x4, fixed_abs, tag = 'smem constant byte address 0x4 - core index']
  #allocation1 [shape = 'u32[144,128]{1,0:T(1,128)}', space=vmem, size = 0x12000, scoped, tag = 'internal scratch']
  %s0 = inlined_call_operand.vmem [shape: f32[4,8,64], index: 0, kind: input, shape index: {}]
  %s1 = inlined_call_operand.vmem [shape: f32[64,64], index: 1, kind: input, shape index: {}]
  %s2 = inlined_call_operand.vmem [shape: f32[4,8,64], index: 2, kind: output, shape index: {}]
  %s3 = sld [smem:[#allocation0]]
  $region41: #{itracker_forward.9} parent=0
    _
  %s5 = ssub.s32 1, %s3
  %s6 = scalar_select 0, %s5, %s3
  loop: start=0, step=1, limit=6
  $region2: #{itracker_forward.9} parent=0 // loop_pre_header
    _
  $region3: #{itracker_forward.9} parent=0 // loop_header
    %s8 = sphi 0, %s12
    %p9 = scmp.ge.s32.totalorder %s8, 6
    %s15 = sphi 0, %s27
    %s16 = sphi 0, %s23
    %s17 = sphi 0, %s15
    %s18 = sphi 0, %s16
    %s19 = sphi 0, %s17
    %s20 = sphi 0, %s18
    %s32 = sphi 0, %s34
    %s35 = sphi 0, %s32
    %s36 = sphi 0, %s35
    %s52 = sphi 0, %s36
    %s56 = sphi 0, %s56
    %s58 = sphi 0, %s56
    %s59 = sphi 0, %s58
    %s73 = sphi 0, %s59
    %s81 = sphi 0, %s83
    %s84 = sphi 0, %s81
    %s85 = sphi 0, %s84
    %s101 = sphi 0, %s85
  $region4: #{itracker_forward.9} parent=0 // loop_header_branch
    %11 = sbr.rel (%p9) target = $region8
  $region5: #{itracker_forward.9} parent=0 // loop_body
    %s13 = ssub.s32 %s8, 1
    %s14 = ssub.s32 %s8, 2
    %s21 = sadd.s32 1, %s16
    %p22 = scmp.ge.s32.totalorder %s21, 1
    %s23 = scalar_select %p22, 0, %s21
    %s24 = sadd.s32 1, %s15
    %s25 = scalar_select %p22, %s24, %s15
    %p26 = scmp.ge.s32.totalorder %s25, 4
    %s27 = scalar_select %p26, 0, %s25
    %s28 = ssub.s32 %s15, %s27
    %s29 = ssub.s32 %s16, %s23
    %s30 = sor.u32 %s28, %s29
    %p31 = scmp.eq.s32.totalorder %s30, 0
    %s33 = sadd.s32 %s32, 1
    %s34 = scalar_select %p31, %s32, %s33
    %p37 = pneg %p31
    %p38 = scmp.eq.s32.totalorder %s8, 3
    %p39 = por %p37, %p38
    %p40 = scmp.ne.s32.totalorder %s32, %s35
    %p41 = scmp.eq.s32.totalorder %s8, 0
    %p42 = por %p40, %p41
    %p43 = scmp.ne.s32.totalorder %s32, %s35
    %p44 = scmp.eq.s32.totalorder %s13, 3
    %p45 = por %p43, %p44
    %p46 = scmp.ne.s32.totalorder %s35, %s36
    %p47 = scmp.eq.s32.totalorder %s13, 0
    %p48 = por %p46, %p47
    %p49 = scmp.ne.s32.totalorder %s35, %s36
    %p50 = scmp.eq.s32.totalorder %s14, 3
    %p51 = por %p49, %p50
    %p53 = scmp.ne.s32.totalorder %s36, %s52
    %p54 = scmp.eq.s32.totalorder %s14, 0
    %p55 = por %p53, %p54
    %s57 = sadd.s32 %s56, 1
    %p60 = scmp.eq.s32.totalorder %s8, 3
    %p61 = scmp.ne.s32.totalorder %s56, %s58
    %p62 = scmp.eq.s32.totalorder %s8, 0
    %p63 = por %p61, %p62
    %p64 = scmp.ne.s32.totalorder %s56, %s58
    %p65 = scmp.eq.s32.totalorder %s13, 3
    %p66 = por %p64, %p65
    %p67 = scmp.ne.s32.totalorder %s58, %s59
    %p68 = scmp.eq.s32.totalorder %s13, 0
    %p69 = por %p67, %p68
    %p70 = scmp.ne.s32.totalorder %s58, %s59
    %p71 = scmp.eq.s32.totalorder %s14, 3
    %p72 = por %p70, %p71
    %p74 = scmp.ne.s32.totalorder %s59, %s73
    %p75 = scmp.eq.s32.totalorder %s14, 0
    %p76 = por %p74, %p75
    %s77 = ssub.s32 %s15, %s27
    %s78 = ssub.s32 %s16, %s23
    %s79 = sor.u32 %s77, %s78
    %p80 = scmp.eq.s32.totalorder %s79, 0
    %s82 = sadd.s32 %s81, 1
    %s83 = scalar_select %p80, %s81, %s82
    %p86 = pneg %p80
    %p87 = scmp.eq.s32.totalorder %s8, 3
    %p88 = por %p86, %p87
    %p89 = scmp.ne.s32.totalorder %s81, %s84
    %p90 = scmp.eq.s32.totalorder %s8, 0
    %p91 = por %p89, %p90
    %p92 = scmp.ne.s32.totalorder %s81, %s84
    %p93 = scmp.eq.s32.totalorder %s13, 3
    %p94 = por %p92, %p93
    %p95 = scmp.ne.s32.totalorder %s84, %s85
    %p96 = scmp.eq.s32.totalorder %s13, 0
    %p97 = por %p95, %p96
    %p98 = scmp.ne.s32.totalorder %s84, %s85
    %p99 = scmp.eq.s32.totalorder %s14, 3
    %p100 = por %p98, %p99
    %p102 = scmp.ne.s32.totalorder %s85, %s101
    %p103 = scmp.eq.s32.totalorder %s14, 0
    %p104 = por %p102, %p103
    %p105 = scmp.le.s32.totalorder 1, %s8
    %p106 = scmp.lt.s32.totalorder %s8, 5
    %p107 = pnand %p105, %p106
    %p108 = pneg %p107
    // Predicated region
    $region9: #{itracker_forward.9} parent=5 // pred_check
      _
    $region10: #{itracker_forward.9} parent=5 // pred_check_branch
      %110 = sbr.rel (%p107) target = $region12
    $region11: #{itracker_forward.9} parent=5 // pred_region
      %s111 = ssub.s32 %s8, 1
      // Predicated region
      $region13: #{itracker_forward.9} parent=11 // pred_check
        %p112 = pneg %p69
      $region14: #{itracker_forward.9} parent=11 // pred_check_branch
        %114 = sbr.rel (%p112) target = $region16
      $region15: #{itracker_forward.9} parent=11 // pred_region
        _
      $region16: #{itracker_forward.9} parent=11 // pred_fallthru
        _
    $region12: #{itracker_forward.9} parent=5 // pred_fallthru
      _
    %p115 = scmp.lt.s32.totalorder %s8, 4
    // Predicated region
    $region17: #{itracker_forward.9} parent=5 // pred_check
      %p116 = pneg %p115
    $region18: #{itracker_forward.9} parent=5 // pred_check_branch
      %118 = sbr.rel (%p116) target = $region20
    $region19: #{itracker_forward.9} parent=5 // pred_region
      // Predicated region
      $region21: #{itracker_forward.9} parent=19 // pred_check
        %p119 = pneg %p42
      $region22: #{itracker_forward.9} parent=19 // pred_check_branch
        %121 = sbr.rel (%p119) target = $region24
      $region23: #{itracker_forward.9} parent=19 // pred_region
        %p122 = scmp.lt.s32.totalorder %s15, 3
        %s123 = scalar_select %p122, %s15, 3
        %p124 = scmp.lt.s32.totalorder %s16, 0
        %s125 = scalar_select %p124, %s16, 0
        %s126 = sadd.s32 %s125, %s123
        %s127 = smul.addr %s126, 8
        %s128 = scalar_lea.vmem %s0, %s127
      $region24: #{itracker_forward.9} parent=19 // pred_fallthru
        _
    $region20: #{itracker_forward.9} parent=5 // pred_fallthru
      _
    %p129 = scmp.le.s32.totalorder 1, %s8
    %p130 = scmp.lt.s32.totalorder %s8, 5
    %p131 = pnand %p129, %p130
    %p132 = pneg %p131
    // Predicated region
    $region25: #{itracker_forward.9} parent=5 // pred_check
      _
    $region26: #{itracker_forward.9} parent=5 // pred_check_branch
      %134 = sbr.rel (%p131) target = $region28
    $region27: #{itracker_forward.9} parent=5 // pred_region
      %s135 = ssub.s32 %s8, 1
      %p136 = scmp.lt.s32.totalorder %s17, 3
      %s137 = scalar_select %p136, %s17, 3
      %p138 = scmp.lt.s32.totalorder %s18, 0
      %s139 = scalar_select %p138, %s18, 0
      %s140 = sadd.s32 %s139, %s137
      %s141 = smul.addr %s140, 8
      %s142 = scalar_lea.vmem %s0, %s141
      %p143 = pneg %p48
      %p144 = pneg %p45
      %p145 = pneg %p69
      %p146 = pneg %p66
      %p147 = pneg %p97
      %p148 = pneg %p94
      %p149 = scmp.lt.s32.totalorder %s17, 3
      %s150 = scalar_select %p149, %s17, 3
      %p151 = scmp.lt.s32.totalorder %s18, 0
      %s152 = scalar_select %p151, %s18, 0
      %s153 = sadd.s32 %s152, %s150
      %s154 = smul.addr %s153, 8
      %s155 = scalar_lea.vmem %s2, %s154
      %p156 = scmp.lt.s32.totalorder %s17, 3
      %s157 = scalar_select %p156, %s17, 3
      %p158 = scmp.lt.s32.totalorder %s18, 0
      %s159 = scalar_select %p158, %s18, 0
      %s160 = sadd.s32 %s159, %s157
      %s161 = smul.addr %s160, 8
      %s162 = scalar_lea.vmem %s0, %s161
      %p163 = scmp.lt.s32.totalorder %s17, 3
      %s164 = scalar_select %p163, %s17, 3
      %p165 = scmp.lt.s32.totalorder %s18, 0
      %s166 = scalar_select %p165, %s18, 0
      %s167 = sadd.s32 %s166, %s164
      %s168 = smul.addr %s167, 8
      %s169 = scalar_lea.vmem %s2, %s168
      %v170 = vld [vmem:[%s162] sm:$0xff]
      %v171 = vmul.f32 %v170, %v170
      %v172 = vld [vmem:[%s1] sm:$0xff]
      %v173 = vld [vmem:[%s1 + $0x8] sm:$0xff]
      %v174 = vld [vmem:[%s1 + $0x10] sm:$0xff]
      %v175 = vld [vmem:[%s1 + $0x18] sm:$0xff]
      %v176 = vld [vmem:[%s1 + $0x20] sm:$0xff]
      %v177 = vld [vmem:[%s1 + $0x28] sm:$0xff]
      %v178 = vld [vmem:[%s1 + $0x30] sm:$0xff]
      %v179 = vld [vmem:[%s1 + $0x38] sm:$0xff]
      %vm180 = vcmask 523264
      %v182 = vsel %vm180, %v171, 0
      %184 = vmatprep.subr.mxu0 0.0
      %185 = vmatpush1.msra.mxu0 %v172
      %186 = vmatprep.subr.mxu0 0.0
      %187 = vmatpush1.msra.mxu0 %v173
      %188 = vmatprep.subr.mxu0 0.0
      %189 = vmatpush1.msra.mxu0 %v174
      %190 = vmatprep.subr.mxu0 0.0
      %191 = vmatpush1.msra.mxu0 %v175
      %192 = vmatprep.subr.mxu0 0.0
      %193 = vmatpush1.msra.mxu0 %v176
      %194 = vmatprep.subr.mxu0 0.0
      %195 = vmatpush1.msra.mxu0 %v177
      %196 = vmatprep.subr.mxu0 0.0
      %197 = vmatpush1.msra.mxu0 %v178
      %198 = vmatprep.subr.mxu0 0.0
      %199 = vmatpush1.msra.mxu0 %v179
      %200 = vmatprep.subr.mxu0 0.0
      %201 = vmatpush1.msra.mxu0 0.0
      %202 = vmatprep.subr.mxu0 0.0
      %203 = vmatpush1.msra.mxu0 0.0
      %204 = vmatprep.subr.mxu0 0.0
      %205 = vmatpush1.msra.mxu0 0.0
      %206 = vmatprep.subr.mxu0 0.0
      %207 = vmatpush1.msra.mxu0 0.0
      %208 = vmatprep.subr.mxu0 0.0
      %209 = vmatpush1.msra.mxu0 0.0
      %210 = vmatprep.subr.mxu0 0.0
      %211 = vmatpush1.msra.mxu0 0.0
      %212 = vmatprep.subr.mxu0 0.0
      %213 = vmatpush1.msra.mxu0 0.0
      %214 = vmatprep.subr.mxu0 0.0
      %215 = vmatpush1.msra.mxu0 0.0
      %216 = vmatprep.subr.mxu0 0.0
      %217 = vmatpush1.msra.mxu0 0.0
      %218 = vmatprep.subr.mxu0 0.0
      %219 = vmatpush1.msra.mxu0 0.0
      %220 = vmatprep.subr.mxu0 0.0
      %221 = vmatpush1.msra.mxu0 0.0
      %222 = vmatprep.subr.mxu0 0.0
      %223 = vmatpush1.msra.mxu0 0.0
      %224 = vmatprep.subr.mxu0 0.0
      %225 = vmatpush1.msra.mxu0 0.0
      %226 = vmatprep.subr.mxu0 0.0
      %227 = vmatpush1.msra.mxu0 0.0
      %228 = vmatprep.subr.mxu0 0.0
      %229 = vmatpush1.msra.mxu0 0.0
      %230 = vmatprep.subr.mxu0 0.0
      %231 = vmatpush1.msra.mxu0 0.0
      %232 = vmatprep.subr.mxu0 0.0
      %233 = vmatpush1.msra.mxu0 0.0
      %234 = vmatprep.subr.mxu0 0.0
      %235 = vmatpush1.msra.mxu0 0.0
      %236 = vmatprep.subr.mxu0 0.0
      %237 = vmatpush1.msra.mxu0 0.0
      %238 = vmatprep.subr.mxu0 0.0
      %239 = vmatpush1.msra.mxu0 0.0
      %240 = vmatprep.subr.mxu0 0.0
      %241 = vmatpush1.msra.mxu0 0.0
      %242 = vmatprep.subr.mxu0 0.0
      %243 = vmatpush1.msra.mxu0 0.0
      %244 = vmatprep.subr.mxu0 0.0
      %245 = vmatpush1.msra.mxu0 0.0
      %246 = vmatprep.subr.mxu0 0.0
      %247 = vmatpush1.msra.mxu0 0.0
      %248 = vmatprep.mubr.f32.mxu0 0.0
      %249 = vmatmul.mubr.f32.gmra.mrb[0].mxu0 %v182
      %v250 = vpop.f32.mrb[0].mxu0
      %v251 = vadd.f32 0.0, %v250
      %v252 = vpop.f32.mrb[0].mxu0
      %253 = vdwg.mxu0
      %v254 = vmul.f32 %v251, 2e-05
      %v255 = vadd.f32 %v254, 1.0
      %v256 = vlog2.pop %v255
      %v257 = vmul.f32 %v256, 0.6931472
      %v258 = vmul.f32 %v257, -0.75
      %v259 = vmul.f32 %v258, 1.442695
      %v260 = vpow.pop %v259
      %v261 = vmul.f32 %v170, %v260
      %262 = vst.msk [vmem:[%s169] sm:$0xff] %vm180, %v261
      %p263 = scmp.lt.s32.totalorder %s17, 3
      %s264 = scalar_select %p263, %s17, 3
      %p265 = scmp.lt.s32.totalorder %s18, 0
      %s266 = scalar_select %p265, %s18, 0
      %s267 = sadd.s32 %s266, %s264
      %s268 = smul.addr %s267, 8
      %s269 = scalar_lea.vmem %s2, %s268
      // Predicated region
      $region29: #{itracker_forward.9} parent=27 // pred_check
        %p270 = pneg %p94
      $region30: #{itracker_forward.9} parent=27 // pred_check_branch
        %272 = sbr.rel (%p270) target = $region32
      $region31: #{itracker_forward.9} parent=27 // pred_region
        _
      $region32: #{itracker_forward.9} parent=27 // pred_fallthru
        _
    $region28: #{itracker_forward.9} parent=5 // pred_fallthru
      _
    %p273 = scmp.le.s32.totalorder 2, %s8
    // Predicated region
    $region33: #{itracker_forward.9} parent=5 // pred_check
      %p274 = pneg %p273
    $region34: #{itracker_forward.9} parent=5 // pred_check_branch
      %276 = sbr.rel (%p274) target = $region36
    $region35: #{itracker_forward.9} parent=5 // pred_region
      %s277 = ssub.s32 %s8, 2
      // Predicated region
      $region37: #{itracker_forward.9} parent=35 // pred_check
        %p278 = pneg %p100
      $region38: #{itracker_forward.9} parent=35 // pred_check_branch
        %280 = sbr.rel (%p278) target = $region40
      $region39: #{itracker_forward.9} parent=35 // pred_region
        %p281 = scmp.lt.s32.totalorder %s19, 3
        %s282 = scalar_select %p281, %s19, 3
        %p283 = scmp.lt.s32.totalorder %s20, 0
        %s284 = scalar_select %p283, %s20, 0
        %s285 = sadd.s32 %s284, %s282
        %s286 = smul.addr %s285, 8
        %s287 = scalar_lea.vmem %s2, %s286
      $region40: #{itracker_forward.9} parent=35 // pred_fallthru
        _
    $region36: #{itracker_forward.9} parent=5 // pred_fallthru
      _
  $region6: #{itracker_forward.9} parent=0 // loop_footer
    %s12 = sadd.s32 1, %s8
  $region7: #{itracker_forward.9} parent=0 // loop_footer_branch
    %7 = sbr.rel target = $region3
  $region8: #{itracker_forward.9} parent=0 // loop_exit
    _

// kernel: itracker_forward.10
$region0: #{itracker_forward.10}
  #allocation0 [shape = 'u32[]', space=smem, size = 0x4, offset = 0x4, fixed_abs, tag = 'smem constant byte address 0x4 - core index']
  #allocation1 [shape = 'u32[144,128]{1,0:T(1,128)}', space=vmem, size = 0x12000, scoped, tag = 'internal scratch']
  %s0 = inlined_call_operand.vmem [shape: bf16[4,8,576], index: 0, kind: input, shape index: {}]
  %s1 = inlined_call_operand.vmem [shape: bf16[4,576,32], index: 1, kind: input, shape index: {}]
  %s2 = inlined_call_operand.vmem [shape: f32[4,1,32], index: 2, kind: input, shape index: {}]
  %s3 = inlined_call_operand.vmem [shape: bf16[4,32,16], index: 3, kind: input, shape index: {}]
  %s4 = inlined_call_operand.vmem [shape: f32[4,1,16], index: 4, kind: input, shape index: {}]
  %s5 = inlined_call_operand.vmem [shape: f32[4,8,16], index: 5, kind: output, shape index: {}]
  %s6 = sld [smem:[#allocation0]]
  $region53: #{itracker_forward.10} parent=0
    _
  %s8 = ssub.s32 1, %s6
  %s9 = scalar_select 0, %s8, %s6
  loop: start=0, step=1, limit=6
  $region2: #{itracker_forward.10} parent=0 // loop_pre_header
    _
  $region3: #{itracker_forward.10} parent=0 // loop_header
    %s11 = sphi 0, %s15
    %p12 = scmp.ge.s32.totalorder %s11, 6
    %s18 = sphi 0, %s30
    %s19 = sphi 0, %s26
    %s20 = sphi 0, %s18
    %s21 = sphi 0, %s19
    %s22 = sphi 0, %s20
    %s23 = sphi 0, %s21
    %s35 = sphi 0, %s37
    %s38 = sphi 0, %s35
    %s39 = sphi 0, %s38
    %s55 = sphi 0, %s39
    %s61 = sphi 0, %s63
    %s64 = sphi 0, %s61
    %s65 = sphi 0, %s64
    %s81 = sphi 0, %s65
    %s87 = sphi 0, %s89
    %s90 = sphi 0, %s87
    %s91 = sphi 0, %s90
    %s107 = sphi 0, %s91
    %s113 = sphi 0, %s115
    %s116 = sphi 0, %s113
    %s117 = sphi 0, %s116
    %s133 = sphi 0, %s117
    %s139 = sphi 0, %s141
    %s142 = sphi 0, %s139
    %s143 = sphi 0, %s142
    %s159 = sphi 0, %s143
    %s167 = sphi 0, %s169
    %s170 = sphi 0, %s167
    %s171 = sphi 0, %s170
    %s187 = sphi 0, %s171
  $region4: #{itracker_forward.10} parent=0 // loop_header_branch
    %14 = sbr.rel (%p12) target = $region8
  $region5: #{itracker_forward.10} parent=0 // loop_body
    %s16 = ssub.s32 %s11, 1
    %s17 = ssub.s32 %s11, 2
    %s24 = sadd.s32 1, %s19
    %p25 = scmp.ge.s32.totalorder %s24, 1
    %s26 = scalar_select %p25, 0, %s24
    %s27 = sadd.s32 1, %s18
    %s28 = scalar_select %p25, %s27, %s18
    %p29 = scmp.ge.s32.totalorder %s28, 4
    %s30 = scalar_select %p29, 0, %s28
    %s31 = ssub.s32 %s18, %s30
    %s32 = ssub.s32 %s19, %s26
    %s33 = sor.u32 %s31, %s32
    %p34 = scmp.eq.s32.totalorder %s33, 0
    %s36 = sadd.s32 %s35, 1
    %s37 = scalar_select %p34, %s35, %s36
    %p40 = pneg %p34
    %p41 = scmp.eq.s32.totalorder %s11, 3
    %p42 = por %p40, %p41
    %p43 = scmp.ne.s32.totalorder %s35, %s38
    %p44 = scmp.eq.s32.totalorder %s11, 0
    %p45 = por %p43, %p44
    %p46 = scmp.ne.s32.totalorder %s35, %s38
    %p47 = scmp.eq.s32.totalorder %s16, 3
    %p48 = por %p46, %p47
    %p49 = scmp.ne.s32.totalorder %s38, %s39
    %p50 = scmp.eq.s32.totalorder %s16, 0
    %p51 = por %p49, %p50
    %p52 = scmp.ne.s32.totalorder %s38, %s39
    %p53 = scmp.eq.s32.totalorder %s17, 3
    %p54 = por %p52, %p53
    %p56 = scmp.ne.s32.totalorder %s39, %s55
    %p57 = scmp.eq.s32.totalorder %s17, 0
    %p58 = por %p56, %p57
    %s59 = ssub.s32 %s18, %s30
    %p60 = scmp.eq.s32.totalorder %s59, 0
    %s62 = sadd.s32 %s61, 1
    %s63 = scalar_select %p60, %s61, %s62
    %p66 = pneg %p60
    %p67 = scmp.eq.s32.totalorder %s11, 3
    %p68 = por %p66, %p67
    %p69 = scmp.ne.s32.totalorder %s61, %s64
    %p70 = scmp.eq.s32.totalorder %s11, 0
    %p71 = por %p69, %p70
    %p72 = scmp.ne.s32.totalorder %s61, %s64
    %p73 = scmp.eq.s32.totalorder %s16, 3
    %p74 = por %p72, %p73
    %p75 = scmp.ne.s32.totalorder %s64, %s65
    %p76 = scmp.eq.s32.totalorder %s16, 0
    %p77 = por %p75, %p76
    %p78 = scmp.ne.s32.totalorder %s64, %s65
    %p79 = scmp.eq.s32.totalorder %s17, 3
    %p80 = por %p78, %p79
    %p82 = scmp.ne.s32.totalorder %s65, %s81
    %p83 = scmp.eq.s32.totalorder %s17, 0
    %p84 = por %p82, %p83
    %s85 = ssub.s32 %s18, %s30
    %p86 = scmp.eq.s32.totalorder %s85, 0
    %s88 = sadd.s32 %s87, 1
    %s89 = scalar_select %p86, %s87, %s88
    %p92 = pneg %p86
    %p93 = scmp.eq.s32.totalorder %s11, 3
    %p94 = por %p92, %p93
    %p95 = scmp.ne.s32.totalorder %s87, %s90
    %p96 = scmp.eq.s32.totalorder %s11, 0
    %p97 = por %p95, %p96
    %p98 = scmp.ne.s32.totalorder %s87, %s90
    %p99 = scmp.eq.s32.totalorder %s16, 3
    %p100 = por %p98, %p99
    %p101 = scmp.ne.s32.totalorder %s90, %s91
    %p102 = scmp.eq.s32.totalorder %s16, 0
    %p103 = por %p101, %p102
    %p104 = scmp.ne.s32.totalorder %s90, %s91
    %p105 = scmp.eq.s32.totalorder %s17, 3
    %p106 = por %p104, %p105
    %p108 = scmp.ne.s32.totalorder %s91, %s107
    %p109 = scmp.eq.s32.totalorder %s17, 0
    %p110 = por %p108, %p109
    %s111 = ssub.s32 %s18, %s30
    %p112 = scmp.eq.s32.totalorder %s111, 0
    %s114 = sadd.s32 %s113, 1
    %s115 = scalar_select %p112, %s113, %s114
    %p118 = pneg %p112
    %p119 = scmp.eq.s32.totalorder %s11, 3
    %p120 = por %p118, %p119
    %p121 = scmp.ne.s32.totalorder %s113, %s116
    %p122 = scmp.eq.s32.totalorder %s11, 0
    %p123 = por %p121, %p122
    %p124 = scmp.ne.s32.totalorder %s113, %s116
    %p125 = scmp.eq.s32.totalorder %s16, 3
    %p126 = por %p124, %p125
    %p127 = scmp.ne.s32.totalorder %s116, %s117
    %p128 = scmp.eq.s32.totalorder %s16, 0
    %p129 = por %p127, %p128
    %p130 = scmp.ne.s32.totalorder %s116, %s117
    %p131 = scmp.eq.s32.totalorder %s17, 3
    %p132 = por %p130, %p131
    %p134 = scmp.ne.s32.totalorder %s117, %s133
    %p135 = scmp.eq.s32.totalorder %s17, 0
    %p136 = por %p134, %p135
    %s137 = ssub.s32 %s18, %s30
    %p138 = scmp.eq.s32.totalorder %s137, 0
    %s140 = sadd.s32 %s139, 1
    %s141 = scalar_select %p138, %s139, %s140
    %p144 = pneg %p138
    %p145 = scmp.eq.s32.totalorder %s11, 3
    %p146 = por %p144, %p145
    %p147 = scmp.ne.s32.totalorder %s139, %s142
    %p148 = scmp.eq.s32.totalorder %s11, 0
    %p149 = por %p147, %p148
    %p150 = scmp.ne.s32.totalorder %s139, %s142
    %p151 = scmp.eq.s32.totalorder %s16, 3
    %p152 = por %p150, %p151
    %p153 = scmp.ne.s32.totalorder %s142, %s143
    %p154 = scmp.eq.s32.totalorder %s16, 0
    %p155 = por %p153, %p154
    %p156 = scmp.ne.s32.totalorder %s142, %s143
    %p157 = scmp.eq.s32.totalorder %s17, 3
    %p158 = por %p156, %p157
    %p160 = scmp.ne.s32.totalorder %s143, %s159
    %p161 = scmp.eq.s32.totalorder %s17, 0
    %p162 = por %p160, %p161
    %s163 = ssub.s32 %s18, %s30
    %s164 = ssub.s32 %s19, %s26
    %s165 = sor.u32 %s163, %s164
    %p166 = scmp.eq.s32.totalorder %s165, 0
    %s168 = sadd.s32 %s167, 1
    %s169 = scalar_select %p166, %s167, %s168
    %p172 = pneg %p166
    %p173 = scmp.eq.s32.totalorder %s11, 3
    %p174 = por %p172, %p173
    %p175 = scmp.ne.s32.totalorder %s167, %s170
    %p176 = scmp.eq.s32.totalorder %s11, 0
    %p177 = por %p175, %p176
    %p178 = scmp.ne.s32.totalorder %s167, %s170
    %p179 = scmp.eq.s32.totalorder %s16, 3
    %p180 = por %p178, %p179
    %p181 = scmp.ne.s32.totalorder %s170, %s171
    %p182 = scmp.eq.s32.totalorder %s16, 0
    %p183 = por %p181, %p182
    %p184 = scmp.ne.s32.totalorder %s170, %s171
    %p185 = scmp.eq.s32.totalorder %s17, 3
    %p186 = por %p184, %p185
    %p188 = scmp.ne.s32.totalorder %s171, %s187
    %p189 = scmp.eq.s32.totalorder %s17, 0
    %p190 = por %p188, %p189
    %p191 = scmp.le.s32.totalorder 1, %s11
    %p192 = scmp.lt.s32.totalorder %s11, 5
    %p193 = pnand %p191, %p192
    %p194 = pneg %p193
    // Predicated region
    $region9: #{itracker_forward.10} parent=5 // pred_check
      _
    $region10: #{itracker_forward.10} parent=5 // pred_check_branch
      %196 = sbr.rel (%p193) target = $region12
    $region11: #{itracker_forward.10} parent=5 // pred_region
      %s197 = ssub.s32 %s11, 1
    $region12: #{itracker_forward.10} parent=5 // pred_fallthru
      _
    %p198 = scmp.lt.s32.totalorder %s11, 4
    // Predicated region
    $region13: #{itracker_forward.10} parent=5 // pred_check
      %p199 = pneg %p198
    $region14: #{itracker_forward.10} parent=5 // pred_check_branch
      %201 = sbr.rel (%p199) target = $region16
    $region15: #{itracker_forward.10} parent=5 // pred_region
      // Predicated region
      $region17: #{itracker_forward.10} parent=15 // pred_check
        %p202 = pneg %p45
      $region18: #{itracker_forward.10} parent=15 // pred_check_branch
        %204 = sbr.rel (%p202) target = $region20
      $region19: #{itracker_forward.10} parent=15 // pred_region
        %p205 = scmp.lt.s32.totalorder %s18, 3
        %s206 = scalar_select %p205, %s18, 3
        %p207 = scmp.lt.s32.totalorder %s19, 0
        %s208 = scalar_select %p207, %s19, 0
        %s209 = smul.addr %s208, 5
        %s210 = smul.addr %s206, 5
        %s211 = sadd.s32 %s209, %s210
        %s212 = smul.addr %s211, 4
        %s213 = scalar_lea.vmem %s0, %s212
      $region20: #{itracker_forward.10} parent=15 // pred_fallthru
        _
      // Predicated region
      $region21: #{itracker_forward.10} parent=15 // pred_check
        %p214 = pneg %p71
      $region22: #{itracker_forward.10} parent=15 // pred_check_branch
        %216 = sbr.rel (%p214) target = $region24
      $region23: #{itracker_forward.10} parent=15 // pred_region
        %p217 = scmp.lt.s32.totalorder %s18, 3
        %s218 = scalar_select %p217, %s18, 3
        %s219 = smul.addr %s218, 72
        %s220 = smul.addr %s219, 4
        %s221 = scalar_lea.vmem %s1, %s220
      $region24: #{itracker_forward.10} parent=15 // pred_fallthru
        _
      // Predicated region
      $region25: #{itracker_forward.10} parent=15 // pred_check
        %p222 = pneg %p97
      $region26: #{itracker_forward.10} parent=15 // pred_check_branch
        %224 = sbr.rel (%p222) target = $region28
      $region27: #{itracker_forward.10} parent=15 // pred_region
        %p225 = scmp.lt.s32.totalorder %s18, 3
        %s226 = scalar_select %p225, %s18, 3
        %s227 = scalar_lea.vmem %s2, %s226
      $region28: #{itracker_forward.10} parent=15 // pred_fallthru
        _
      // Predicated region
      $region29: #{itracker_forward.10} parent=15 // pred_check
        %p228 = pneg %p123
      $region30: #{itracker_forward.10} parent=15 // pred_check_branch
        %230 = sbr.rel (%p228) target = $region32
      $region31: #{itracker_forward.10} parent=15 // pred_region
        %p231 = scmp.lt.s32.totalorder %s18, 3
        %s232 = scalar_select %p231, %s18, 3
        %s233 = smul.addr %s232, 4
        %s234 = smul.addr %s233, 4
        %s235 = scalar_lea.vmem %s3, %s234
      $region32: #{itracker_forward.10} parent=15 // pred_fallthru
        _
      // Predicated region
      $region33: #{itracker_forward.10} parent=15 // pred_check
        %p236 = pneg %p149
      $region34: #{itracker_forward.10} parent=15 // pred_check_branch
        %238 = sbr.rel (%p236) target = $region36
      $region35: #{itracker_forward.10} parent=15 // pred_region
        %p239 = scmp.lt.s32.totalorder %s18, 3
        %s240 = scalar_select %p239, %s18, 3
        %s241 = scalar_lea.vmem %s4, %s240
      $region36: #{itracker_forward.10} parent=15 // pred_fallthru
        _
    $region16: #{itracker_forward.10} parent=5 // pred_fallthru
      _
    %p242 = scmp.le.s32.totalorder 1, %s11
    %p243 = scmp.lt.s32.totalorder %s11, 5
    %p244 = pnand %p242, %p243
    %p245 = pneg %p244
    // Predicated region
    $region37: #{itracker_forward.10} parent=5 // pred_check
      _
    $region38: #{itracker_forward.10} parent=5 // pred_check_branch
      %247 = sbr.rel (%p244) target = $region40
    $region39: #{itracker_forward.10} parent=5 // pred_region
      %s248 = ssub.s32 %s11, 1
      %p249 = scmp.lt.s32.totalorder %s20, 3
      %s250 = scalar_select %p249, %s20, 3
      %p251 = scmp.lt.s32.totalorder %s21, 0
      %s252 = scalar_select %p251, %s21, 0
      %s253 = smul.addr %s252, 5
      %s254 = smul.addr %s250, 5
      %s255 = sadd.s32 %s253, %s254
      %s256 = smul.addr %s255, 4
      %s257 = scalar_lea.vmem %s0, %s256
      %p258 = pneg %p51
      %p259 = pneg %p48
      %p260 = scmp.lt.s32.totalorder %s20, 3
      %s261 = scalar_select %p260, %s20, 3
      %s262 = smul.addr %s261, 72
      %s263 = smul.addr %s262, 4
      %s264 = scalar_lea.vmem %s1, %s263
      %p265 = pneg %p77
      %p266 = pneg %p74
      %p267 = scmp.lt.s32.totalorder %s20, 3
      %s268 = scalar_select %p267, %s20, 3
      %s269 = scalar_lea.vmem %s2, %s268
      %p270 = pneg %p103
      %p271 = pneg %p100
      %p272 = scmp.lt.s32.totalorder %s20, 3
      %s273 = scalar_select %p272, %s20, 3
      %s274 = smul.addr %s273, 4
      %s275 = smul.addr %s274, 4
      %s276 = scalar_lea.vmem %s3, %s275
      %p277 = pneg %p129
      %p278 = pneg %p126
      %p279 = scmp.lt.s32.totalorder %s20, 3
      %s280 = scalar_select %p279, %s20, 3
      %s281 = scalar_lea.vmem %s4, %s280
      %p282 = pneg %p155
      %p283 = pneg %p152
      %p284 = pneg %p183
      %p285 = pneg %p180
      %p286 = scmp.lt.s32.totalorder %s20, 3
      %s287 = scalar_select %p286, %s20, 3
      %p288 = scmp.lt.s32.totalorder %s21, 0
      %s289 = scalar_select %p288, %s21, 0
      %s290 = sadd.s32 %s289, %s287
      %s291 = smul.addr %s290, 8
      %s292 = scalar_lea.vmem %s5, %s291
      %p293 = scmp.lt.s32.totalorder %s20, 3
      %s294 = scalar_select %p293, %s20, 3
      %p295 = scmp.lt.s32.totalorder %s21, 0
      %s296 = scalar_select %p295, %s21, 0
      %s297 = smul.addr %s296, 5
      %s298 = smul.addr %s294, 5
      %s299 = sadd.s32 %s297, %s298
      %s300 = smul.addr %s299, 4
      %s301 = scalar_lea.vmem %s0, %s300
      %p302 = scmp.lt.s32.totalorder %s20, 3
      %s303 = scalar_select %p302, %s20, 3
      %s304 = smul.addr %s303, 72
      %s305 = smul.addr %s304, 4
      %s306 = scalar_lea.vmem %s1, %s305
      %p307 = scmp.lt.s32.totalorder %s20, 3
      %s308 = scalar_select %p307, %s20, 3
      %s309 = scalar_lea.vmem %s2, %s308
      %p310 = scmp.lt.s32.totalorder %s20, 3
      %s311 = scalar_select %p310, %s20, 3
      %s312 = smul.addr %s311, 4
      %s313 = smul.addr %s312, 4
      %s314 = scalar_lea.vmem %s3, %s313
      %p315 = scmp.lt.s32.totalorder %s20, 3
      %s316 = scalar_select %p315, %s20, 3
      %s317 = scalar_lea.vmem %s4, %s316
      %p318 = scmp.lt.s32.totalorder %s20, 3
      %s319 = scalar_select %p318, %s20, 3
      %p320 = scmp.lt.s32.totalorder %s21, 0
      %s321 = scalar_select %p320, %s21, 0
      %s322 = sadd.s32 %s321, %s319
      %s323 = smul.addr %s322, 8
      %s324 = scalar_lea.vmem %s5, %s323
      %v326 = vld [vmem:[%s301] sm:$0xff]
      %v327 = vld [vmem:[%s301 + $0x8] sm:$0xff]
      %v328 = vld [vmem:[%s301 + $0x10] sm:$0xf]
      %v329 = vld [vmem:[%s306] sm:$0xf]
      %v330 = vld [vmem:[%s306 + $0x4] sm:$0xf]
      %v331 = vld [vmem:[%s306 + $0x8] sm:$0xf]
      %v332 = vld [vmem:[%s306 + $0xc] sm:$0xf]
      %v333 = vld [vmem:[%s306 + $0x10] sm:$0xf]
      %v334 = vld [vmem:[%s306 + $0x14] sm:$0xf]
      %v335 = vld [vmem:[%s306 + $0x18] sm:$0xf]
      %v336 = vld [vmem:[%s306 + $0x1c] sm:$0xf]
      %v337 = vld [vmem:[%s306 + $0x20] sm:$0xf]
      %v338 = vld [vmem:[%s306 + $0x24] sm:$0xf]
      %v339 = vld [vmem:[%s306 + $0x28] sm:$0xf]
      %v340 = vld [vmem:[%s306 + $0x2c] sm:$0xf]
      %v341 = vld [vmem:[%s306 + $0x30] sm:$0xf]
      %v342 = vld [vmem:[%s306 + $0x34] sm:$0xf]
      %v343 = vld [vmem:[%s306 + $0x38] sm:$0xf]
      %v344 = vld [vmem:[%s306 + $0x3c] sm:$0xf]
      %v345 = vld [vmem:[%s306 + $0x40] sm:$0xf]
      %v346 = vld [vmem:[%s306 + $0x44] sm:$0xf]
      %v347 = vld [vmem:[%s306 + $0x48] sm:$0xf]
      %v348 = vld [vmem:[%s306 + $0x4c] sm:$0xf]
      %v349 = vld [vmem:[%s306 + $0x50] sm:$0xf]
      %v350 = vld [vmem:[%s306 + $0x54] sm:$0xf]
      %v351 = vld [vmem:[%s306 + $0x58] sm:$0xf]
      %v352 = vld [vmem:[%s306 + $0x5c] sm:$0xf]
      %v353 = vld [vmem:[%s306 + $0x60] sm:$0xf]
      %v354 = vld [vmem:[%s306 + $0x64] sm:$0xf]
      %v355 = vld [vmem:[%s306 + $0x68] sm:$0xf]
      %v356 = vld [vmem:[%s306 + $0x6c] sm:$0xf]
      %v357 = vld [vmem:[%s306 + $0x70] sm:$0xf]
      %v358 = vld [vmem:[%s306 + $0x74] sm:$0xf]
      %v359 = vld [vmem:[%s306 + $0x78] sm:$0xf]
      %v360 = vld [vmem:[%s306 + $0x7c] sm:$0xf]
      %v361 = vld [vmem:[%s306 + $0x80] sm:$0xf]
      %v362 = vld [vmem:[%s306 + $0x84] sm:$0xf]
      %v363 = vld [vmem:[%s306 + $0x88] sm:$0xf]
      %v364 = vld [vmem:[%s306 + $0x8c] sm:$0xf]
      %v365 = vld [vmem:[%s306 + $0x90] sm:$0xf]
      %v366 = vld [vmem:[%s306 + $0x94] sm:$0xf]
      %v367 = vld [vmem:[%s306 + $0x98] sm:$0xf]
      %v368 = vld [vmem:[%s306 + $0x9c] sm:$0xf]
      %v369 = vld [vmem:[%s306 + $0xa0] sm:$0xf]
      %v370 = vld [vmem:[%s306 + $0xa4] sm:$0xf]
      %v371 = vld [vmem:[%s306 + $0xa8] sm:$0xf]
      %v372 = vld [vmem:[%s306 + $0xac] sm:$0xf]
      %v373 = vld [vmem:[%s306 + $0xb0] sm:$0xf]
      %v374 = vld [vmem:[%s306 + $0xb4] sm:$0xf]
      %v375 = vld [vmem:[%s306 + $0xb8] sm:$0xf]
      %v376 = vld [vmem:[%s306 + $0xbc] sm:$0xf]
      %v377 = vld [vmem:[%s306 + $0xc0] sm:$0xf]
      %v378 = vld [vmem:[%s306 + $0xc4] sm:$0xf]
      %v379 = vld [vmem:[%s306 + $0xc8] sm:$0xf]
      %v380 = vld [vmem:[%s306 + $0xcc] sm:$0xf]
      %v381 = vld [vmem:[%s306 + $0xd0] sm:$0xf]
      %v382 = vld [vmem:[%s306 + $0xd4] sm:$0xf]
      %v383 = vld [vmem:[%s306 + $0xd8] sm:$0xf]
      %v384 = vld [vmem:[%s306 + $0xdc] sm:$0xf]
      %v385 = vld [vmem:[%s306 + $0xe0] sm:$0xf]
      %v386 = vld [vmem:[%s306 + $0xe4] sm:$0xf]
      %v387 = vld [vmem:[%s306 + $0xe8] sm:$0xf]
      %v388 = vld [vmem:[%s306 + $0xec] sm:$0xf]
      %v389 = vld [vmem:[%s306 + $0xf0] sm:$0xf]
      %v390 = vld [vmem:[%s306 + $0xf4] sm:$0xf]
      %v391 = vld [vmem:[%s306 + $0xf8] sm:$0xf]
      %v392 = vld [vmem:[%s306 + $0xfc] sm:$0xf]
      %v393 = vld [vmem:[%s306 + $0x100] sm:$0xf]
      %v394 = vld [vmem:[%s306 + $0x104] sm:$0xf]
      %v395 = vld [vmem:[%s306 + $0x108] sm:$0xf]
      %v396 = vld [vmem:[%s306 + $0x10c] sm:$0xf]
      %v397 = vld [vmem:[%s306 + $0x110] sm:$0xf]
      %v398 = vld [vmem:[%s306 + $0x114] sm:$0xf]
      %v399 = vld [vmem:[%s306 + $0x118] sm:$0xf]
      %v400 = vld [vmem:[%s306 + $0x11c] sm:$0xf]
      %v401 = vld [vmem:[%s309] sm:$0x1]
      %v403 = vlaneseq
      %v404 = vshrl.u32 %v403, 7
      %v405 = vsub.s32 0, %v404
      %v406 = vrot.slane %v401, %v405
      %v411 = vunpack.c.l.b16 %v326
      %v412 = vunpack.c.h.b16 %v326
      %v413 = vunpack.c.l.b16 %v327
      %v414 = vunpack.c.h.b16 %v327
      %v415 = vunpack.c.l.b16 %v328
      %v416 = vpack.c.b16 %v411, %v411
      %v417 = vpack.c.b16 %v412, %v412
      %v418 = vpack.c.b16 %v413, %v413
      %v419 = vpack.c.b16 %v414, %v414
      %v420 = vpack.c.b16 %v415, %v415
      %v497 = vunpack.c.l.b16 %v329
      %v498 = vunpack.c.l.b16 %v330
      %v499 = vunpack.c.l.b16 %v331
      %v500 = vunpack.c.l.b16 %v332
      %v501 = vunpack.c.l.b16 %v333
      %v502 = vunpack.c.l.b16 %v334
      %v503 = vunpack.c.l.b16 %v335
      %v504 = vunpack.c.l.b16 %v336
      %v505 = vunpack.c.l.b16 %v337
      %v506 = vunpack.c.l.b16 %v338
      %v507 = vunpack.c.l.b16 %v339
      %v508 = vunpack.c.l.b16 %v340
      %v509 = vunpack.c.l.b16 %v341
      %v510 = vunpack.c.l.b16 %v342
      %v511 = vunpack.c.l.b16 %v343
      %v512 = vunpack.c.l.b16 %v344
      %v513 = vunpack.c.l.b16 %v345
      %v514 = vunpack.c.l.b16 %v346
      %v515 = vunpack.c.l.b16 %v347
      %v516 = vunpack.c.l.b16 %v348
      %v517 = vunpack.c.l.b16 %v349
      %v518 = vunpack.c.l.b16 %v350
      %v519 = vunpack.c.l.b16 %v351
      %v520 = vunpack.c.l.b16 %v352
      %v521 = vunpack.c.l.b16 %v353
      %v522 = vunpack.c.l.b16 %v354
      %v523 = vunpack.c.l.b16 %v355
      %v524 = vunpack.c.l.b16 %v356
      %v525 = vunpack.c.l.b16 %v357
      %v526 = vunpack.c.l.b16 %v358
      %v527 = vunpack.c.l.b16 %v359
      %v528 = vunpack.c.l.b16 %v360
      %v529 = vunpack.c.l.b16 %v361
      %v530 = vunpack.c.l.b16 %v362
      %v531 = vunpack.c.l.b16 %v363
      %v532 = vunpack.c.l.b16 %v364
      %v533 = vunpack.c.l.b16 %v365
      %v534 = vunpack.c.l.b16 %v366
      %v535 = vunpack.c.l.b16 %v367
      %v536 = vunpack.c.l.b16 %v368
      %v537 = vunpack.c.l.b16 %v369
      %v538 = vunpack.c.l.b16 %v370
      %v539 = vunpack.c.l.b16 %v371
      %v540 = vunpack.c.l.b16 %v372
      %v541 = vunpack.c.l.b16 %v373
      %v542 = vunpack.c.l.b16 %v374
      %v543 = vunpack.c.l.b16 %v375
      %v544 = vunpack.c.l.b16 %v376
      %v545 = vunpack.c.l.b16 %v377
      %v546 = vunpack.c.l.b16 %v378
      %v547 = vunpack.c.l.b16 %v379
      %v548 = vunpack.c.l.b16 %v380
      %v549 = vunpack.c.l.b16 %v381
      %v550 = vunpack.c.l.b16 %v382
      %v551 = vunpack.c.l.b16 %v383
      %v552 = vunpack.c.l.b16 %v384
      %v553 = vunpack.c.l.b16 %v385
      %v554 = vunpack.c.l.b16 %v386
      %v555 = vunpack.c.l.b16 %v387
      %v556 = vunpack.c.l.b16 %v388
      %v557 = vunpack.c.l.b16 %v389
      %v558 = vunpack.c.l.b16 %v390
      %v559 = vunpack.c.l.b16 %v391
      %v560 = vunpack.c.l.b16 %v392
      %v561 = vunpack.c.l.b16 %v393
      %v562 = vunpack.c.l.b16 %v394
      %v563 = vunpack.c.l.b16 %v395
      %v564 = vunpack.c.l.b16 %v396
      %v565 = vunpack.c.l.b16 %v397
      %v566 = vunpack.c.l.b16 %v398
      %v567 = vunpack.c.l.b16 %v399
      %v568 = vunpack.c.l.b16 %v400
      %v569 = vpack.c.b16 %v498, %v497
      %v570 = vpack.c.b16 %v500, %v499
      %v571 = vpack.c.b16 %v502, %v501
      %v572 = vpack.c.b16 %v504, %v503
      %v573 = vpack.c.b16 %v506, %v505
      %v574 = vpack.c.b16 %v508, %v507
      %v575 = vpack.c.b16 %v510, %v509
      %v576 = vpack.c.b16 %v512, %v511
      %v577 = vpack.c.b16 %v514, %v513
      %v578 = vpack.c.b16 %v516, %v515
      %v579 = vpack.c.b16 %v518, %v517
      %v580 = vpack.c.b16 %v520, %v519
      %v581 = vpack.c.b16 %v522, %v521
      %v582 = vpack.c.b16 %v524, %v523
      %v583 = vpack.c.b16 %v526, %v525
      %v584 = vpack.c.b16 %v528, %v527
      %v585 = vpack.c.b16 %v530, %v529
      %v586 = vpack.c.b16 %v532, %v531
      %v587 = vpack.c.b16 %v534, %v533
      %v588 = vpack.c.b16 %v536, %v535
      %v589 = vpack.c.b16 %v538, %v537
      %v590 = vpack.c.b16 %v540, %v539
      %v591 = vpack.c.b16 %v542, %v541
      %v592 = vpack.c.b16 %v544, %v543
      %v593 = vpack.c.b16 %v546, %v545
      %v594 = vpack.c.b16 %v548, %v547
      %v595 = vpack.c.b16 %v550, %v549
      %v596 = vpack.c.b16 %v552, %v551
      %v597 = vpack.c.b16 %v554, %v553
      %v598 = vpack.c.b16 %v556, %v555
      %v599 = vpack.c.b16 %v558, %v557
      %v600 = vpack.c.b16 %v560, %v559
      %v601 = vpack.c.b16 %v562, %v561
      %v602 = vpack.c.b16 %v564, %v563
      %v603 = vpack.c.b16 %v566, %v565
      %v604 = vpack.c.b16 %v568, %v567
      %vm641 = vcmask 523264
      %v643 = vsel %vm641, %v420, 0
      %645 = vmatprep.subr.bf16.mxu0 0
      %646 = vmatpush1.bf16.msra.mxu0 %v569
      %647 = vmatprep.subr.bf16.mxu0 0
      %648 = vmatpush1.bf16.msra.mxu0 %v570
      %649 = vmatprep.subr.bf16.mxu0 0
      %650 = vmatpush1.bf16.msra.mxu0 %v571
      %651 = vmatprep.subr.bf16.mxu0 0
      %652 = vmatpush1.bf16.msra.mxu0 %v572
      %653 = vmatprep.subr.bf16.mxu0 0
      %654 = vmatpush1.bf16.msra.mxu0 %v573
      %655 = vmatprep.subr.bf16.mxu0 0
      %656 = vmatpush1.bf16.msra.mxu0 %v574
      %657 = vmatprep.subr.bf16.mxu0 0
      %658 = vmatpush1.bf16.msra.mxu0 %v575
      %659 = vmatprep.subr.bf16.mxu0 0
      %660 = vmatpush1.bf16.msra.mxu0 %v576
      %661 = vmatprep.subr.bf16.mxu0 0
      %662 = vmatpush1.bf16.msra.mxu0 %v577
      %663 = vmatprep.subr.bf16.mxu0 0
      %664 = vmatpush1.bf16.msra.mxu0 %v578
      %665 = vmatprep.subr.bf16.mxu0 0
      %666 = vmatpush1.bf16.msra.mxu0 %v579
      %667 = vmatprep.subr.bf16.mxu0 0
      %668 = vmatpush1.bf16.msra.mxu0 %v580
      %669 = vmatprep.subr.bf16.mxu0 0
      %670 = vmatpush1.bf16.msra.mxu0 %v581
      %671 = vmatprep.subr.bf16.mxu0 0
      %672 = vmatpush1.bf16.msra.mxu0 %v582
      %673 = vmatprep.subr.bf16.mxu0 0
      %674 = vmatpush1.bf16.msra.mxu0 %v583
      %675 = vmatprep.subr.bf16.mxu0 0
      %676 = vmatpush1.bf16.msra.mxu0 %v584
      %677 = vmatprep.mubr.bf16.mxu0 %v417
      %678 = vmatmul.mubr.bf16.gmra.mrb[0].mxu0 %v416
      %v679 = vpop.f32.mrb[0].mxu0
      %v680 = vadd.f32 %v406, %v679
      %v681 = vpop.f32.mrb[0].mxu0
      %v682 = vpop.f32.mrb[0].mxu0
      %v683 = vpop.f32.mrb[0].mxu0
      %684 = vdwg.mxu0
      %685 = vmatprep.subr.bf16.mxu0 0
      %686 = vmatpush1.bf16.msra.mxu0 %v585
      %687 = vmatprep.subr.bf16.mxu0 0
      %688 = vmatpush1.bf16.msra.mxu0 %v586
      %689 = vmatprep.subr.bf16.mxu0 0
      %690 = vmatpush1.bf16.msra.mxu0 %v587
      %691 = vmatprep.subr.bf16.mxu0 0
      %692 = vmatpush1.bf16.msra.mxu0 %v588
      %693 = vmatprep.subr.bf16.mxu0 0
      %694 = vmatpush1.bf16.msra.mxu0 %v589
      %695 = vmatprep.subr.bf16.mxu0 0
      %696 = vmatpush1.bf16.msra.mxu0 %v590
      %697 = vmatprep.subr.bf16.mxu0 0
      %698 = vmatpush1.bf16.msra.mxu0 %v591
      %699 = vmatprep.subr.bf16.mxu0 0
      %700 = vmatpush1.bf16.msra.mxu0 %v592
      %701 = vmatprep.subr.bf16.mxu0 0
      %702 = vmatpush1.bf16.msra.mxu0 %v593
      %703 = vmatprep.subr.bf16.mxu0 0
      %704 = vmatpush1.bf16.msra.mxu0 %v594
      %705 = vmatprep.subr.bf16.mxu0 0
      %706 = vmatpush1.bf16.msra.mxu0 %v595
      %707 = vmatprep.subr.bf16.mxu0 0
      %708 = vmatpush1.bf16.msra.mxu0 %v596
      %709 = vmatprep.subr.bf16.mxu0 0
      %710 = vmatpush1.bf16.msra.mxu0 %v597
      %711 = vmatprep.subr.bf16.mxu0 0
      %712 = vmatpush1.bf16.msra.mxu0 %v598
      %713 = vmatprep.subr.bf16.mxu0 0
      %714 = vmatpush1.bf16.msra.mxu0 %v599
      %715 = vmatprep.subr.bf16.mxu0 0
      %716 = vmatpush1.bf16.msra.mxu0 %v600
      %717 = vmatprep.mubr.bf16.mxu0 %v419
      %718 = vmatmul.mubr.bf16.gmra.mrb[0].mxu0 %v418
      %v719 = vpop.f32.mrb[0].mxu0
      %v720 = vadd.f32 %v680, %v719
      %v721 = vpop.f32.mrb[0].mxu0
      %v722 = vpop.f32.mrb[0].mxu0
      %v723 = vpop.f32.mrb[0].mxu0
      %724 = vdwg.mxu0
      %725 = vmatprep.subr.bf16.mxu0 0
      %726 = vmatpush1.bf16.msra.mxu0 %v601
      %727 = vmatprep.subr.bf16.mxu0 0
      %728 = vmatpush1.bf16.msra.mxu0 %v602
      %729 = vmatprep.subr.bf16.mxu0 0
      %730 = vmatpush1.bf16.msra.mxu0 %v603
      %731 = vmatprep.subr.bf16.mxu0 0
      %732 = vmatpush1.bf16.msra.mxu0 %v604
      %733 = vmatprep.subr.bf16.mxu0 0
      %734 = vmatpush1.bf16.msra.mxu0 0
      %735 = vmatprep.subr.bf16.mxu0 0
      %736 = vmatpush1.bf16.msra.mxu0 0
      %737 = vmatprep.subr.bf16.mxu0 0
      %738 = vmatpush1.bf16.msra.mxu0 0
      %739 = vmatprep.subr.bf16.mxu0 0
      %740 = vmatpush1.bf16.msra.mxu0 0
      %741 = vmatprep.subr.bf16.mxu0 0
      %742 = vmatpush1.bf16.msra.mxu0 0
      %743 = vmatprep.subr.bf16.mxu0 0
      %744 = vmatpush1.bf16.msra.mxu0 0
      %745 = vmatprep.subr.bf16.mxu0 0
      %746 = vmatpush1.bf16.msra.mxu0 0
      %747 = vmatprep.subr.bf16.mxu0 0
      %748 = vmatpush1.bf16.msra.mxu0 0
      %749 = vmatprep.subr.bf16.mxu0 0
      %750 = vmatpush1.bf16.msra.mxu0 0
      %751 = vmatprep.subr.bf16.mxu0 0
      %752 = vmatpush1.bf16.msra.mxu0 0
      %753 = vmatprep.subr.bf16.mxu0 0
      %754 = vmatpush1.bf16.msra.mxu0 0
      %755 = vmatprep.subr.bf16.mxu0 0
      %756 = vmatpush1.bf16.msra.mxu0 0
      %757 = vmatprep.mubr.bf16.mxu0 0
      %758 = vmatmul.mubr.bf16.gmra.mrb[0].mxu0 %v643
      %v759 = vpop.f32.mrb[0].mxu0
      %v760 = vadd.f32 %v720, %v759
      %v761 = vpop.f32.mrb[0].mxu0
      %v762 = vpop.f32.mrb[0].mxu0
      %v763 = vpop.f32.mrb[0].mxu0
      %764 = vdwg.mxu0
      %v765 = vmax.f32 %v760, 0.0
      %v766 = vpack.c.bf16 %v765, %v765
      %v767 = vld [vmem:[%s314] sm:$0xf]
      %v768 = vld [vmem:[%s314 + $0x4] sm:$0xf]
      %v769 = vld [vmem:[%s314 + $0x8] sm:$0xf]
      %v770 = vld [vmem:[%s314 + $0xc] sm:$0xf]
      %v771 = vld [vmem:[%s317] sm:$0x1]
      %v773 = vlaneseq
      %v774 = vshrl.u32 %v773, 7
      %v775 = vsub.s32 0, %v774
      %v776 = vrot.slane %v771, %v775
      %v782 = vunpack.c.l.b16 %v767
      %v783 = vunpack.c.l.b16 %v768
      %v784 = vunpack.c.l.b16 %v769
      %v785 = vunpack.c.l.b16 %v770
      %v786 = vpack.c.b16 %v783, %v782
      %v787 = vpack.c.b16 %v785, %v784
      %vm790 = vcmask 261120
      %v792 = vsel %vm790, %v766, 0
      %794 = vmatprep.subr.bf16.mxu0 0
      %795 = vmatpush1.bf16.msra.mxu0 %v786
      %796 = vmatprep.subr.bf16.mxu0 0
      %797 = vmatpush1.bf16.msra.mxu0 %v787
      %798 = vmatprep.subr.bf16.mxu0 0
      %799 = vmatpush1.bf16.msra.mxu0 0
      %800 = vmatprep.subr.bf16.mxu0 0
      %801 = vmatpush1.bf16.msra.mxu0 0
      %802 = vmatprep.subr.bf16.mxu0 0
      %803 = vmatpush1.bf16.msra.mxu0 0
      %804 = vmatprep.subr.bf16.mxu0 0
      %805 = vmatpush1.bf16.msra.mxu0 0
      %806 = vmatprep.subr.bf16.mxu0 0
      %807 = vmatpush1.bf16.msra.mxu0 0
      %808 = vmatprep.subr.bf16.mxu0 0
      %809 = vmatpush1.bf16.msra.mxu0 0
      %810 = vmatprep.subr.bf16.mxu0 0
      %811 = vmatpush1.bf16.msra.mxu0 0
      %812 = vmatprep.subr.bf16.mxu0 0
      %813 = vmatpush1.bf16.msra.mxu0 0
      %814 = vmatprep.subr.bf16.mxu0 0
      %815 = vmatpush1.bf16.msra.mxu0 0
      %816 = vmatprep.subr.bf16.mxu0 0
      %817 = vmatpush1.bf16.msra.mxu0 0
      %818 = vmatprep.subr.bf16.mxu0 0
      %819 = vmatpush1.bf16.msra.mxu0 0
      %820 = vmatprep.subr.bf16.mxu0 0
      %821 = vmatpush1.bf16.msra.mxu0 0
      %822 = vmatprep.subr.bf16.mxu0 0
      %823 = vmatpush1.bf16.msra.mxu0 0
      %824 = vmatprep.subr.bf16.mxu0 0
      %825 = vmatpush1.bf16.msra.mxu0 0
      %826 = vmatprep.mubr.bf16.mxu0 0
      %827 = vmatmul.mubr.bf16.gmra.mrb[0].mxu0 %v792
      %v828 = vpop.f32.mrb[0].mxu0
      %v829 = vadd.f32 %v776, %v828
      %v830 = vpop.f32.mrb[0].mxu0
      %v831 = vpop.f32.mrb[0].mxu0
      %v832 = vpop.f32.mrb[0].mxu0
      %833 = vdwg.mxu0
      %v834 = vmax.f32 %v829, 0.0
      %vm835 = vcmask 130048
      %836 = vst.msk [vmem:[%s324] sm:$0xff] %vm835, %v834
      %p837 = scmp.lt.s32.totalorder %s20, 3
      %s838 = scalar_select %p837, %s20, 3
      %p839 = scmp.lt.s32.totalorder %s21, 0
      %s840 = scalar_select %p839, %s21, 0
      %s841 = sadd.s32 %s840, %s838
      %s842 = smul.addr %s841, 8
      %s843 = scalar_lea.vmem %s5, %s842
      // Predicated region
      $region41: #{itracker_forward.10} parent=39 // pred_check
        %p844 = pneg %p180
      $region42: #{itracker_forward.10} parent=39 // pred_check_branch
        %846 = sbr.rel (%p844) target = $region44
      $region43: #{itracker_forward.10} parent=39 // pred_region
        _
      $region44: #{itracker_forward.10} parent=39 // pred_fallthru
        _
    $region40: #{itracker_forward.10} parent=5 // pred_fallthru
      _
    %p847 = scmp.le.s32.totalorder 2, %s11
    // Predicated region
    $region45: #{itracker_forward.10} parent=5 // pred_check
      %p848 = pneg %p847
    $region46: #{itracker_forward.10} parent=5 // pred_check_branch
      %850 = sbr.rel (%p848) target = $region48
    $region47: #{itracker_forward.10} parent=5 // pred_region
      %s851 = ssub.s32 %s11, 2
      // Predicated region
      $region49: #{itracker_forward.10} parent=47 // pred_check
        %p852 = pneg %p186
      $region50: #{itracker_forward.10} parent=47 // pred_check_branch
        %854 = sbr.rel (%p852) target = $region52
      $region51: #{itracker_forward.10} parent=47 // pred_region
        %p855 = scmp.lt.s32.totalorder %s22, 3
        %s856 = scalar_select %p855, %s22, 3
        %p857 = scmp.lt.s32.totalorder %s23, 0
        %s858 = scalar_select %p857, %s23, 0
        %s859 = sadd.s32 %s858, %s856
        %s860 = smul.addr %s859, 8
        %s861 = scalar_lea.vmem %s5, %s860
      $region52: #{itracker_forward.10} parent=47 // pred_fallthru
        _
    $region48: #{itracker_forward.10} parent=5 // pred_fallthru
      _
  $region6: #{itracker_forward.10} parent=0 // loop_footer
    %s15 = sadd.s32 1, %s11
  $region7: #{itracker_forward.10} parent=0 // loop_footer_branch
    %10 = sbr.rel target = $region3
  $region8: #{itracker_forward.10} parent=0 // loop_exit
    _

// kernel: itracker_forward.11
$region0: #{itracker_forward.11}
  #allocation0 [shape = 'u32[]', space=smem, size = 0x4, offset = 0x4, fixed_abs, tag = 'smem constant byte address 0x4 - core index']
  #allocation1 [shape = 'u32[144,128]{1,0:T(1,128)}', space=vmem, size = 0x12000, scoped, tag = 'internal scratch']
  %s0 = inlined_call_operand.vmem [shape: bf16[1,2,256], index: 0, kind: input, shape index: {}]
  %s1 = inlined_call_operand.vmem [shape: bf16[1,256,128], index: 1, kind: input, shape index: {}]
  %s2 = inlined_call_operand.vmem [shape: f32[1,1,128], index: 2, kind: input, shape index: {}]
  %s3 = inlined_call_operand.hbm [shape: f32[1,2,128], index: 3, kind: output, shape index: {}]
  %s4 = sld [smem:[#allocation0]]
  $region22: #{itracker_forward.11} parent=0
    _
  %s6 = ssub.s32 1, %s4
  %s7 = scalar_select 0, %s6, %s4
  $region1: #{itracker_forward.11} parent=0
    #allocation2 [shape = 'u8[1024]{0}', space=vmem, size = 0x400, scoped, tag = 'output window, operand 0, single buffered']
    #allocation3 [shape = 's32[1]{0}', space=sflag, size = 0x4, scoped, tag = 'scoped memory for itracker_forward.11']
    %8 = vsyncpa [#allocation3], 0
    // Predicated region
    $region2: #{itracker_forward.11} parent=1 // pred_check
      _
    $region3: #{itracker_forward.11} parent=1 // pred_check_branch
      %10 = sbr.rel (0) target = $region5
    $region4: #{itracker_forward.11} parent=1 // pred_region
      _
    $region5: #{itracker_forward.11} parent=1 // pred_fallthru
      _
    // Predicated region
    $region6: #{itracker_forward.11} parent=1 // pred_check
      _
    $region7: #{itracker_forward.11} parent=1 // pred_check_branch
      %12 = sbr.rel (0) target = $region9
    $region8: #{itracker_forward.11} parent=1 // pred_region
      _
    $region9: #{itracker_forward.11} parent=1 // pred_fallthru
      _
    // Predicated region
    $region10: #{itracker_forward.11} parent=1 // pred_check
      _
    $region11: #{itracker_forward.11} parent=1 // pred_check_branch
      %14 = sbr.rel (0) target = $region13
    $region12: #{itracker_forward.11} parent=1 // pred_region
      _
    $region13: #{itracker_forward.11} parent=1 // pred_fallthru
      _
    %v16 = vld [vmem:[%s0] sm:$0x3]
    %v17 = vld [vmem:[%s1] sm:$0xf]
    %v18 = vld [vmem:[%s1 + $0x4] sm:$0xf]
    %v19 = vld [vmem:[%s1 + $0x8] sm:$0xf]
    %v20 = vld [vmem:[%s1 + $0xc] sm:$0xf]
    %v21 = vld [vmem:[%s1 + $0x10] sm:$0xf]
    %v22 = vld [vmem:[%s1 + $0x14] sm:$0xf]
    %v23 = vld [vmem:[%s1 + $0x18] sm:$0xf]
    %v24 = vld [vmem:[%s1 + $0x1c] sm:$0xf]
    %v25 = vld [vmem:[%s1 + $0x20] sm:$0xf]
    %v26 = vld [vmem:[%s1 + $0x24] sm:$0xf]
    %v27 = vld [vmem:[%s1 + $0x28] sm:$0xf]
    %v28 = vld [vmem:[%s1 + $0x2c] sm:$0xf]
    %v29 = vld [vmem:[%s1 + $0x30] sm:$0xf]
    %v30 = vld [vmem:[%s1 + $0x34] sm:$0xf]
    %v31 = vld [vmem:[%s1 + $0x38] sm:$0xf]
    %v32 = vld [vmem:[%s1 + $0x3c] sm:$0xf]
    %v33 = vld [vmem:[%s1 + $0x40] sm:$0xf]
    %v34 = vld [vmem:[%s1 + $0x44] sm:$0xf]
    %v35 = vld [vmem:[%s1 + $0x48] sm:$0xf]
    %v36 = vld [vmem:[%s1 + $0x4c] sm:$0xf]
    %v37 = vld [vmem:[%s1 + $0x50] sm:$0xf]
    %v38 = vld [vmem:[%s1 + $0x54] sm:$0xf]
    %v39 = vld [vmem:[%s1 + $0x58] sm:$0xf]
    %v40 = vld [vmem:[%s1 + $0x5c] sm:$0xf]
    %v41 = vld [vmem:[%s1 + $0x60] sm:$0xf]
    %v42 = vld [vmem:[%s1 + $0x64] sm:$0xf]
    %v43 = vld [vmem:[%s1 + $0x68] sm:$0xf]
    %v44 = vld [vmem:[%s1 + $0x6c] sm:$0xf]
    %v45 = vld [vmem:[%s1 + $0x70] sm:$0xf]
    %v46 = vld [vmem:[%s1 + $0x74] sm:$0xf]
    %v47 = vld [vmem:[%s1 + $0x78] sm:$0xf]
    %v48 = vld [vmem:[%s1 + $0x7c] sm:$0xf]
    %v49 = vld [vmem:[%s2] sm:$0x1]
    %v51 = vlaneseq
    %v52 = vshrl.u32 %v51, 7
    %v53 = vsub.s32 0, %v52
    %v54 = vrot.slane %v49, %v53
    %v58 = vunpack.c.l.s4 1966171168
    %v59 = vunpack.c.0.s8 %v58
    %v60 = vlaneseq
    %v61 = vshrl.u32 %v60, 7
    %v62 = vsub.s32 %v59, %v61
    %v63 = vrot.slane %v16, %v62
    %v64 = vcombine.high %v63, %v63
    %v66 = vunpack.c.l.s4 1966171168
    %v67 = vunpack.c.0.s8 %v66
    %v68 = vlaneseq
    %v69 = vshrl.u32 %v68, 7
    %v70 = vsub.s32 %v67, %v69
    %v71 = vrot.slane %v63, %v70
    %v73 = vunpack.c.l.s4 1966171168
    %v74 = vunpack.c.0.s8 %v73
    %v75 = vlaneseq
    %v76 = vshrl.u32 %v75, 7
    %v77 = vsub.s32 %v74, %v76
    %v78 = vrot.slane %v64, %v77
    %v113 = vunpack.c.l.b16 %v17
    %v114 = vunpack.c.l.b16 %v18
    %v115 = vunpack.c.l.b16 %v19
    %v116 = vunpack.c.l.b16 %v20
    %v117 = vunpack.c.l.b16 %v21
    %v118 = vunpack.c.l.b16 %v22
    %v119 = vunpack.c.l.b16 %v23
    %v120 = vunpack.c.l.b16 %v24
    %v121 = vunpack.c.l.b16 %v25
    %v122 = vunpack.c.l.b16 %v26
    %v123 = vunpack.c.l.b16 %v27
    %v124 = vunpack.c.l.b16 %v28
    %v125 = vunpack.c.l.b16 %v29
    %v126 = vunpack.c.l.b16 %v30
    %v127 = vunpack.c.l.b16 %v31
    %v128 = vunpack.c.l.b16 %v32
    %v129 = vunpack.c.l.b16 %v33
    %v130 = vunpack.c.l.b16 %v34
    %v131 = vunpack.c.l.b16 %v35
    %v132 = vunpack.c.l.b16 %v36
    %v133 = vunpack.c.l.b16 %v37
    %v134 = vunpack.c.l.b16 %v38
    %v135 = vunpack.c.l.b16 %v39
    %v136 = vunpack.c.l.b16 %v40
    %v137 = vunpack.c.l.b16 %v41
    %v138 = vunpack.c.l.b16 %v42
    %v139 = vunpack.c.l.b16 %v43
    %v140 = vunpack.c.l.b16 %v44
    %v141 = vunpack.c.l.b16 %v45
    %v142 = vunpack.c.l.b16 %v46
    %v143 = vunpack.c.l.b16 %v47
    %v144 = vunpack.c.l.b16 %v48
    %v145 = vpack.c.b16 %v114, %v113
    %v146 = vpack.c.b16 %v116, %v115
    %v147 = vpack.c.b16 %v118, %v117
    %v148 = vpack.c.b16 %v120, %v119
    %v149 = vpack.c.b16 %v122, %v121
    %v150 = vpack.c.b16 %v124, %v123
    %v151 = vpack.c.b16 %v126, %v125
    %v152 = vpack.c.b16 %v128, %v127
    %v153 = vpack.c.b16 %v130, %v129
    %v154 = vpack.c.b16 %v132, %v131
    %v155 = vpack.c.b16 %v134, %v133
    %v156 = vpack.c.b16 %v136, %v135
    %v157 = vpack.c.b16 %v138, %v137
    %v158 = vpack.c.b16 %v140, %v139
    %v159 = vpack.c.b16 %v142, %v141
    %v160 = vpack.c.b16 %v144, %v143
    %177 = vmatprep.subr.bf16.mxu0 0
    %178 = vmatpush1.bf16.msra.mxu0 %v145
    %179 = vmatprep.subr.bf16.mxu0 0
    %180 = vmatpush1.bf16.msra.mxu0 %v146
    %181 = vmatprep.subr.bf16.mxu0 0
    %182 = vmatpush1.bf16.msra.mxu0 %v147
    %183 = vmatprep.subr.bf16.mxu0 0
    %184 = vmatpush1.bf16.msra.mxu0 %v148
    %185 = vmatprep.subr.bf16.mxu0 0
    %186 = vmatpush1.bf16.msra.mxu0 %v149
    %187 = vmatprep.subr.bf16.mxu0 0
    %188 = vmatpush1.bf16.msra.mxu0 %v150
    %189 = vmatprep.subr.bf16.mxu0 0
    %190 = vmatpush1.bf16.msra.mxu0 %v151
    %191 = vmatprep.subr.bf16.mxu0 0
    %192 = vmatpush1.bf16.msra.mxu0 %v152
    %193 = vmatprep.subr.bf16.mxu0 0
    %194 = vmatpush1.bf16.msra.mxu0 %v153
    %195 = vmatprep.subr.bf16.mxu0 0
    %196 = vmatpush1.bf16.msra.mxu0 %v154
    %197 = vmatprep.subr.bf16.mxu0 0
    %198 = vmatpush1.bf16.msra.mxu0 %v155
    %199 = vmatprep.subr.bf16.mxu0 0
    %200 = vmatpush1.bf16.msra.mxu0 %v156
    %201 = vmatprep.subr.bf16.mxu0 0
    %202 = vmatpush1.bf16.msra.mxu0 %v157
    %203 = vmatprep.subr.bf16.mxu0 0
    %204 = vmatpush1.bf16.msra.mxu0 %v158
    %205 = vmatprep.subr.bf16.mxu0 0
    %206 = vmatpush1.bf16.msra.mxu0 %v159
    %207 = vmatprep.subr.bf16.mxu0 0
    %208 = vmatpush1.bf16.msra.mxu0 %v160
    %209 = vmatprep.mubr.bf16.mxu0 %v78
    %210 = vmatmul.mubr.bf16.gmra.mrb[0].mxu0 %v71
    %v211 = vpop.f32.mrb[0].mxu0
    %v212 = vadd.f32 %v54, %v211
    %v213 = vpop.f32.mrb[0].mxu0
    %v214 = vpop.f32.mrb[0].mxu0
    %v215 = vpop.f32.mrb[0].mxu0
    %216 = vdwg.mxu0
    %v217 = vmax.f32 %v212, 0.0
    %218 = vst [vmem:[#allocation2] sm:$0x3] %v217
    // Predicated region
    $region14: #{itracker_forward.11} parent=1 // pred_check
      _
    $region15: #{itracker_forward.11} parent=1 // pred_check_branch
      %220 = sbr.rel (0) target = $region17
    $region16: #{itracker_forward.11} parent=1 // pred_region
      %s222 = ssub.s32 32, 32
      %223 = vsyncadd [#allocation3], %s222
      %s225 = sshll.u32 [#allocation2], 4
      %s226 = int_to_ptr.vmem [resolvable:$true] %s225
      %228 = dma.vmem_to_hbm [thread:$0]  %s226, 32, %s3, [#allocation3]
    $region17: #{itracker_forward.11} parent=1 // pred_fallthru
      _
    // Predicated region
    $region18: #{itracker_forward.11} parent=1 // pred_check
      _
    $region19: #{itracker_forward.11} parent=1 // pred_check_branch
      %230 = sbr.rel (0) target = $region21
    $region20: #{itracker_forward.11} parent=1 // pred_region
      %231 = dma.done [#allocation3], 32
    $region21: #{itracker_forward.11} parent=1 // pred_fallthru
      _
    %232 = vsyncpa [#allocation3], 1

</llo_original>
